<compile_context>
chip_gen: v6e
topology: v6e:2x2x1
jax: 0.10.0
libtpu: 0.0.40
codegen_flags: <defaults>
</compile_context>

<pallas_src>
import jax
import jax.numpy as jnp
from jax.experimental import pallas as pl
from jax.experimental.pallas import tpu as pltpu


def _leaky_relu(x, slope=0.2):
    return jnp.where(x >= 0, x, slope * x)


def _round_up(n, m):
    return ((n + m - 1) // m) * m


def discriminator_kernel(x_ref,
                         w1_ref, b1_ref,
                         w2_ref, b2_ref,
                         w3_ref, b3_ref,
                         w4_ref, b4_ref,
                         out_ref):
    """Fused 4-layer MLP on one batch tile: bf16 matmuls, f32 accumulation/epilogue."""
    x = x_ref[...]                                                    # (BT, 896) bf16

    h = jnp.dot(x, w1_ref[...], preferred_element_type=jnp.float32)   # (BT, 512) f32
    h = _leaky_relu(h + b1_ref[...])                                  # f32 epilogue

    h = jnp.dot(h.astype(jnp.bfloat16), w2_ref[...],
                preferred_element_type=jnp.float32)                   # (BT, 256)
    h = _leaky_relu(h + b2_ref[...])

    h = jnp.dot(h.astype(jnp.bfloat16), w3_ref[...],
                preferred_element_type=jnp.float32)                   # (BT, 128)
    h = _leaky_relu(h + b3_ref[...])

    h = jnp.dot(h.astype(jnp.bfloat16), w4_ref[...],
                preferred_element_type=jnp.float32)                   # (BT, 128) padded
    out_ref[...] = (h + b4_ref[...]).astype(out_ref.dtype)


def prepare_params(params, k_pad=896, out_pad=128):
    """One-time param prep: zero-pad K of layer 1 and N of layer 4, cast W to bf16."""
    (w1, b1), (w2, b2), (w3, b3), (w4, b4) = params
    w1p = jnp.pad(w1, ((0, k_pad - w1.shape[0]), (0, 0))).astype(jnp.bfloat16)
    w4p = jnp.pad(w4, ((0, 0), (0, out_pad - w4.shape[1]))).astype(jnp.bfloat16)
    b4p = jnp.pad(b4, ((0, 0), (0, out_pad - b4.shape[1]))).astype(jnp.float32)
    return [
        (w1p, b1.astype(jnp.float32)),
        (w2.astype(jnp.bfloat16), b2.astype(jnp.float32)),
        (w3.astype(jnp.bfloat16), b3.astype(jnp.float32)),
        (w4p, b4p),
    ]


def discriminator_forward(x, prepared_params, *, block_b=512):
    """x: (B, im_dim) float32; prepared_params from prepare_params(). Returns (B, 1) f32."""
    B, im_dim = x.shape
    (w1, b1), (w2, b2), (w3, b3), (w4, b4) = prepared_params
    k_pad = w1.shape[0]
    out_pad = w4.shape[1]

    # Batch tile: at least 128 MXU rows, at most block_b; pad B up to a multiple.
    bt = min(block_b, _round_up(B, 128))
    b_pad = _round_up(B, bt)
    nbt = b_pad // bt

    x_p = jnp.pad(x, ((0, b_pad - B), (0, k_pad - im_dim))).astype(jnp.bfloat16)

    def resident(shape):
        # Whole array as one VMEM-resident block, same block every grid step.
        return pl.BlockSpec(shape, lambda i, s=shape: tuple(0 for _ in s))

    out = pl.pallas_call(
        discriminator_kernel,
        out_shape=jax.ShapeDtypeStruct((b_pad, out_pad), jnp.float32),
        grid_spec=pltpu.PrefetchScalarGridSpec(
            num_scalar_prefetch=0,
            grid=(nbt,),
            in_specs=[
                pl.BlockSpec((bt, k_pad), lambda i: (i, 0)),   # x streams over batch
                resident(w1.shape), resident(b1.shape),
                resident(w2.shape), resident(b2.shape),
                resident(w3.shape), resident(b3.shape),
                resident(w4.shape), resident(b4.shape),
            ],
            out_specs=pl.BlockSpec((bt, out_pad), lambda i: (i, 0)),
        ),
        compiler_params=pltpu.CompilerParams(
            dimension_semantics=("parallel",),   # shard batch tiles over v7x's 2 TCs
        ),
    )(x_p, w1, b1, w2, b2, w3, b3, w4, b4)

    return out[:B, 0:1]


def init_params(key, im_dim=784, hidden_dim=128):
    """Deterministic synthetic params (PyTorch Linear-style uniform init), f32."""
    dims = [im_dim, hidden_dim * 4, hidden_dim * 2, hidden_dim, 1]
    params = []
    for i in range(4):
        key, kw, kb = jax.random.split(key, 3)
        fan_in, fan_out = dims[i], dims[i + 1]
        bound = 1.0 / jnp.sqrt(fan_in)
        W = jax.random.uniform(kw, (fan_in, fan_out), jnp.float32, -bound, bound)
        b = jax.random.uniform(kb, (1, fan_out), jnp.float32, -bound, bound)
        params.append((W, b))
    return params


def reference_forward(x, params):
    """Pure-JAX reference mirroring the kernel math (bf16 matmul inputs, f32 accum)."""
    h = x
    for i, (W, b) in enumerate(params):
        h = jnp.dot(h.astype(jnp.bfloat16), W.astype(jnp.bfloat16),
                    preferred_element_type=jnp.float32) + b
        if i < 3:
            h = jnp.where(h >= 0, h, 0.2 * h)
    return h


if __name__ == "__main__":
    key = jax.random.PRNGKey(0)
    key, kx = jax.random.split(key)

    B, im_dim, hidden_dim = 8, 784, 128
    x = jax.random.normal(kx, (B, im_dim), dtype=jnp.float32)
    params = init_params(key, im_dim, hidden_dim)
    prepared = prepare_params(params)

    out = discriminator_forward(x, prepared)
    out = jax.block_until_ready(out)

    ref = reference_forward(x, params)
    assert out.shape == (B, 1), out.shape
    assert jnp.allclose(out, ref, atol=2e-2, rtol=2e-2), "mismatch vs JAX reference"

    print("KERNEL_OK")
</pallas_src>

<mosaic_0001>
module attributes {stable_mosaic.version = 11 : i64} {
  func.func @discriminator_kernel(%arg0: i32, %arg1: memref<128x896xbf16, #tpu.memory_space<vmem>>, %arg2: memref<896x512xbf16, #tpu.memory_space<vmem>>, %arg3: memref<1x512xf32, #tpu.memory_space<vmem>>, %arg4: memref<512x256xbf16, #tpu.memory_space<vmem>>, %arg5: memref<1x256xf32, #tpu.memory_space<vmem>>, %arg6: memref<256x128xbf16, #tpu.memory_space<vmem>>, %arg7: memref<1x128xf32, #tpu.memory_space<vmem>>, %arg8: memref<128x128xbf16, #tpu.memory_space<vmem>>, %arg9: memref<1x128xf32, #tpu.memory_space<vmem>>, %arg10: memref<128x128xf32, #tpu.memory_space<vmem>>) attributes {dimension_semantics = [#tpu.dimension_semantics<parallel>], iteration_bounds = array<i64: 1>, scalar_prefetch = 0 : i64, scratch_operands = 0 : i64, tpu.core_type = #tpu.core_type<tc>, window_params = [{transform_indices = @transform_0, window_bounds = array<i64: 128, 896>}, {pipeline_mode = #tpu.pipeline_mode<synchronous>, transform_indices = @transform_1, window_bounds = array<i64: 896, 512>}, {pipeline_mode = #tpu.pipeline_mode<synchronous>, transform_indices = @transform_2, window_bounds = array<i64: 1, 512>}, {pipeline_mode = #tpu.pipeline_mode<synchronous>, transform_indices = @transform_3, window_bounds = array<i64: 512, 256>}, {pipeline_mode = #tpu.pipeline_mode<synchronous>, transform_indices = @transform_4, window_bounds = array<i64: 1, 256>}, {pipeline_mode = #tpu.pipeline_mode<synchronous>, transform_indices = @transform_5, window_bounds = array<i64: 256, 128>}, {pipeline_mode = #tpu.pipeline_mode<synchronous>, transform_indices = @transform_6, window_bounds = array<i64: 1, 128>}, {pipeline_mode = #tpu.pipeline_mode<synchronous>, transform_indices = @transform_7, window_bounds = array<i64: 128, 128>}, {pipeline_mode = #tpu.pipeline_mode<synchronous>, transform_indices = @transform_8, window_bounds = array<i64: 1, 128>}, {transform_indices = @transform_9, window_bounds = array<i64: 128, 128>}]} {
    %c0 = arith.constant 0 : index
    %c0_0 = arith.constant 0 : index
    %0 = vector.load %arg1[%c0, %c0_0] : memref<128x896xbf16, #tpu.memory_space<vmem>>, vector<128x896xbf16>
    %c0_1 = arith.constant 0 : index
    %c0_2 = arith.constant 0 : index
    %1 = vector.load %arg2[%c0_1, %c0_2] : memref<896x512xbf16, #tpu.memory_space<vmem>>, vector<896x512xbf16>
    %cst = arith.constant dense<0.000000e+00> : vector<128x512xf32>
    %2 = tpu.matmul %0, %1, %cst {dimension_numbers = #tpu.dot_dimension_numbers<[1], [0], [0], [1], [0, 0, 1, 1], [], []>} : vector<128x896xbf16>, vector<896x512xbf16>, vector<128x512xf32> -> vector<128x512xf32>
    %c0_3 = arith.constant 0 : index
    %c0_4 = arith.constant 0 : index
    %3 = vector.load %arg3[%c0_3, %c0_4] : memref<1x512xf32, #tpu.memory_space<vmem>>, vector<1x512xf32>
    %4 = vector.broadcast %3 : vector<1x512xf32> to vector<128x512xf32>
    %5 = arith.addf %2, %4 : vector<128x512xf32>
    %cst_5 = arith.constant 0.000000e+00 : f32
    %6 = vector.broadcast %cst_5 : f32 to vector<128x512xf32>
    %7 = arith.cmpf oge, %5, %6 : vector<128x512xf32>
    %cst_6 = arith.constant 2.000000e-01 : f32
    %8 = vector.broadcast %cst_6 : f32 to vector<128x512xf32>
    %9 = arith.mulf %8, %5 : vector<128x512xf32>
    %10 = arith.select %7, %5, %9 : vector<128x512xi1>, vector<128x512xf32>
    %11 = arith.truncf %10 : vector<128x512xf32> to vector<128x512xbf16>
    %c0_7 = arith.constant 0 : index
    %c0_8 = arith.constant 0 : index
    %12 = vector.load %arg4[%c0_7, %c0_8] : memref<512x256xbf16, #tpu.memory_space<vmem>>, vector<512x256xbf16>
    %cst_9 = arith.constant dense<0.000000e+00> : vector<128x256xf32>
    %13 = tpu.matmul %11, %12, %cst_9 {dimension_numbers = #tpu.dot_dimension_numbers<[1], [0], [0], [1], [0, 0, 1, 1], [], []>} : vector<128x512xbf16>, vector<512x256xbf16>, vector<128x256xf32> -> vector<128x256xf32>
    %c0_10 = arith.constant 0 : index
    %c0_11 = arith.constant 0 : index
    %14 = vector.load %arg5[%c0_10, %c0_11] : memref<1x256xf32, #tpu.memory_space<vmem>>, vector<1x256xf32>
    %15 = vector.broadcast %14 : vector<1x256xf32> to vector<128x256xf32>
    %16 = arith.addf %13, %15 : vector<128x256xf32>
    %cst_12 = arith.constant 0.000000e+00 : f32
    %17 = vector.broadcast %cst_12 : f32 to vector<128x256xf32>
    %18 = arith.cmpf oge, %16, %17 : vector<128x256xf32>
    %cst_13 = arith.constant 2.000000e-01 : f32
    %19 = vector.broadcast %cst_13 : f32 to vector<128x256xf32>
    %20 = arith.mulf %19, %16 : vector<128x256xf32>
    %21 = arith.select %18, %16, %20 : vector<128x256xi1>, vector<128x256xf32>
    %22 = arith.truncf %21 : vector<128x256xf32> to vector<128x256xbf16>
    %c0_14 = arith.constant 0 : index
    %c0_15 = arith.constant 0 : index
    %23 = vector.load %arg6[%c0_14, %c0_15] : memref<256x128xbf16, #tpu.memory_space<vmem>>, vector<256x128xbf16>
    %cst_16 = arith.constant dense<0.000000e+00> : vector<128x128xf32>
    %24 = tpu.matmul %22, %23, %cst_16 {dimension_numbers = #tpu.dot_dimension_numbers<[1], [0], [0], [1], [0, 0, 1, 1], [], []>} : vector<128x256xbf16>, vector<256x128xbf16>, vector<128x128xf32> -> vector<128x128xf32>
    %c0_17 = arith.constant 0 : index
    %c0_18 = arith.constant 0 : index
    %25 = vector.load %arg7[%c0_17, %c0_18] : memref<1x128xf32, #tpu.memory_space<vmem>>, vector<1x128xf32>
    %26 = vector.broadcast %25 : vector<1x128xf32> to vector<128x128xf32>
    %27 = arith.addf %24, %26 : vector<128x128xf32>
    %cst_19 = arith.constant 0.000000e+00 : f32
    %28 = vector.broadcast %cst_19 : f32 to vector<128x128xf32>
    %29 = arith.cmpf oge, %27, %28 : vector<128x128xf32>
    %cst_20 = arith.constant 2.000000e-01 : f32
    %30 = vector.broadcast %cst_20 : f32 to vector<128x128xf32>
    %31 = arith.mulf %30, %27 : vector<128x128xf32>
    %32 = arith.select %29, %27, %31 : vector<128x128xi1>, vector<128x128xf32>
    %33 = arith.truncf %32 : vector<128x128xf32> to vector<128x128xbf16>
    %c0_21 = arith.constant 0 : index
    %c0_22 = arith.constant 0 : index
    %34 = vector.load %arg8[%c0_21, %c0_22] : memref<128x128xbf16, #tpu.memory_space<vmem>>, vector<128x128xbf16>
    %cst_23 = arith.constant dense<0.000000e+00> : vector<128x128xf32>
    %35 = tpu.matmul %33, %34, %cst_23 {dimension_numbers = #tpu.dot_dimension_numbers<[1], [0], [0], [1], [0, 0, 1, 1], [], []>} : vector<128x128xbf16>, vector<128x128xbf16>, vector<128x128xf32> -> vector<128x128xf32>
    %c0_24 = arith.constant 0 : index
    %c0_25 = arith.constant 0 : index
    %36 = vector.load %arg9[%c0_24, %c0_25] : memref<1x128xf32, #tpu.memory_space<vmem>>, vector<1x128xf32>
    %37 = vector.broadcast %36 : vector<1x128xf32> to vector<128x128xf32>
    %38 = arith.addf %35, %37 : vector<128x128xf32>
    %c0_26 = arith.constant 0 : index
    %c0_27 = arith.constant 0 : index
    %39 = vector.load %arg10[%c0_26, %c0_27] : memref<128x128xf32, #tpu.memory_space<vmem>>, vector<128x128xf32>
    tpu.vector_store %arg10[%c0_26, %c0_27], %38 {strides = array<i32>} : memref<128x128xf32, #tpu.memory_space<vmem>>, vector<128x128xf32>,
    return
  }
  func.func @transform_0(%arg0: i32) -> (i32, i32) {
    %c0_i32 = arith.constant 0 : i32
    %c0_i32_0 = arith.constant 0 : i32
    return %arg0, %c0_i32 : i32, i32
  }
  func.func @transform_1(%arg0: i32) -> (i32, i32) {
    %c0_i32 = arith.constant 0 : i32
    %c0_i32_0 = arith.constant 0 : i32
    %c0_i32_1 = arith.constant 0 : i32
    return %c0_i32, %c0_i32_0 : i32, i32
  }
  func.func @transform_2(%arg0: i32) -> (i32, i32) {
    %c0_i32 = arith.constant 0 : i32
    %c0_i32_0 = arith.constant 0 : i32
    %c0_i32_1 = arith.constant 0 : i32
    return %c0_i32, %c0_i32_0 : i32, i32
  }
  func.func @transform_3(%arg0: i32) -> (i32, i32) {
    %c0_i32 = arith.constant 0 : i32
    %c0_i32_0 = arith.constant 0 : i32
    %c0_i32_1 = arith.constant 0 : i32
    return %c0_i32, %c0_i32_0 : i32, i32
  }
  func.func @transform_4(%arg0: i32) -> (i32, i32) {
    %c0_i32 = arith.constant 0 : i32
    %c0_i32_0 = arith.constant 0 : i32
    %c0_i32_1 = arith.constant 0 : i32
    return %c0_i32, %c0_i32_0 : i32, i32
  }
  func.func @transform_5(%arg0: i32) -> (i32, i32) {
    %c0_i32 = arith.constant 0 : i32
    %c0_i32_0 = arith.constant 0 : i32
    %c0_i32_1 = arith.constant 0 : i32
    return %c0_i32, %c0_i32_0 : i32, i32
  }
  func.func @transform_6(%arg0: i32) -> (i32, i32) {
    %c0_i32 = arith.constant 0 : i32
    %c0_i32_0 = arith.constant 0 : i32
    %c0_i32_1 = arith.constant 0 : i32
    return %c0_i32, %c0_i32_0 : i32, i32
  }
  func.func @transform_7(%arg0: i32) -> (i32, i32) {
    %c0_i32 = arith.constant 0 : i32
    %c0_i32_0 = arith.constant 0 : i32
    %c0_i32_1 = arith.constant 0 : i32
    return %c0_i32, %c0_i32_0 : i32, i32
  }
  func.func @transform_8(%arg0: i32) -> (i32, i32) {
    %c0_i32 = arith.constant 0 : i32
    %c0_i32_0 = arith.constant 0 : i32
    %c0_i32_1 = arith.constant 0 : i32
    return %c0_i32, %c0_i32_0 : i32, i32
  }
  func.func @transform_9(%arg0: i32) -> (i32, i32) {
    %c0_i32 = arith.constant 0 : i32
    %c0_i32_0 = arith.constant 0 : i32
    return %arg0, %c0_i32 : i32, i32
  }
}

</mosaic_0001>

<llo_original>
// kernel: tpu_custom_call.1
$region0: #{tpu_custom_call.1}
  #allocation0 [shape = 'u32[]', space=smem, size = 0x4, offset = 0x4, fixed_abs, tag = 'smem constant byte address 0x4 - core index']
  #allocation1 [shape = 'u32[144,128]{1,0:T(1,128)}', space=vmem, size = 0x12000, scoped, tag = 'internal scratch']
  %s0 = inlined_call_operand.hbm [shape: bf16[128,896], index: 0, kind: input, shape index: {}]
  %s1 = inlined_call_operand.hbm [shape: bf16[896,512], index: 1, kind: input, shape index: {}]
  %s2 = inlined_call_operand.hbm [shape: f32[1,512], index: 2, kind: input, shape index: {}]
  %s3 = inlined_call_operand.hbm [shape: bf16[512,256], index: 3, kind: input, shape index: {}]
  %s4 = inlined_call_operand.vmem [shape: f32[1,256], index: 4, kind: input, shape index: {}]
  %s5 = inlined_call_operand.hbm [shape: bf16[256,128], index: 5, kind: input, shape index: {}]
  %s6 = inlined_call_operand.vmem [shape: f32[1,128], index: 6, kind: input, shape index: {}]
  %s7 = inlined_call_operand.hbm [shape: bf16[128,128], index: 7, kind: input, shape index: {}]
  %s8 = inlined_call_operand.vmem [shape: f32[1,128], index: 8, kind: input, shape index: {}]
  %s9 = inlined_call_operand.hbm [shape: f32[128,128], index: 9, kind: output, shape index: {}]
  %s10 = sld [smem:[#allocation0]]
  $region70: #{tpu_custom_call.1} parent=0
    _
  %s12 = ssub.s32 1, %s10
  %s13 = scalar_select 0, %s12, %s10
  $region1: #{tpu_custom_call.1} parent=0
    #allocation2 [shape = 'u8[229376]{0}', space=vmem, size = 0x38000, scoped, tag = 'input window, operand 0, single buffered']
    #allocation3 [shape = 's32[1]{0}', space=sflag, size = 0x4, scoped, tag = 'scoped memory for tpu_custom_call.1']
    #allocation4 [shape = 's32[1]{0}', space=sflag, size = 0x4, scoped, tag = 'scoped memory for tpu_custom_call.1']
    #allocation5 [shape = 'u8[917504]{0}', space=vmem, size = 0xe0000, scoped, tag = 'input window, operand 1, single buffered']
    #allocation6 [shape = 's32[1]{0}', space=sflag, size = 0x4, scoped, tag = 'scoped memory for tpu_custom_call.1']
    #allocation7 [shape = 'u8[2048]{0}', space=vmem, size = 0x800, scoped, tag = 'input window, operand 2, single buffered']
    #allocation8 [shape = 'u8[262144]{0}', space=vmem, size = 0x40000, scoped, tag = 'input window, operand 3, single buffered']
    #allocation9 [shape = 's32[1]{0}', space=sflag, size = 0x4, scoped, tag = 'scoped memory for tpu_custom_call.1']
    #allocation10 [shape = 'u8[65536]{0}', space=vmem, size = 0x10000, scoped, tag = 'input window, operand 5, single buffered']
    #allocation11 [shape = 'u8[32768]{0}', space=vmem, size = 0x8000, scoped, tag = 'input window, operand 7, single buffered']
    #allocation12 [shape = 's32[1]{0}', space=sflag, size = 0x4, scoped, tag = 'scoped memory for tpu_custom_call.1']
    #allocation13 [shape = 'u8[65536]{0}', space=vmem, size = 0x10000, scoped, tag = 'output window, operand 0, single buffered']
    %14 = vsyncpa [#allocation3], 0
    %15 = vsyncpa [#allocation6], 0
    %16 = vsyncpa [#allocation9], 0
    %17 = vsyncpa [#allocation12], 0
    %18 = vsyncpa [#allocation4], 0
    // Predicated region
    $region2: #{tpu_custom_call.1} parent=1 // pred_check
      _
    $region3: #{tpu_custom_call.1} parent=1 // pred_check_branch
      %20 = sbr.rel (0) target = $region5
    $region4: #{tpu_custom_call.1} parent=1 // pred_region
      %s22 = ssub.s32 7168, 7168
      %23 = vsyncadd [#allocation3], %s22
      %s24 = sshll.u32 [#allocation2], 4
      %s25 = int_to_ptr.vmem [resolvable:$true] %s24
      %30 = dma.hbm_to_vmem [thread:$0]  %s0, 7168, %s25, [#allocation3], 448, 448, 28
    $region5: #{tpu_custom_call.1} parent=1 // pred_fallthru
      _
    // Predicated region
    $region6: #{tpu_custom_call.1} parent=1 // pred_check
      _
    $region7: #{tpu_custom_call.1} parent=1 // pred_check_branch
      %32 = sbr.rel (0) target = $region9
    $region8: #{tpu_custom_call.1} parent=1 // pred_region
      %s34 = ssub.s32 28672, 28672
      %35 = vsyncadd [#allocation6], %s34
      %s36 = sshll.u32 [#allocation5], 4
      %s37 = int_to_ptr.vmem [resolvable:$true] %s36
      %42 = dma.hbm_to_vmem [thread:$0]  %s1, 28672, %s37, [#allocation6], 256, 256, 16
    $region9: #{tpu_custom_call.1} parent=1 // pred_fallthru
      _
    // Predicated region
    $region10: #{tpu_custom_call.1} parent=1 // pred_check
      _
    $region11: #{tpu_custom_call.1} parent=1 // pred_check_branch
      %44 = sbr.rel (0) target = $region13
    $region12: #{tpu_custom_call.1} parent=1 // pred_region
      %s46 = ssub.s32 64, 64
      %47 = vsyncadd [#allocation6], %s46
      %s49 = sshll.u32 [#allocation7], 4
      %s50 = int_to_ptr.vmem [resolvable:$true] %s49
      %52 = dma.hbm_to_vmem [thread:$0]  %s2, 64, %s50, [#allocation6]
    $region13: #{tpu_custom_call.1} parent=1 // pred_fallthru
      _
    // Predicated region
    $region14: #{tpu_custom_call.1} parent=1 // pred_check
      _
    $region15: #{tpu_custom_call.1} parent=1 // pred_check_branch
      %54 = sbr.rel (0) target = $region17
    $region16: #{tpu_custom_call.1} parent=1 // pred_region
      %s56 = ssub.s32 8192, 8192
      %57 = vsyncadd [#allocation9], %s56
      %s58 = sshll.u32 [#allocation8], 4
      %s59 = int_to_ptr.vmem [resolvable:$true] %s58
      %64 = dma.hbm_to_vmem [thread:$0]  %s3, 8192, %s59, [#allocation9], 128, 128, 8
    $region17: #{tpu_custom_call.1} parent=1 // pred_fallthru
      _
    // Predicated region
    $region18: #{tpu_custom_call.1} parent=1 // pred_check
      _
    $region19: #{tpu_custom_call.1} parent=1 // pred_check_branch
      %66 = sbr.rel (0) target = $region21
    $region20: #{tpu_custom_call.1} parent=1 // pred_region
      _
    $region21: #{tpu_custom_call.1} parent=1 // pred_fallthru
      _
    // Predicated region
    $region22: #{tpu_custom_call.1} parent=1 // pred_check
      _
    $region23: #{tpu_custom_call.1} parent=1 // pred_check_branch
      %68 = sbr.rel (0) target = $region25
    $region24: #{tpu_custom_call.1} parent=1 // pred_region
      %s70 = ssub.s32 2048, 2048
      %71 = vsyncadd [#allocation9], %s70
      %s72 = sshll.u32 [#allocation10], 4
      %s73 = int_to_ptr.vmem [resolvable:$true] %s72
      %78 = dma.hbm_to_vmem [thread:$0]  %s5, 2048, %s73, [#allocation9], 64, 64, 4
    $region25: #{tpu_custom_call.1} parent=1 // pred_fallthru
      _
    // Predicated region
    $region26: #{tpu_custom_call.1} parent=1 // pred_check
      _
    $region27: #{tpu_custom_call.1} parent=1 // pred_check_branch
      %80 = sbr.rel (0) target = $region29
    $region28: #{tpu_custom_call.1} parent=1 // pred_region
      _
    $region29: #{tpu_custom_call.1} parent=1 // pred_fallthru
      _
    // Predicated region
    $region30: #{tpu_custom_call.1} parent=1 // pred_check
      _
    $region31: #{tpu_custom_call.1} parent=1 // pred_check_branch
      %82 = sbr.rel (0) target = $region33
    $region32: #{tpu_custom_call.1} parent=1 // pred_region
      %s84 = ssub.s32 1024, 1024
      %85 = vsyncadd [#allocation12], %s84
      %s86 = sshll.u32 [#allocation11], 4
      %s87 = int_to_ptr.vmem [resolvable:$true] %s86
      %92 = dma.hbm_to_vmem [thread:$0]  %s7, 1024, %s87, [#allocation12], 64, 64, 4
    $region33: #{tpu_custom_call.1} parent=1 // pred_fallthru
      _
    // Predicated region
    $region34: #{tpu_custom_call.1} parent=1 // pred_check
      _
    $region35: #{tpu_custom_call.1} parent=1 // pred_check_branch
      %94 = sbr.rel (0) target = $region37
    $region36: #{tpu_custom_call.1} parent=1 // pred_region
      _
    $region37: #{tpu_custom_call.1} parent=1 // pred_fallthru
      _
    // Predicated region
    $region38: #{tpu_custom_call.1} parent=1 // pred_check
      _
    $region39: #{tpu_custom_call.1} parent=1 // pred_check_branch
      %96 = sbr.rel (0) target = $region41
    $region40: #{tpu_custom_call.1} parent=1 // pred_region
      %97 = dma.done [#allocation3], 7168
    $region41: #{tpu_custom_call.1} parent=1 // pred_fallthru
      _
    // Predicated region
    $region42: #{tpu_custom_call.1} parent=1 // pred_check
      _
    $region43: #{tpu_custom_call.1} parent=1 // pred_check_branch
      %99 = sbr.rel (0) target = $region45
    $region44: #{tpu_custom_call.1} parent=1 // pred_region
      %100 = dma.done [#allocation6], 28672
    $region45: #{tpu_custom_call.1} parent=1 // pred_fallthru
      _
    // Predicated region
    $region46: #{tpu_custom_call.1} parent=1 // pred_check
      _
    $region47: #{tpu_custom_call.1} parent=1 // pred_check_branch
      %102 = sbr.rel (0) target = $region49
    $region48: #{tpu_custom_call.1} parent=1 // pred_region
      %103 = dma.done [#allocation6], 64
    $region49: #{tpu_custom_call.1} parent=1 // pred_fallthru
      _
    // Predicated region
    $region50: #{tpu_custom_call.1} parent=1 // pred_check
      _
    $region51: #{tpu_custom_call.1} parent=1 // pred_check_branch
      %105 = sbr.rel (0) target = $region53
    $region52: #{tpu_custom_call.1} parent=1 // pred_region
      %106 = dma.done [#allocation9], 8192
    $region53: #{tpu_custom_call.1} parent=1 // pred_fallthru
      _
    // Predicated region
    $region54: #{tpu_custom_call.1} parent=1 // pred_check
      _
    $region55: #{tpu_custom_call.1} parent=1 // pred_check_branch
      %108 = sbr.rel (0) target = $region57
    $region56: #{tpu_custom_call.1} parent=1 // pred_region
      %109 = dma.done [#allocation9], 2048
    $region57: #{tpu_custom_call.1} parent=1 // pred_fallthru
      _
    // Predicated region
    $region58: #{tpu_custom_call.1} parent=1 // pred_check
      _
    $region59: #{tpu_custom_call.1} parent=1 // pred_check_branch
      %111 = sbr.rel (0) target = $region61
    $region60: #{tpu_custom_call.1} parent=1 // pred_region
      %112 = dma.done [#allocation12], 1024
    $region61: #{tpu_custom_call.1} parent=1 // pred_fallthru
      _
    %v114 = vld [vmem:[#allocation2] sm:$0xff]
    %v115 = vld [vmem:[#allocation2 + $0x8] sm:$0xff]
    %v116 = vld [vmem:[#allocation2 + $0x10] sm:$0xff]
    %v117 = vld [vmem:[#allocation2 + $0x18] sm:$0xf]
    %v118 = vld [vmem:[#allocation2 + $0x1c] sm:$0xff]
    %v119 = vld [vmem:[#allocation2 + $0x24] sm:$0xff]
    %v120 = vld [vmem:[#allocation2 + $0x2c] sm:$0xff]
    %v121 = vld [vmem:[#allocation2 + $0x34] sm:$0xf]
    %v122 = vld [vmem:[#allocation2 + $0x38] sm:$0xff]
    %v123 = vld [vmem:[#allocation2 + $0x40] sm:$0xff]
    %v124 = vld [vmem:[#allocation2 + $0x48] sm:$0xff]
    %v125 = vld [vmem:[#allocation2 + $0x50] sm:$0xf]
    %v126 = vld [vmem:[#allocation2 + $0x54] sm:$0xff]
    %v127 = vld [vmem:[#allocation2 + $0x5c] sm:$0xff]
    %v128 = vld [vmem:[#allocation2 + $0x64] sm:$0xff]
    %v129 = vld [vmem:[#allocation2 + $0x6c] sm:$0xf]
    %v130 = vld [vmem:[#allocation2 + $0x70] sm:$0xff]
    %v131 = vld [vmem:[#allocation2 + $0x78] sm:$0xff]
    %v132 = vld [vmem:[#allocation2 + $0x80] sm:$0xff]
    %v133 = vld [vmem:[#allocation2 + $0x88] sm:$0xf]
    %v134 = vld [vmem:[#allocation2 + $0x8c] sm:$0xff]
    %v135 = vld [vmem:[#allocation2 + $0x94] sm:$0xff]
    %v136 = vld [vmem:[#allocation2 + $0x9c] sm:$0xff]
    %v137 = vld [vmem:[#allocation2 + $0xa4] sm:$0xf]
    %v138 = vld [vmem:[#allocation2 + $0xa8] sm:$0xff]
    %v139 = vld [vmem:[#allocation2 + $0xb0] sm:$0xff]
    %v140 = vld [vmem:[#allocation2 + $0xb8] sm:$0xff]
    %v141 = vld [vmem:[#allocation2 + $0xc0] sm:$0xf]
    %v142 = vld [vmem:[#allocation2 + $0xc4] sm:$0xff]
    %v143 = vld [vmem:[#allocation2 + $0xcc] sm:$0xff]
    %v144 = vld [vmem:[#allocation2 + $0xd4] sm:$0xff]
    %v145 = vld [vmem:[#allocation2 + $0xdc] sm:$0xf]
    %v146 = vld [vmem:[#allocation2 + $0xe0] sm:$0xff]
    %v147 = vld [vmem:[#allocation2 + $0xe8] sm:$0xff]
    %v148 = vld [vmem:[#allocation2 + $0xf0] sm:$0xff]
    %v149 = vld [vmem:[#allocation2 + $0xf8] sm:$0xf]
    %v150 = vld [vmem:[#allocation2 + $0xfc] sm:$0xff]
    %v151 = vld [vmem:[#allocation2 + $0x104] sm:$0xff]
    %v152 = vld [vmem:[#allocation2 + $0x10c] sm:$0xff]
    %v153 = vld [vmem:[#allocation2 + $0x114] sm:$0xf]
    %v154 = vld [vmem:[#allocation2 + $0x118] sm:$0xff]
    %v155 = vld [vmem:[#allocation2 + $0x120] sm:$0xff]
    %v156 = vld [vmem:[#allocation2 + $0x128] sm:$0xff]
    %v157 = vld [vmem:[#allocation2 + $0x130] sm:$0xf]
    %v158 = vld [vmem:[#allocation2 + $0x134] sm:$0xff]
    %v159 = vld [vmem:[#allocation2 + $0x13c] sm:$0xff]
    %v160 = vld [vmem:[#allocation2 + $0x144] sm:$0xff]
    %v161 = vld [vmem:[#allocation2 + $0x14c] sm:$0xf]
    %v162 = vld [vmem:[#allocation2 + $0x150] sm:$0xff]
    %v163 = vld [vmem:[#allocation2 + $0x158] sm:$0xff]
    %v164 = vld [vmem:[#allocation2 + $0x160] sm:$0xff]
    %v165 = vld [vmem:[#allocation2 + $0x168] sm:$0xf]
    %v166 = vld [vmem:[#allocation2 + $0x16c] sm:$0xff]
    %v167 = vld [vmem:[#allocation2 + $0x174] sm:$0xff]
    %v168 = vld [vmem:[#allocation2 + $0x17c] sm:$0xff]
    %v169 = vld [vmem:[#allocation2 + $0x184] sm:$0xf]
    %v170 = vld [vmem:[#allocation2 + $0x188] sm:$0xff]
    %v171 = vld [vmem:[#allocation2 + $0x190] sm:$0xff]
    %v172 = vld [vmem:[#allocation2 + $0x198] sm:$0xff]
    %v173 = vld [vmem:[#allocation2 + $0x1a0] sm:$0xf]
    %v174 = vld [vmem:[#allocation2 + $0x1a4] sm:$0xff]
    %v175 = vld [vmem:[#allocation2 + $0x1ac] sm:$0xff]
    %v176 = vld [vmem:[#allocation2 + $0x1b4] sm:$0xff]
    %v177 = vld [vmem:[#allocation2 + $0x1bc] sm:$0xf]
    %v178 = vld [vmem:[#allocation5] sm:$0xff]
    %v179 = vld [vmem:[#allocation5 + $0x8] sm:$0xff]
    %v180 = vld [vmem:[#allocation5 + $0x10] sm:$0xff]
    %v181 = vld [vmem:[#allocation5 + $0x18] sm:$0xff]
    %v182 = vld [vmem:[#allocation5 + $0x20] sm:$0xff]
    %v183 = vld [vmem:[#allocation5 + $0x28] sm:$0xff]
    %v184 = vld [vmem:[#allocation5 + $0x30] sm:$0xff]
    %v185 = vld [vmem:[#allocation5 + $0x38] sm:$0xff]
    %v186 = vld [vmem:[#allocation5 + $0x40] sm:$0xff]
    %v187 = vld [vmem:[#allocation5 + $0x48] sm:$0xff]
    %v188 = vld [vmem:[#allocation5 + $0x50] sm:$0xff]
    %v189 = vld [vmem:[#allocation5 + $0x58] sm:$0xff]
    %v190 = vld [vmem:[#allocation5 + $0x60] sm:$0xff]
    %v191 = vld [vmem:[#allocation5 + $0x68] sm:$0xff]
    %v192 = vld [vmem:[#allocation5 + $0x70] sm:$0xff]
    %v193 = vld [vmem:[#allocation5 + $0x78] sm:$0xff]
    %v194 = vld [vmem:[#allocation5 + $0x80] sm:$0xff]
    %v195 = vld [vmem:[#allocation5 + $0x88] sm:$0xff]
    %v196 = vld [vmem:[#allocation5 + $0x90] sm:$0xff]
    %v197 = vld [vmem:[#allocation5 + $0x98] sm:$0xff]
    %v198 = vld [vmem:[#allocation5 + $0xa0] sm:$0xff]
    %v199 = vld [vmem:[#allocation5 + $0xa8] sm:$0xff]
    %v200 = vld [vmem:[#allocation5 + $0xb0] sm:$0xff]
    %v201 = vld [vmem:[#allocation5 + $0xb8] sm:$0xff]
    %v202 = vld [vmem:[#allocation5 + $0xc0] sm:$0xff]
    %v203 = vld [vmem:[#allocation5 + $0xc8] sm:$0xff]
    %v204 = vld [vmem:[#allocation5 + $0xd0] sm:$0xff]
    %v205 = vld [vmem:[#allocation5 + $0xd8] sm:$0xff]
    %v206 = vld [vmem:[#allocation5 + $0xe0] sm:$0xff]
    %v207 = vld [vmem:[#allocation5 + $0xe8] sm:$0xff]
    %v208 = vld [vmem:[#allocation5 + $0xf0] sm:$0xff]
    %v209 = vld [vmem:[#allocation5 + $0xf8] sm:$0xff]
    %v210 = vld [vmem:[#allocation5 + $0x100] sm:$0xff]
    %v211 = vld [vmem:[#allocation5 + $0x108] sm:$0xff]
    %v212 = vld [vmem:[#allocation5 + $0x110] sm:$0xff]
    %v213 = vld [vmem:[#allocation5 + $0x118] sm:$0xff]
    %v214 = vld [vmem:[#allocation5 + $0x120] sm:$0xff]
    %v215 = vld [vmem:[#allocation5 + $0x128] sm:$0xff]
    %v216 = vld [vmem:[#allocation5 + $0x130] sm:$0xff]
    %v217 = vld [vmem:[#allocation5 + $0x138] sm:$0xff]
    %v218 = vld [vmem:[#allocation5 + $0x140] sm:$0xff]
    %v219 = vld [vmem:[#allocation5 + $0x148] sm:$0xff]
    %v220 = vld [vmem:[#allocation5 + $0x150] sm:$0xff]
    %v221 = vld [vmem:[#allocation5 + $0x158] sm:$0xff]
    %v222 = vld [vmem:[#allocation5 + $0x160] sm:$0xff]
    %v223 = vld [vmem:[#allocation5 + $0x168] sm:$0xff]
    %v224 = vld [vmem:[#allocation5 + $0x170] sm:$0xff]
    %v225 = vld [vmem:[#allocation5 + $0x178] sm:$0xff]
    %v226 = vld [vmem:[#allocation5 + $0x180] sm:$0xff]
    %v227 = vld [vmem:[#allocation5 + $0x188] sm:$0xff]
    %v228 = vld [vmem:[#allocation5 + $0x190] sm:$0xff]
    %v229 = vld [vmem:[#allocation5 + $0x198] sm:$0xff]
    %v230 = vld [vmem:[#allocation5 + $0x1a0] sm:$0xff]
    %v231 = vld [vmem:[#allocation5 + $0x1a8] sm:$0xff]
    %v232 = vld [vmem:[#allocation5 + $0x1b0] sm:$0xff]
    %v233 = vld [vmem:[#allocation5 + $0x1b8] sm:$0xff]
    %v234 = vld [vmem:[#allocation5 + $0x1c0] sm:$0xff]
    %v235 = vld [vmem:[#allocation5 + $0x1c8] sm:$0xff]
    %v236 = vld [vmem:[#allocation5 + $0x1d0] sm:$0xff]
    %v237 = vld [vmem:[#allocation5 + $0x1d8] sm:$0xff]
    %v238 = vld [vmem:[#allocation5 + $0x1e0] sm:$0xff]
    %v239 = vld [vmem:[#allocation5 + $0x1e8] sm:$0xff]
    %v240 = vld [vmem:[#allocation5 + $0x1f0] sm:$0xff]
    %v241 = vld [vmem:[#allocation5 + $0x1f8] sm:$0xff]
    %v242 = vld [vmem:[#allocation5 + $0x200] sm:$0xff]
    %v243 = vld [vmem:[#allocation5 + $0x208] sm:$0xff]
    %v244 = vld [vmem:[#allocation5 + $0x210] sm:$0xff]
    %v245 = vld [vmem:[#allocation5 + $0x218] sm:$0xff]
    %v246 = vld [vmem:[#allocation5 + $0x220] sm:$0xff]
    %v247 = vld [vmem:[#allocation5 + $0x228] sm:$0xff]
    %v248 = vld [vmem:[#allocation5 + $0x230] sm:$0xff]
    %v249 = vld [vmem:[#allocation5 + $0x238] sm:$0xff]
    %v250 = vld [vmem:[#allocation5 + $0x240] sm:$0xff]
    %v251 = vld [vmem:[#allocation5 + $0x248] sm:$0xff]
    %v252 = vld [vmem:[#allocation5 + $0x250] sm:$0xff]
    %v253 = vld [vmem:[#allocation5 + $0x258] sm:$0xff]
    %v254 = vld [vmem:[#allocation5 + $0x260] sm:$0xff]
    %v255 = vld [vmem:[#allocation5 + $0x268] sm:$0xff]
    %v256 = vld [vmem:[#allocation5 + $0x270] sm:$0xff]
    %v257 = vld [vmem:[#allocation5 + $0x278] sm:$0xff]
    %v258 = vld [vmem:[#allocation5 + $0x280] sm:$0xff]
    %v259 = vld [vmem:[#allocation5 + $0x288] sm:$0xff]
    %v260 = vld [vmem:[#allocation5 + $0x290] sm:$0xff]
    %v261 = vld [vmem:[#allocation5 + $0x298] sm:$0xff]
    %v262 = vld [vmem:[#allocation5 + $0x2a0] sm:$0xff]
    %v263 = vld [vmem:[#allocation5 + $0x2a8] sm:$0xff]
    %v264 = vld [vmem:[#allocation5 + $0x2b0] sm:$0xff]
    %v265 = vld [vmem:[#allocation5 + $0x2b8] sm:$0xff]
    %v266 = vld [vmem:[#allocation5 + $0x2c0] sm:$0xff]
    %v267 = vld [vmem:[#allocation5 + $0x2c8] sm:$0xff]
    %v268 = vld [vmem:[#allocation5 + $0x2d0] sm:$0xff]
    %v269 = vld [vmem:[#allocation5 + $0x2d8] sm:$0xff]
    %v270 = vld [vmem:[#allocation5 + $0x2e0] sm:$0xff]
    %v271 = vld [vmem:[#allocation5 + $0x2e8] sm:$0xff]
    %v272 = vld [vmem:[#allocation5 + $0x2f0] sm:$0xff]
    %v273 = vld [vmem:[#allocation5 + $0x2f8] sm:$0xff]
    %v274 = vld [vmem:[#allocation5 + $0x300] sm:$0xff]
    %v275 = vld [vmem:[#allocation5 + $0x308] sm:$0xff]
    %v276 = vld [vmem:[#allocation5 + $0x310] sm:$0xff]
    %v277 = vld [vmem:[#allocation5 + $0x318] sm:$0xff]
    %v278 = vld [vmem:[#allocation5 + $0x320] sm:$0xff]
    %v279 = vld [vmem:[#allocation5 + $0x328] sm:$0xff]
    %v280 = vld [vmem:[#allocation5 + $0x330] sm:$0xff]
    %v281 = vld [vmem:[#allocation5 + $0x338] sm:$0xff]
    %v282 = vld [vmem:[#allocation5 + $0x340] sm:$0xff]
    %v283 = vld [vmem:[#allocation5 + $0x348] sm:$0xff]
    %v284 = vld [vmem:[#allocation5 + $0x350] sm:$0xff]
    %v285 = vld [vmem:[#allocation5 + $0x358] sm:$0xff]
    %v286 = vld [vmem:[#allocation5 + $0x360] sm:$0xff]
    %v287 = vld [vmem:[#allocation5 + $0x368] sm:$0xff]
    %v288 = vld [vmem:[#allocation5 + $0x370] sm:$0xff]
    %v289 = vld [vmem:[#allocation5 + $0x378] sm:$0xff]
    %v290 = vld [vmem:[#allocation5 + $0x380] sm:$0xff]
    %v291 = vld [vmem:[#allocation5 + $0x388] sm:$0xff]
    %v292 = vld [vmem:[#allocation5 + $0x390] sm:$0xff]
    %v293 = vld [vmem:[#allocation5 + $0x398] sm:$0xff]
    %v294 = vld [vmem:[#allocation5 + $0x3a0] sm:$0xff]
    %v295 = vld [vmem:[#allocation5 + $0x3a8] sm:$0xff]
    %v296 = vld [vmem:[#allocation5 + $0x3b0] sm:$0xff]
    %v297 = vld [vmem:[#allocation5 + $0x3b8] sm:$0xff]
    %v298 = vld [vmem:[#allocation5 + $0x3c0] sm:$0xff]
    %v299 = vld [vmem:[#allocation5 + $0x3c8] sm:$0xff]
    %v300 = vld [vmem:[#allocation5 + $0x3d0] sm:$0xff]
    %v301 = vld [vmem:[#allocation5 + $0x3d8] sm:$0xff]
    %v302 = vld [vmem:[#allocation5 + $0x3e0] sm:$0xff]
    %v303 = vld [vmem:[#allocation5 + $0x3e8] sm:$0xff]
    %v304 = vld [vmem:[#allocation5 + $0x3f0] sm:$0xff]
    %v305 = vld [vmem:[#allocation5 + $0x3f8] sm:$0xff]
    %v306 = vld [vmem:[#allocation5 + $0x400] sm:$0xff]
    %v307 = vld [vmem:[#allocation5 + $0x408] sm:$0xff]
    %v308 = vld [vmem:[#allocation5 + $0x410] sm:$0xff]
    %v309 = vld [vmem:[#allocation5 + $0x418] sm:$0xff]
    %v310 = vld [vmem:[#allocation5 + $0x420] sm:$0xff]
    %v311 = vld [vmem:[#allocation5 + $0x428] sm:$0xff]
    %v312 = vld [vmem:[#allocation5 + $0x430] sm:$0xff]
    %v313 = vld [vmem:[#allocation5 + $0x438] sm:$0xff]
    %v314 = vld [vmem:[#allocation5 + $0x440] sm:$0xff]
    %v315 = vld [vmem:[#allocation5 + $0x448] sm:$0xff]
    %v316 = vld [vmem:[#allocation5 + $0x450] sm:$0xff]
    %v317 = vld [vmem:[#allocation5 + $0x458] sm:$0xff]
    %v318 = vld [vmem:[#allocation5 + $0x460] sm:$0xff]
    %v319 = vld [vmem:[#allocation5 + $0x468] sm:$0xff]
    %v320 = vld [vmem:[#allocation5 + $0x470] sm:$0xff]
    %v321 = vld [vmem:[#allocation5 + $0x478] sm:$0xff]
    %v322 = vld [vmem:[#allocation5 + $0x480] sm:$0xff]
    %v323 = vld [vmem:[#allocation5 + $0x488] sm:$0xff]
    %v324 = vld [vmem:[#allocation5 + $0x490] sm:$0xff]
    %v325 = vld [vmem:[#allocation5 + $0x498] sm:$0xff]
    %v326 = vld [vmem:[#allocation5 + $0x4a0] sm:$0xff]
    %v327 = vld [vmem:[#allocation5 + $0x4a8] sm:$0xff]
    %v328 = vld [vmem:[#allocation5 + $0x4b0] sm:$0xff]
    %v329 = vld [vmem:[#allocation5 + $0x4b8] sm:$0xff]
    %v330 = vld [vmem:[#allocation5 + $0x4c0] sm:$0xff]
    %v331 = vld [vmem:[#allocation5 + $0x4c8] sm:$0xff]
    %v332 = vld [vmem:[#allocation5 + $0x4d0] sm:$0xff]
    %v333 = vld [vmem:[#allocation5 + $0x4d8] sm:$0xff]
    %v334 = vld [vmem:[#allocation5 + $0x4e0] sm:$0xff]
    %v335 = vld [vmem:[#allocation5 + $0x4e8] sm:$0xff]
    %v336 = vld [vmem:[#allocation5 + $0x4f0] sm:$0xff]
    %v337 = vld [vmem:[#allocation5 + $0x4f8] sm:$0xff]
    %v338 = vld [vmem:[#allocation5 + $0x500] sm:$0xff]
    %v339 = vld [vmem:[#allocation5 + $0x508] sm:$0xff]
    %v340 = vld [vmem:[#allocation5 + $0x510] sm:$0xff]
    %v341 = vld [vmem:[#allocation5 + $0x518] sm:$0xff]
    %v342 = vld [vmem:[#allocation5 + $0x520] sm:$0xff]
    %v343 = vld [vmem:[#allocation5 + $0x528] sm:$0xff]
    %v344 = vld [vmem:[#allocation5 + $0x530] sm:$0xff]
    %v345 = vld [vmem:[#allocation5 + $0x538] sm:$0xff]
    %v346 = vld [vmem:[#allocation5 + $0x540] sm:$0xff]
    %v347 = vld [vmem:[#allocation5 + $0x548] sm:$0xff]
    %v348 = vld [vmem:[#allocation5 + $0x550] sm:$0xff]
    %v349 = vld [vmem:[#allocation5 + $0x558] sm:$0xff]
    %v350 = vld [vmem:[#allocation5 + $0x560] sm:$0xff]
    %v351 = vld [vmem:[#allocation5 + $0x568] sm:$0xff]
    %v352 = vld [vmem:[#allocation5 + $0x570] sm:$0xff]
    %v353 = vld [vmem:[#allocation5 + $0x578] sm:$0xff]
    %v354 = vld [vmem:[#allocation5 + $0x580] sm:$0xff]
    %v355 = vld [vmem:[#allocation5 + $0x588] sm:$0xff]
    %v356 = vld [vmem:[#allocation5 + $0x590] sm:$0xff]
    %v357 = vld [vmem:[#allocation5 + $0x598] sm:$0xff]
    %v358 = vld [vmem:[#allocation5 + $0x5a0] sm:$0xff]
    %v359 = vld [vmem:[#allocation5 + $0x5a8] sm:$0xff]
    %v360 = vld [vmem:[#allocation5 + $0x5b0] sm:$0xff]
    %v361 = vld [vmem:[#allocation5 + $0x5b8] sm:$0xff]
    %v362 = vld [vmem:[#allocation5 + $0x5c0] sm:$0xff]
    %v363 = vld [vmem:[#allocation5 + $0x5c8] sm:$0xff]
    %v364 = vld [vmem:[#allocation5 + $0x5d0] sm:$0xff]
    %v365 = vld [vmem:[#allocation5 + $0x5d8] sm:$0xff]
    %v366 = vld [vmem:[#allocation5 + $0x5e0] sm:$0xff]
    %v367 = vld [vmem:[#allocation5 + $0x5e8] sm:$0xff]
    %v368 = vld [vmem:[#allocation5 + $0x5f0] sm:$0xff]
    %v369 = vld [vmem:[#allocation5 + $0x5f8] sm:$0xff]
    %v370 = vld [vmem:[#allocation5 + $0x600] sm:$0xff]
    %v371 = vld [vmem:[#allocation5 + $0x608] sm:$0xff]
    %v372 = vld [vmem:[#allocation5 + $0x610] sm:$0xff]
    %v373 = vld [vmem:[#allocation5 + $0x618] sm:$0xff]
    %v374 = vld [vmem:[#allocation5 + $0x620] sm:$0xff]
    %v375 = vld [vmem:[#allocation5 + $0x628] sm:$0xff]
    %v376 = vld [vmem:[#allocation5 + $0x630] sm:$0xff]
    %v377 = vld [vmem:[#allocation5 + $0x638] sm:$0xff]
    %v378 = vld [vmem:[#allocation5 + $0x640] sm:$0xff]
    %v379 = vld [vmem:[#allocation5 + $0x648] sm:$0xff]
    %v380 = vld [vmem:[#allocation5 + $0x650] sm:$0xff]
    %v381 = vld [vmem:[#allocation5 + $0x658] sm:$0xff]
    %v382 = vld [vmem:[#allocation5 + $0x660] sm:$0xff]
    %v383 = vld [vmem:[#allocation5 + $0x668] sm:$0xff]
    %v384 = vld [vmem:[#allocation5 + $0x670] sm:$0xff]
    %v385 = vld [vmem:[#allocation5 + $0x678] sm:$0xff]
    %v386 = vld [vmem:[#allocation5 + $0x680] sm:$0xff]
    %v387 = vld [vmem:[#allocation5 + $0x688] sm:$0xff]
    %v388 = vld [vmem:[#allocation5 + $0x690] sm:$0xff]
    %v389 = vld [vmem:[#allocation5 + $0x698] sm:$0xff]
    %v390 = vld [vmem:[#allocation5 + $0x6a0] sm:$0xff]
    %v391 = vld [vmem:[#allocation5 + $0x6a8] sm:$0xff]
    %v392 = vld [vmem:[#allocation5 + $0x6b0] sm:$0xff]
    %v393 = vld [vmem:[#allocation5 + $0x6b8] sm:$0xff]
    %v394 = vld [vmem:[#allocation5 + $0x6c0] sm:$0xff]
    %v395 = vld [vmem:[#allocation5 + $0x6c8] sm:$0xff]
    %v396 = vld [vmem:[#allocation5 + $0x6d0] sm:$0xff]
    %v397 = vld [vmem:[#allocation5 + $0x6d8] sm:$0xff]
    %v398 = vld [vmem:[#allocation5 + $0x6e0] sm:$0xff]
    %v399 = vld [vmem:[#allocation5 + $0x6e8] sm:$0xff]
    %v400 = vld [vmem:[#allocation5 + $0x6f0] sm:$0xff]
    %v401 = vld [vmem:[#allocation5 + $0x6f8] sm:$0xff]
    %v402 = vld [vmem:[#allocation7] sm:$0xf]
    %v404 = vlaneseq
    %v405 = vshrl.u32 %v404, 7
    %v406 = vsub.s32 0, %v405
    %v407 = vrot.slane %v402, %v406
    %v408 = vlaneseq
    %v409 = vshrl.u32 %v408, 7
    %v410 = vsub.s32 1, %v409
    %v411 = vrot.slane %v402, %v410
    %v412 = vlaneseq
    %v413 = vshrl.u32 %v412, 7
    %v414 = vsub.s32 2, %v413
    %v415 = vrot.slane %v402, %v414
    %v416 = vlaneseq
    %v417 = vshrl.u32 %v416, 7
    %v418 = vsub.s32 3, %v417
    %v419 = vrot.slane %v402, %v418
    %v488 = vunpack.c.l.b16 %v114
    %v489 = vunpack.c.h.b16 %v114
    %v490 = vunpack.c.l.b16 %v115
    %v491 = vunpack.c.h.b16 %v115
    %v492 = vunpack.c.l.b16 %v116
    %v493 = vunpack.c.h.b16 %v116
    %v494 = vunpack.c.l.b16 %v117
    %v495 = vunpack.c.l.b16 %v118
    %v496 = vunpack.c.h.b16 %v118
    %v497 = vunpack.c.l.b16 %v119
    %v498 = vunpack.c.h.b16 %v119
    %v499 = vunpack.c.l.b16 %v120
    %v500 = vunpack.c.h.b16 %v120
    %v501 = vunpack.c.l.b16 %v121
    %v502 = vunpack.c.l.b16 %v122
    %v503 = vunpack.c.h.b16 %v122
    %v504 = vunpack.c.l.b16 %v123
    %v505 = vunpack.c.h.b16 %v123
    %v506 = vunpack.c.l.b16 %v124
    %v507 = vunpack.c.h.b16 %v124
    %v508 = vunpack.c.l.b16 %v125
    %v509 = vunpack.c.l.b16 %v126
    %v510 = vunpack.c.h.b16 %v126
    %v511 = vunpack.c.l.b16 %v127
    %v512 = vunpack.c.h.b16 %v127
    %v513 = vunpack.c.l.b16 %v128
    %v514 = vunpack.c.h.b16 %v128
    %v515 = vunpack.c.l.b16 %v129
    %v516 = vunpack.c.l.b16 %v130
    %v517 = vunpack.c.h.b16 %v130
    %v518 = vunpack.c.l.b16 %v131
    %v519 = vunpack.c.h.b16 %v131
    %v520 = vunpack.c.l.b16 %v132
    %v521 = vunpack.c.h.b16 %v132
    %v522 = vunpack.c.l.b16 %v133
    %v523 = vunpack.c.l.b16 %v134
    %v524 = vunpack.c.h.b16 %v134
    %v525 = vunpack.c.l.b16 %v135
    %v526 = vunpack.c.h.b16 %v135
    %v527 = vunpack.c.l.b16 %v136
    %v528 = vunpack.c.h.b16 %v136
    %v529 = vunpack.c.l.b16 %v137
    %v530 = vunpack.c.l.b16 %v138
    %v531 = vunpack.c.h.b16 %v138
    %v532 = vunpack.c.l.b16 %v139
    %v533 = vunpack.c.h.b16 %v139
    %v534 = vunpack.c.l.b16 %v140
    %v535 = vunpack.c.h.b16 %v140
    %v536 = vunpack.c.l.b16 %v141
    %v537 = vunpack.c.l.b16 %v142
    %v538 = vunpack.c.h.b16 %v142
    %v539 = vunpack.c.l.b16 %v143
    %v540 = vunpack.c.h.b16 %v143
    %v541 = vunpack.c.l.b16 %v144
    %v542 = vunpack.c.h.b16 %v144
    %v543 = vunpack.c.l.b16 %v145
    %v544 = vunpack.c.l.b16 %v146
    %v545 = vunpack.c.h.b16 %v146
    %v546 = vunpack.c.l.b16 %v147
    %v547 = vunpack.c.h.b16 %v147
    %v548 = vunpack.c.l.b16 %v148
    %v549 = vunpack.c.h.b16 %v148
    %v550 = vunpack.c.l.b16 %v149
    %v551 = vunpack.c.l.b16 %v150
    %v552 = vunpack.c.h.b16 %v150
    %v553 = vunpack.c.l.b16 %v151
    %v554 = vunpack.c.h.b16 %v151
    %v555 = vunpack.c.l.b16 %v152
    %v556 = vunpack.c.h.b16 %v152
    %v557 = vunpack.c.l.b16 %v153
    %v558 = vunpack.c.l.b16 %v154
    %v559 = vunpack.c.h.b16 %v154
    %v560 = vunpack.c.l.b16 %v155
    %v561 = vunpack.c.h.b16 %v155
    %v562 = vunpack.c.l.b16 %v156
    %v563 = vunpack.c.h.b16 %v156
    %v564 = vunpack.c.l.b16 %v157
    %v565 = vunpack.c.l.b16 %v158
    %v566 = vunpack.c.h.b16 %v158
    %v567 = vunpack.c.l.b16 %v159
    %v568 = vunpack.c.h.b16 %v159
    %v569 = vunpack.c.l.b16 %v160
    %v570 = vunpack.c.h.b16 %v160
    %v571 = vunpack.c.l.b16 %v161
    %v572 = vunpack.c.l.b16 %v162
    %v573 = vunpack.c.h.b16 %v162
    %v574 = vunpack.c.l.b16 %v163
    %v575 = vunpack.c.h.b16 %v163
    %v576 = vunpack.c.l.b16 %v164
    %v577 = vunpack.c.h.b16 %v164
    %v578 = vunpack.c.l.b16 %v165
    %v579 = vunpack.c.l.b16 %v166
    %v580 = vunpack.c.h.b16 %v166
    %v581 = vunpack.c.l.b16 %v167
    %v582 = vunpack.c.h.b16 %v167
    %v583 = vunpack.c.l.b16 %v168
    %v584 = vunpack.c.h.b16 %v168
    %v585 = vunpack.c.l.b16 %v169
    %v586 = vunpack.c.l.b16 %v170
    %v587 = vunpack.c.h.b16 %v170
    %v588 = vunpack.c.l.b16 %v171
    %v589 = vunpack.c.h.b16 %v171
    %v590 = vunpack.c.l.b16 %v172
    %v591 = vunpack.c.h.b16 %v172
    %v592 = vunpack.c.l.b16 %v173
    %v593 = vunpack.c.l.b16 %v174
    %v594 = vunpack.c.h.b16 %v174
    %v595 = vunpack.c.l.b16 %v175
    %v596 = vunpack.c.h.b16 %v175
    %v597 = vunpack.c.l.b16 %v176
    %v598 = vunpack.c.h.b16 %v176
    %v599 = vunpack.c.l.b16 %v177
    %v600 = vpack.c.b16 %v495, %v488
    %v601 = vpack.c.b16 %v496, %v489
    %v602 = vpack.c.b16 %v497, %v490
    %v603 = vpack.c.b16 %v498, %v491
    %v604 = vpack.c.b16 %v499, %v492
    %v605 = vpack.c.b16 %v500, %v493
    %v606 = vpack.c.b16 %v501, %v494
    %v607 = vpack.c.b16 %v509, %v502
    %v608 = vpack.c.b16 %v510, %v503
    %v609 = vpack.c.b16 %v511, %v504
    %v610 = vpack.c.b16 %v512, %v505
    %v611 = vpack.c.b16 %v513, %v506
    %v612 = vpack.c.b16 %v514, %v507
    %v613 = vpack.c.b16 %v515, %v508
    %v614 = vpack.c.b16 %v523, %v516
    %v615 = vpack.c.b16 %v524, %v517
    %v616 = vpack.c.b16 %v525, %v518
    %v617 = vpack.c.b16 %v526, %v519
    %v618 = vpack.c.b16 %v527, %v520
    %v619 = vpack.c.b16 %v528, %v521
    %v620 = vpack.c.b16 %v529, %v522
    %v621 = vpack.c.b16 %v537, %v530
    %v622 = vpack.c.b16 %v538, %v531
    %v623 = vpack.c.b16 %v539, %v532
    %v624 = vpack.c.b16 %v540, %v533
    %v625 = vpack.c.b16 %v541, %v534
    %v626 = vpack.c.b16 %v542, %v535
    %v627 = vpack.c.b16 %v543, %v536
    %v628 = vpack.c.b16 %v551, %v544
    %v629 = vpack.c.b16 %v552, %v545
    %v630 = vpack.c.b16 %v553, %v546
    %v631 = vpack.c.b16 %v554, %v547
    %v632 = vpack.c.b16 %v555, %v548
    %v633 = vpack.c.b16 %v556, %v549
    %v634 = vpack.c.b16 %v557, %v550
    %v635 = vpack.c.b16 %v565, %v558
    %v636 = vpack.c.b16 %v566, %v559
    %v637 = vpack.c.b16 %v567, %v560
    %v638 = vpack.c.b16 %v568, %v561
    %v639 = vpack.c.b16 %v569, %v562
    %v640 = vpack.c.b16 %v570, %v563
    %v641 = vpack.c.b16 %v571, %v564
    %v642 = vpack.c.b16 %v579, %v572
    %v643 = vpack.c.b16 %v580, %v573
    %v644 = vpack.c.b16 %v581, %v574
    %v645 = vpack.c.b16 %v582, %v575
    %v646 = vpack.c.b16 %v583, %v576
    %v647 = vpack.c.b16 %v584, %v577
    %v648 = vpack.c.b16 %v585, %v578
    %v649 = vpack.c.b16 %v593, %v586
    %v650 = vpack.c.b16 %v594, %v587
    %v651 = vpack.c.b16 %v595, %v588
    %v652 = vpack.c.b16 %v596, %v589
    %v653 = vpack.c.b16 %v597, %v590
    %v654 = vpack.c.b16 %v598, %v591
    %v655 = vpack.c.b16 %v599, %v592
    %v936 = vunpack.c.l.b16 %v178
    %v937 = vunpack.c.h.b16 %v178
    %v938 = vunpack.c.l.b16 %v179
    %v939 = vunpack.c.h.b16 %v179
    %v940 = vunpack.c.l.b16 %v180
    %v941 = vunpack.c.h.b16 %v180
    %v942 = vunpack.c.l.b16 %v181
    %v943 = vunpack.c.h.b16 %v181
    %v944 = vunpack.c.l.b16 %v182
    %v945 = vunpack.c.h.b16 %v182
    %v946 = vunpack.c.l.b16 %v183
    %v947 = vunpack.c.h.b16 %v183
    %v948 = vunpack.c.l.b16 %v184
    %v949 = vunpack.c.h.b16 %v184
    %v950 = vunpack.c.l.b16 %v185
    %v951 = vunpack.c.h.b16 %v185
    %v952 = vunpack.c.l.b16 %v186
    %v953 = vunpack.c.h.b16 %v186
    %v954 = vunpack.c.l.b16 %v187
    %v955 = vunpack.c.h.b16 %v187
    %v956 = vunpack.c.l.b16 %v188
    %v957 = vunpack.c.h.b16 %v188
    %v958 = vunpack.c.l.b16 %v189
    %v959 = vunpack.c.h.b16 %v189
    %v960 = vunpack.c.l.b16 %v190
    %v961 = vunpack.c.h.b16 %v190
    %v962 = vunpack.c.l.b16 %v191
    %v963 = vunpack.c.h.b16 %v191
    %v964 = vunpack.c.l.b16 %v192
    %v965 = vunpack.c.h.b16 %v192
    %v966 = vunpack.c.l.b16 %v193
    %v967 = vunpack.c.h.b16 %v193
    %v968 = vunpack.c.l.b16 %v194
    %v969 = vunpack.c.h.b16 %v194
    %v970 = vunpack.c.l.b16 %v195
    %v971 = vunpack.c.h.b16 %v195
    %v972 = vunpack.c.l.b16 %v196
    %v973 = vunpack.c.h.b16 %v196
    %v974 = vunpack.c.l.b16 %v197
    %v975 = vunpack.c.h.b16 %v197
    %v976 = vunpack.c.l.b16 %v198
    %v977 = vunpack.c.h.b16 %v198
    %v978 = vunpack.c.l.b16 %v199
    %v979 = vunpack.c.h.b16 %v199
    %v980 = vunpack.c.l.b16 %v200
    %v981 = vunpack.c.h.b16 %v200
    %v982 = vunpack.c.l.b16 %v201
    %v983 = vunpack.c.h.b16 %v201
    %v984 = vunpack.c.l.b16 %v202
    %v985 = vunpack.c.h.b16 %v202
    %v986 = vunpack.c.l.b16 %v203
    %v987 = vunpack.c.h.b16 %v203
    %v988 = vunpack.c.l.b16 %v204
    %v989 = vunpack.c.h.b16 %v204
    %v990 = vunpack.c.l.b16 %v205
    %v991 = vunpack.c.h.b16 %v205
    %v992 = vunpack.c.l.b16 %v206
    %v993 = vunpack.c.h.b16 %v206
    %v994 = vunpack.c.l.b16 %v207
    %v995 = vunpack.c.h.b16 %v207
    %v996 = vunpack.c.l.b16 %v208
    %v997 = vunpack.c.h.b16 %v208
    %v998 = vunpack.c.l.b16 %v209
    %v999 = vunpack.c.h.b16 %v209
    %v1000 = vunpack.c.l.b16 %v210
    %v1001 = vunpack.c.h.b16 %v210
    %v1002 = vunpack.c.l.b16 %v211
    %v1003 = vunpack.c.h.b16 %v211
    %v1004 = vunpack.c.l.b16 %v212
    %v1005 = vunpack.c.h.b16 %v212
    %v1006 = vunpack.c.l.b16 %v213
    %v1007 = vunpack.c.h.b16 %v213
    %v1008 = vunpack.c.l.b16 %v214
    %v1009 = vunpack.c.h.b16 %v214
    %v1010 = vunpack.c.l.b16 %v215
    %v1011 = vunpack.c.h.b16 %v215
    %v1012 = vunpack.c.l.b16 %v216
    %v1013 = vunpack.c.h.b16 %v216
    %v1014 = vunpack.c.l.b16 %v217
    %v1015 = vunpack.c.h.b16 %v217
    %v1016 = vunpack.c.l.b16 %v218
    %v1017 = vunpack.c.h.b16 %v218
    %v1018 = vunpack.c.l.b16 %v219
    %v1019 = vunpack.c.h.b16 %v219
    %v1020 = vunpack.c.l.b16 %v220
    %v1021 = vunpack.c.h.b16 %v220
    %v1022 = vunpack.c.l.b16 %v221
    %v1023 = vunpack.c.h.b16 %v221
    %v1024 = vunpack.c.l.b16 %v222
    %v1025 = vunpack.c.h.b16 %v222
    %v1026 = vunpack.c.l.b16 %v223
    %v1027 = vunpack.c.h.b16 %v223
    %v1028 = vunpack.c.l.b16 %v224
    %v1029 = vunpack.c.h.b16 %v224
    %v1030 = vunpack.c.l.b16 %v225
    %v1031 = vunpack.c.h.b16 %v225
    %v1032 = vunpack.c.l.b16 %v226
    %v1033 = vunpack.c.h.b16 %v226
    %v1034 = vunpack.c.l.b16 %v227
    %v1035 = vunpack.c.h.b16 %v227
    %v1036 = vunpack.c.l.b16 %v228
    %v1037 = vunpack.c.h.b16 %v228
    %v1038 = vunpack.c.l.b16 %v229
    %v1039 = vunpack.c.h.b16 %v229
    %v1040 = vunpack.c.l.b16 %v230
    %v1041 = vunpack.c.h.b16 %v230
    %v1042 = vunpack.c.l.b16 %v231
    %v1043 = vunpack.c.h.b16 %v231
    %v1044 = vunpack.c.l.b16 %v232
    %v1045 = vunpack.c.h.b16 %v232
    %v1046 = vunpack.c.l.b16 %v233
    %v1047 = vunpack.c.h.b16 %v233
    %v1048 = vunpack.c.l.b16 %v234
    %v1049 = vunpack.c.h.b16 %v234
    %v1050 = vunpack.c.l.b16 %v235
    %v1051 = vunpack.c.h.b16 %v235
    %v1052 = vunpack.c.l.b16 %v236
    %v1053 = vunpack.c.h.b16 %v236
    %v1054 = vunpack.c.l.b16 %v237
    %v1055 = vunpack.c.h.b16 %v237
    %v1056 = vunpack.c.l.b16 %v238
    %v1057 = vunpack.c.h.b16 %v238
    %v1058 = vunpack.c.l.b16 %v239
    %v1059 = vunpack.c.h.b16 %v239
    %v1060 = vunpack.c.l.b16 %v240
    %v1061 = vunpack.c.h.b16 %v240
    %v1062 = vunpack.c.l.b16 %v241
    %v1063 = vunpack.c.h.b16 %v241
    %v1064 = vunpack.c.l.b16 %v242
    %v1065 = vunpack.c.h.b16 %v242
    %v1066 = vunpack.c.l.b16 %v243
    %v1067 = vunpack.c.h.b16 %v243
    %v1068 = vunpack.c.l.b16 %v244
    %v1069 = vunpack.c.h.b16 %v244
    %v1070 = vunpack.c.l.b16 %v245
    %v1071 = vunpack.c.h.b16 %v245
    %v1072 = vunpack.c.l.b16 %v246
    %v1073 = vunpack.c.h.b16 %v246
    %v1074 = vunpack.c.l.b16 %v247
    %v1075 = vunpack.c.h.b16 %v247
    %v1076 = vunpack.c.l.b16 %v248
    %v1077 = vunpack.c.h.b16 %v248
    %v1078 = vunpack.c.l.b16 %v249
    %v1079 = vunpack.c.h.b16 %v249
    %v1080 = vunpack.c.l.b16 %v250
    %v1081 = vunpack.c.h.b16 %v250
    %v1082 = vunpack.c.l.b16 %v251
    %v1083 = vunpack.c.h.b16 %v251
    %v1084 = vunpack.c.l.b16 %v252
    %v1085 = vunpack.c.h.b16 %v252
    %v1086 = vunpack.c.l.b16 %v253
    %v1087 = vunpack.c.h.b16 %v253
    %v1088 = vunpack.c.l.b16 %v254
    %v1089 = vunpack.c.h.b16 %v254
    %v1090 = vunpack.c.l.b16 %v255
    %v1091 = vunpack.c.h.b16 %v255
    %v1092 = vunpack.c.l.b16 %v256
    %v1093 = vunpack.c.h.b16 %v256
    %v1094 = vunpack.c.l.b16 %v257
    %v1095 = vunpack.c.h.b16 %v257
    %v1096 = vunpack.c.l.b16 %v258
    %v1097 = vunpack.c.h.b16 %v258
    %v1098 = vunpack.c.l.b16 %v259
    %v1099 = vunpack.c.h.b16 %v259
    %v1100 = vunpack.c.l.b16 %v260
    %v1101 = vunpack.c.h.b16 %v260
    %v1102 = vunpack.c.l.b16 %v261
    %v1103 = vunpack.c.h.b16 %v261
    %v1104 = vunpack.c.l.b16 %v262
    %v1105 = vunpack.c.h.b16 %v262
    %v1106 = vunpack.c.l.b16 %v263
    %v1107 = vunpack.c.h.b16 %v263
    %v1108 = vunpack.c.l.b16 %v264
    %v1109 = vunpack.c.h.b16 %v264
    %v1110 = vunpack.c.l.b16 %v265
    %v1111 = vunpack.c.h.b16 %v265
    %v1112 = vunpack.c.l.b16 %v266
    %v1113 = vunpack.c.h.b16 %v266
    %v1114 = vunpack.c.l.b16 %v267
    %v1115 = vunpack.c.h.b16 %v267
    %v1116 = vunpack.c.l.b16 %v268
    %v1117 = vunpack.c.h.b16 %v268
    %v1118 = vunpack.c.l.b16 %v269
    %v1119 = vunpack.c.h.b16 %v269
    %v1120 = vunpack.c.l.b16 %v270
    %v1121 = vunpack.c.h.b16 %v270
    %v1122 = vunpack.c.l.b16 %v271
    %v1123 = vunpack.c.h.b16 %v271
    %v1124 = vunpack.c.l.b16 %v272
    %v1125 = vunpack.c.h.b16 %v272
    %v1126 = vunpack.c.l.b16 %v273
    %v1127 = vunpack.c.h.b16 %v273
    %v1128 = vunpack.c.l.b16 %v274
    %v1129 = vunpack.c.h.b16 %v274
    %v1130 = vunpack.c.l.b16 %v275
    %v1131 = vunpack.c.h.b16 %v275
    %v1132 = vunpack.c.l.b16 %v276
    %v1133 = vunpack.c.h.b16 %v276
    %v1134 = vunpack.c.l.b16 %v277
    %v1135 = vunpack.c.h.b16 %v277
    %v1136 = vunpack.c.l.b16 %v278
    %v1137 = vunpack.c.h.b16 %v278
    %v1138 = vunpack.c.l.b16 %v279
    %v1139 = vunpack.c.h.b16 %v279
    %v1140 = vunpack.c.l.b16 %v280
    %v1141 = vunpack.c.h.b16 %v280
    %v1142 = vunpack.c.l.b16 %v281
    %v1143 = vunpack.c.h.b16 %v281
    %v1144 = vunpack.c.l.b16 %v282
    %v1145 = vunpack.c.h.b16 %v282
    %v1146 = vunpack.c.l.b16 %v283
    %v1147 = vunpack.c.h.b16 %v283
    %v1148 = vunpack.c.l.b16 %v284
    %v1149 = vunpack.c.h.b16 %v284
    %v1150 = vunpack.c.l.b16 %v285
    %v1151 = vunpack.c.h.b16 %v285
    %v1152 = vunpack.c.l.b16 %v286
    %v1153 = vunpack.c.h.b16 %v286
    %v1154 = vunpack.c.l.b16 %v287
    %v1155 = vunpack.c.h.b16 %v287
    %v1156 = vunpack.c.l.b16 %v288
    %v1157 = vunpack.c.h.b16 %v288
    %v1158 = vunpack.c.l.b16 %v289
    %v1159 = vunpack.c.h.b16 %v289
    %v1160 = vunpack.c.l.b16 %v290
    %v1161 = vunpack.c.h.b16 %v290
    %v1162 = vunpack.c.l.b16 %v291
    %v1163 = vunpack.c.h.b16 %v291
    %v1164 = vunpack.c.l.b16 %v292
    %v1165 = vunpack.c.h.b16 %v292
    %v1166 = vunpack.c.l.b16 %v293
    %v1167 = vunpack.c.h.b16 %v293
    %v1168 = vunpack.c.l.b16 %v294
    %v1169 = vunpack.c.h.b16 %v294
    %v1170 = vunpack.c.l.b16 %v295
    %v1171 = vunpack.c.h.b16 %v295
    %v1172 = vunpack.c.l.b16 %v296
    %v1173 = vunpack.c.h.b16 %v296
    %v1174 = vunpack.c.l.b16 %v297
    %v1175 = vunpack.c.h.b16 %v297
    %v1176 = vunpack.c.l.b16 %v298
    %v1177 = vunpack.c.h.b16 %v298
    %v1178 = vunpack.c.l.b16 %v299
    %v1179 = vunpack.c.h.b16 %v299
    %v1180 = vunpack.c.l.b16 %v300
    %v1181 = vunpack.c.h.b16 %v300
    %v1182 = vunpack.c.l.b16 %v301
    %v1183 = vunpack.c.h.b16 %v301
    %v1184 = vunpack.c.l.b16 %v302
    %v1185 = vunpack.c.h.b16 %v302
    %v1186 = vunpack.c.l.b16 %v303
    %v1187 = vunpack.c.h.b16 %v303
    %v1188 = vunpack.c.l.b16 %v304
    %v1189 = vunpack.c.h.b16 %v304
    %v1190 = vunpack.c.l.b16 %v305
    %v1191 = vunpack.c.h.b16 %v305
    %v1192 = vunpack.c.l.b16 %v306
    %v1193 = vunpack.c.h.b16 %v306
    %v1194 = vunpack.c.l.b16 %v307
    %v1195 = vunpack.c.h.b16 %v307
    %v1196 = vunpack.c.l.b16 %v308
    %v1197 = vunpack.c.h.b16 %v308
    %v1198 = vunpack.c.l.b16 %v309
    %v1199 = vunpack.c.h.b16 %v309
    %v1200 = vunpack.c.l.b16 %v310
    %v1201 = vunpack.c.h.b16 %v310
    %v1202 = vunpack.c.l.b16 %v311
    %v1203 = vunpack.c.h.b16 %v311
    %v1204 = vunpack.c.l.b16 %v312
    %v1205 = vunpack.c.h.b16 %v312
    %v1206 = vunpack.c.l.b16 %v313
    %v1207 = vunpack.c.h.b16 %v313
    %v1208 = vunpack.c.l.b16 %v314
    %v1209 = vunpack.c.h.b16 %v314
    %v1210 = vunpack.c.l.b16 %v315
    %v1211 = vunpack.c.h.b16 %v315
    %v1212 = vunpack.c.l.b16 %v316
    %v1213 = vunpack.c.h.b16 %v316
    %v1214 = vunpack.c.l.b16 %v317
    %v1215 = vunpack.c.h.b16 %v317
    %v1216 = vunpack.c.l.b16 %v318
    %v1217 = vunpack.c.h.b16 %v318
    %v1218 = vunpack.c.l.b16 %v319
    %v1219 = vunpack.c.h.b16 %v319
    %v1220 = vunpack.c.l.b16 %v320
    %v1221 = vunpack.c.h.b16 %v320
    %v1222 = vunpack.c.l.b16 %v321
    %v1223 = vunpack.c.h.b16 %v321
    %v1224 = vunpack.c.l.b16 %v322
    %v1225 = vunpack.c.h.b16 %v322
    %v1226 = vunpack.c.l.b16 %v323
    %v1227 = vunpack.c.h.b16 %v323
    %v1228 = vunpack.c.l.b16 %v324
    %v1229 = vunpack.c.h.b16 %v324
    %v1230 = vunpack.c.l.b16 %v325
    %v1231 = vunpack.c.h.b16 %v325
    %v1232 = vunpack.c.l.b16 %v326
    %v1233 = vunpack.c.h.b16 %v326
    %v1234 = vunpack.c.l.b16 %v327
    %v1235 = vunpack.c.h.b16 %v327
    %v1236 = vunpack.c.l.b16 %v328
    %v1237 = vunpack.c.h.b16 %v328
    %v1238 = vunpack.c.l.b16 %v329
    %v1239 = vunpack.c.h.b16 %v329
    %v1240 = vunpack.c.l.b16 %v330
    %v1241 = vunpack.c.h.b16 %v330
    %v1242 = vunpack.c.l.b16 %v331
    %v1243 = vunpack.c.h.b16 %v331
    %v1244 = vunpack.c.l.b16 %v332
    %v1245 = vunpack.c.h.b16 %v332
    %v1246 = vunpack.c.l.b16 %v333
    %v1247 = vunpack.c.h.b16 %v333
    %v1248 = vunpack.c.l.b16 %v334
    %v1249 = vunpack.c.h.b16 %v334
    %v1250 = vunpack.c.l.b16 %v335
    %v1251 = vunpack.c.h.b16 %v335
    %v1252 = vunpack.c.l.b16 %v336
    %v1253 = vunpack.c.h.b16 %v336
    %v1254 = vunpack.c.l.b16 %v337
    %v1255 = vunpack.c.h.b16 %v337
    %v1256 = vunpack.c.l.b16 %v338
    %v1257 = vunpack.c.h.b16 %v338
    %v1258 = vunpack.c.l.b16 %v339
    %v1259 = vunpack.c.h.b16 %v339
    %v1260 = vunpack.c.l.b16 %v340
    %v1261 = vunpack.c.h.b16 %v340
    %v1262 = vunpack.c.l.b16 %v341
    %v1263 = vunpack.c.h.b16 %v341
    %v1264 = vunpack.c.l.b16 %v342
    %v1265 = vunpack.c.h.b16 %v342
    %v1266 = vunpack.c.l.b16 %v343
    %v1267 = vunpack.c.h.b16 %v343
    %v1268 = vunpack.c.l.b16 %v344
    %v1269 = vunpack.c.h.b16 %v344
    %v1270 = vunpack.c.l.b16 %v345
    %v1271 = vunpack.c.h.b16 %v345
    %v1272 = vunpack.c.l.b16 %v346
    %v1273 = vunpack.c.h.b16 %v346
    %v1274 = vunpack.c.l.b16 %v347
    %v1275 = vunpack.c.h.b16 %v347
    %v1276 = vunpack.c.l.b16 %v348
    %v1277 = vunpack.c.h.b16 %v348
    %v1278 = vunpack.c.l.b16 %v349
    %v1279 = vunpack.c.h.b16 %v349
    %v1280 = vunpack.c.l.b16 %v350
    %v1281 = vunpack.c.h.b16 %v350
    %v1282 = vunpack.c.l.b16 %v351
    %v1283 = vunpack.c.h.b16 %v351
    %v1284 = vunpack.c.l.b16 %v352
    %v1285 = vunpack.c.h.b16 %v352
    %v1286 = vunpack.c.l.b16 %v353
    %v1287 = vunpack.c.h.b16 %v353
    %v1288 = vunpack.c.l.b16 %v354
    %v1289 = vunpack.c.h.b16 %v354
    %v1290 = vunpack.c.l.b16 %v355
    %v1291 = vunpack.c.h.b16 %v355
    %v1292 = vunpack.c.l.b16 %v356
    %v1293 = vunpack.c.h.b16 %v356
    %v1294 = vunpack.c.l.b16 %v357
    %v1295 = vunpack.c.h.b16 %v357
    %v1296 = vunpack.c.l.b16 %v358
    %v1297 = vunpack.c.h.b16 %v358
    %v1298 = vunpack.c.l.b16 %v359
    %v1299 = vunpack.c.h.b16 %v359
    %v1300 = vunpack.c.l.b16 %v360
    %v1301 = vunpack.c.h.b16 %v360
    %v1302 = vunpack.c.l.b16 %v361
    %v1303 = vunpack.c.h.b16 %v361
    %v1304 = vunpack.c.l.b16 %v362
    %v1305 = vunpack.c.h.b16 %v362
    %v1306 = vunpack.c.l.b16 %v363
    %v1307 = vunpack.c.h.b16 %v363
    %v1308 = vunpack.c.l.b16 %v364
    %v1309 = vunpack.c.h.b16 %v364
    %v1310 = vunpack.c.l.b16 %v365
    %v1311 = vunpack.c.h.b16 %v365
    %v1312 = vunpack.c.l.b16 %v366
    %v1313 = vunpack.c.h.b16 %v366
    %v1314 = vunpack.c.l.b16 %v367
    %v1315 = vunpack.c.h.b16 %v367
    %v1316 = vunpack.c.l.b16 %v368
    %v1317 = vunpack.c.h.b16 %v368
    %v1318 = vunpack.c.l.b16 %v369
    %v1319 = vunpack.c.h.b16 %v369
    %v1320 = vunpack.c.l.b16 %v370
    %v1321 = vunpack.c.h.b16 %v370
    %v1322 = vunpack.c.l.b16 %v371
    %v1323 = vunpack.c.h.b16 %v371
    %v1324 = vunpack.c.l.b16 %v372
    %v1325 = vunpack.c.h.b16 %v372
    %v1326 = vunpack.c.l.b16 %v373
    %v1327 = vunpack.c.h.b16 %v373
    %v1328 = vunpack.c.l.b16 %v374
    %v1329 = vunpack.c.h.b16 %v374
    %v1330 = vunpack.c.l.b16 %v375
    %v1331 = vunpack.c.h.b16 %v375
    %v1332 = vunpack.c.l.b16 %v376
    %v1333 = vunpack.c.h.b16 %v376
    %v1334 = vunpack.c.l.b16 %v377
    %v1335 = vunpack.c.h.b16 %v377
    %v1336 = vunpack.c.l.b16 %v378
    %v1337 = vunpack.c.h.b16 %v378
    %v1338 = vunpack.c.l.b16 %v379
    %v1339 = vunpack.c.h.b16 %v379
    %v1340 = vunpack.c.l.b16 %v380
    %v1341 = vunpack.c.h.b16 %v380
    %v1342 = vunpack.c.l.b16 %v381
    %v1343 = vunpack.c.h.b16 %v381
    %v1344 = vunpack.c.l.b16 %v382
    %v1345 = vunpack.c.h.b16 %v382
    %v1346 = vunpack.c.l.b16 %v383
    %v1347 = vunpack.c.h.b16 %v383
    %v1348 = vunpack.c.l.b16 %v384
    %v1349 = vunpack.c.h.b16 %v384
    %v1350 = vunpack.c.l.b16 %v385
    %v1351 = vunpack.c.h.b16 %v385
    %v1352 = vunpack.c.l.b16 %v386
    %v1353 = vunpack.c.h.b16 %v386
    %v1354 = vunpack.c.l.b16 %v387
    %v1355 = vunpack.c.h.b16 %v387
    %v1356 = vunpack.c.l.b16 %v388
    %v1357 = vunpack.c.h.b16 %v388
    %v1358 = vunpack.c.l.b16 %v389
    %v1359 = vunpack.c.h.b16 %v389
    %v1360 = vunpack.c.l.b16 %v390
    %v1361 = vunpack.c.h.b16 %v390
    %v1362 = vunpack.c.l.b16 %v391
    %v1363 = vunpack.c.h.b16 %v391
    %v1364 = vunpack.c.l.b16 %v392
    %v1365 = vunpack.c.h.b16 %v392
    %v1366 = vunpack.c.l.b16 %v393
    %v1367 = vunpack.c.h.b16 %v393
    %v1368 = vunpack.c.l.b16 %v394
    %v1369 = vunpack.c.h.b16 %v394
    %v1370 = vunpack.c.l.b16 %v395
    %v1371 = vunpack.c.h.b16 %v395
    %v1372 = vunpack.c.l.b16 %v396
    %v1373 = vunpack.c.h.b16 %v396
    %v1374 = vunpack.c.l.b16 %v397
    %v1375 = vunpack.c.h.b16 %v397
    %v1376 = vunpack.c.l.b16 %v398
    %v1377 = vunpack.c.h.b16 %v398
    %v1378 = vunpack.c.l.b16 %v399
    %v1379 = vunpack.c.h.b16 %v399
    %v1380 = vunpack.c.l.b16 %v400
    %v1381 = vunpack.c.h.b16 %v400
    %v1382 = vunpack.c.l.b16 %v401
    %v1383 = vunpack.c.h.b16 %v401
    %v1384 = vpack.c.b16 %v940, %v936
    %v1385 = vpack.c.b16 %v941, %v937
    %v1386 = vpack.c.b16 %v942, %v938
    %v1387 = vpack.c.b16 %v943, %v939
    %v1388 = vpack.c.b16 %v948, %v944
    %v1389 = vpack.c.b16 %v949, %v945
    %v1390 = vpack.c.b16 %v950, %v946
    %v1391 = vpack.c.b16 %v951, %v947
    %v1392 = vpack.c.b16 %v956, %v952
    %v1393 = vpack.c.b16 %v957, %v953
    %v1394 = vpack.c.b16 %v958, %v954
    %v1395 = vpack.c.b16 %v959, %v955
    %v1396 = vpack.c.b16 %v964, %v960
    %v1397 = vpack.c.b16 %v965, %v961
    %v1398 = vpack.c.b16 %v966, %v962
    %v1399 = vpack.c.b16 %v967, %v963
    %v1400 = vpack.c.b16 %v972, %v968
    %v1401 = vpack.c.b16 %v973, %v969
    %v1402 = vpack.c.b16 %v974, %v970
    %v1403 = vpack.c.b16 %v975, %v971
    %v1404 = vpack.c.b16 %v980, %v976
    %v1405 = vpack.c.b16 %v981, %v977
    %v1406 = vpack.c.b16 %v982, %v978
    %v1407 = vpack.c.b16 %v983, %v979
    %v1408 = vpack.c.b16 %v988, %v984
    %v1409 = vpack.c.b16 %v989, %v985
    %v1410 = vpack.c.b16 %v990, %v986
    %v1411 = vpack.c.b16 %v991, %v987
    %v1412 = vpack.c.b16 %v996, %v992
    %v1413 = vpack.c.b16 %v997, %v993
    %v1414 = vpack.c.b16 %v998, %v994
    %v1415 = vpack.c.b16 %v999, %v995
    %v1416 = vpack.c.b16 %v1004, %v1000
    %v1417 = vpack.c.b16 %v1005, %v1001
    %v1418 = vpack.c.b16 %v1006, %v1002
    %v1419 = vpack.c.b16 %v1007, %v1003
    %v1420 = vpack.c.b16 %v1012, %v1008
    %v1421 = vpack.c.b16 %v1013, %v1009
    %v1422 = vpack.c.b16 %v1014, %v1010
    %v1423 = vpack.c.b16 %v1015, %v1011
    %v1424 = vpack.c.b16 %v1020, %v1016
    %v1425 = vpack.c.b16 %v1021, %v1017
    %v1426 = vpack.c.b16 %v1022, %v1018
    %v1427 = vpack.c.b16 %v1023, %v1019
    %v1428 = vpack.c.b16 %v1028, %v1024
    %v1429 = vpack.c.b16 %v1029, %v1025
    %v1430 = vpack.c.b16 %v1030, %v1026
    %v1431 = vpack.c.b16 %v1031, %v1027
    %v1432 = vpack.c.b16 %v1036, %v1032
    %v1433 = vpack.c.b16 %v1037, %v1033
    %v1434 = vpack.c.b16 %v1038, %v1034
    %v1435 = vpack.c.b16 %v1039, %v1035
    %v1436 = vpack.c.b16 %v1044, %v1040
    %v1437 = vpack.c.b16 %v1045, %v1041
    %v1438 = vpack.c.b16 %v1046, %v1042
    %v1439 = vpack.c.b16 %v1047, %v1043
    %v1440 = vpack.c.b16 %v1052, %v1048
    %v1441 = vpack.c.b16 %v1053, %v1049
    %v1442 = vpack.c.b16 %v1054, %v1050
    %v1443 = vpack.c.b16 %v1055, %v1051
    %v1444 = vpack.c.b16 %v1060, %v1056
    %v1445 = vpack.c.b16 %v1061, %v1057
    %v1446 = vpack.c.b16 %v1062, %v1058
    %v1447 = vpack.c.b16 %v1063, %v1059
    %v1448 = vpack.c.b16 %v1068, %v1064
    %v1449 = vpack.c.b16 %v1069, %v1065
    %v1450 = vpack.c.b16 %v1070, %v1066
    %v1451 = vpack.c.b16 %v1071, %v1067
    %v1452 = vpack.c.b16 %v1076, %v1072
    %v1453 = vpack.c.b16 %v1077, %v1073
    %v1454 = vpack.c.b16 %v1078, %v1074
    %v1455 = vpack.c.b16 %v1079, %v1075
    %v1456 = vpack.c.b16 %v1084, %v1080
    %v1457 = vpack.c.b16 %v1085, %v1081
    %v1458 = vpack.c.b16 %v1086, %v1082
    %v1459 = vpack.c.b16 %v1087, %v1083
    %v1460 = vpack.c.b16 %v1092, %v1088
    %v1461 = vpack.c.b16 %v1093, %v1089
    %v1462 = vpack.c.b16 %v1094, %v1090
    %v1463 = vpack.c.b16 %v1095, %v1091
    %v1464 = vpack.c.b16 %v1100, %v1096
    %v1465 = vpack.c.b16 %v1101, %v1097
    %v1466 = vpack.c.b16 %v1102, %v1098
    %v1467 = vpack.c.b16 %v1103, %v1099
    %v1468 = vpack.c.b16 %v1108, %v1104
    %v1469 = vpack.c.b16 %v1109, %v1105
    %v1470 = vpack.c.b16 %v1110, %v1106
    %v1471 = vpack.c.b16 %v1111, %v1107
    %v1472 = vpack.c.b16 %v1116, %v1112
    %v1473 = vpack.c.b16 %v1117, %v1113
    %v1474 = vpack.c.b16 %v1118, %v1114
    %v1475 = vpack.c.b16 %v1119, %v1115
    %v1476 = vpack.c.b16 %v1124, %v1120
    %v1477 = vpack.c.b16 %v1125, %v1121
    %v1478 = vpack.c.b16 %v1126, %v1122
    %v1479 = vpack.c.b16 %v1127, %v1123
    %v1480 = vpack.c.b16 %v1132, %v1128
    %v1481 = vpack.c.b16 %v1133, %v1129
    %v1482 = vpack.c.b16 %v1134, %v1130
    %v1483 = vpack.c.b16 %v1135, %v1131
    %v1484 = vpack.c.b16 %v1140, %v1136
    %v1485 = vpack.c.b16 %v1141, %v1137
    %v1486 = vpack.c.b16 %v1142, %v1138
    %v1487 = vpack.c.b16 %v1143, %v1139
    %v1488 = vpack.c.b16 %v1148, %v1144
    %v1489 = vpack.c.b16 %v1149, %v1145
    %v1490 = vpack.c.b16 %v1150, %v1146
    %v1491 = vpack.c.b16 %v1151, %v1147
    %v1492 = vpack.c.b16 %v1156, %v1152
    %v1493 = vpack.c.b16 %v1157, %v1153
    %v1494 = vpack.c.b16 %v1158, %v1154
    %v1495 = vpack.c.b16 %v1159, %v1155
    %v1496 = vpack.c.b16 %v1164, %v1160
    %v1497 = vpack.c.b16 %v1165, %v1161
    %v1498 = vpack.c.b16 %v1166, %v1162
    %v1499 = vpack.c.b16 %v1167, %v1163
    %v1500 = vpack.c.b16 %v1172, %v1168
    %v1501 = vpack.c.b16 %v1173, %v1169
    %v1502 = vpack.c.b16 %v1174, %v1170
    %v1503 = vpack.c.b16 %v1175, %v1171
    %v1504 = vpack.c.b16 %v1180, %v1176
    %v1505 = vpack.c.b16 %v1181, %v1177
    %v1506 = vpack.c.b16 %v1182, %v1178
    %v1507 = vpack.c.b16 %v1183, %v1179
    %v1508 = vpack.c.b16 %v1188, %v1184
    %v1509 = vpack.c.b16 %v1189, %v1185
    %v1510 = vpack.c.b16 %v1190, %v1186
    %v1511 = vpack.c.b16 %v1191, %v1187
    %v1512 = vpack.c.b16 %v1196, %v1192
    %v1513 = vpack.c.b16 %v1197, %v1193
    %v1514 = vpack.c.b16 %v1198, %v1194
    %v1515 = vpack.c.b16 %v1199, %v1195
    %v1516 = vpack.c.b16 %v1204, %v1200
    %v1517 = vpack.c.b16 %v1205, %v1201
    %v1518 = vpack.c.b16 %v1206, %v1202
    %v1519 = vpack.c.b16 %v1207, %v1203
    %v1520 = vpack.c.b16 %v1212, %v1208
    %v1521 = vpack.c.b16 %v1213, %v1209
    %v1522 = vpack.c.b16 %v1214, %v1210
    %v1523 = vpack.c.b16 %v1215, %v1211
    %v1524 = vpack.c.b16 %v1220, %v1216
    %v1525 = vpack.c.b16 %v1221, %v1217
    %v1526 = vpack.c.b16 %v1222, %v1218
    %v1527 = vpack.c.b16 %v1223, %v1219
    %v1528 = vpack.c.b16 %v1228, %v1224
    %v1529 = vpack.c.b16 %v1229, %v1225
    %v1530 = vpack.c.b16 %v1230, %v1226
    %v1531 = vpack.c.b16 %v1231, %v1227
    %v1532 = vpack.c.b16 %v1236, %v1232
    %v1533 = vpack.c.b16 %v1237, %v1233
    %v1534 = vpack.c.b16 %v1238, %v1234
    %v1535 = vpack.c.b16 %v1239, %v1235
    %v1536 = vpack.c.b16 %v1244, %v1240
    %v1537 = vpack.c.b16 %v1245, %v1241
    %v1538 = vpack.c.b16 %v1246, %v1242
    %v1539 = vpack.c.b16 %v1247, %v1243
    %v1540 = vpack.c.b16 %v1252, %v1248
    %v1541 = vpack.c.b16 %v1253, %v1249
    %v1542 = vpack.c.b16 %v1254, %v1250
    %v1543 = vpack.c.b16 %v1255, %v1251
    %v1544 = vpack.c.b16 %v1260, %v1256
    %v1545 = vpack.c.b16 %v1261, %v1257
    %v1546 = vpack.c.b16 %v1262, %v1258
    %v1547 = vpack.c.b16 %v1263, %v1259
    %v1548 = vpack.c.b16 %v1268, %v1264
    %v1549 = vpack.c.b16 %v1269, %v1265
    %v1550 = vpack.c.b16 %v1270, %v1266
    %v1551 = vpack.c.b16 %v1271, %v1267
    %v1552 = vpack.c.b16 %v1276, %v1272
    %v1553 = vpack.c.b16 %v1277, %v1273
    %v1554 = vpack.c.b16 %v1278, %v1274
    %v1555 = vpack.c.b16 %v1279, %v1275
    %v1556 = vpack.c.b16 %v1284, %v1280
    %v1557 = vpack.c.b16 %v1285, %v1281
    %v1558 = vpack.c.b16 %v1286, %v1282
    %v1559 = vpack.c.b16 %v1287, %v1283
    %v1560 = vpack.c.b16 %v1292, %v1288
    %v1561 = vpack.c.b16 %v1293, %v1289
    %v1562 = vpack.c.b16 %v1294, %v1290
    %v1563 = vpack.c.b16 %v1295, %v1291
    %v1564 = vpack.c.b16 %v1300, %v1296
    %v1565 = vpack.c.b16 %v1301, %v1297
    %v1566 = vpack.c.b16 %v1302, %v1298
    %v1567 = vpack.c.b16 %v1303, %v1299
    %v1568 = vpack.c.b16 %v1308, %v1304
    %v1569 = vpack.c.b16 %v1309, %v1305
    %v1570 = vpack.c.b16 %v1310, %v1306
    %v1571 = vpack.c.b16 %v1311, %v1307
    %v1572 = vpack.c.b16 %v1316, %v1312
    %v1573 = vpack.c.b16 %v1317, %v1313
    %v1574 = vpack.c.b16 %v1318, %v1314
    %v1575 = vpack.c.b16 %v1319, %v1315
    %v1576 = vpack.c.b16 %v1324, %v1320
    %v1577 = vpack.c.b16 %v1325, %v1321
    %v1578 = vpack.c.b16 %v1326, %v1322
    %v1579 = vpack.c.b16 %v1327, %v1323
    %v1580 = vpack.c.b16 %v1332, %v1328
    %v1581 = vpack.c.b16 %v1333, %v1329
    %v1582 = vpack.c.b16 %v1334, %v1330
    %v1583 = vpack.c.b16 %v1335, %v1331
    %v1584 = vpack.c.b16 %v1340, %v1336
    %v1585 = vpack.c.b16 %v1341, %v1337
    %v1586 = vpack.c.b16 %v1342, %v1338
    %v1587 = vpack.c.b16 %v1343, %v1339
    %v1588 = vpack.c.b16 %v1348, %v1344
    %v1589 = vpack.c.b16 %v1349, %v1345
    %v1590 = vpack.c.b16 %v1350, %v1346
    %v1591 = vpack.c.b16 %v1351, %v1347
    %v1592 = vpack.c.b16 %v1356, %v1352
    %v1593 = vpack.c.b16 %v1357, %v1353
    %v1594 = vpack.c.b16 %v1358, %v1354
    %v1595 = vpack.c.b16 %v1359, %v1355
    %v1596 = vpack.c.b16 %v1364, %v1360
    %v1597 = vpack.c.b16 %v1365, %v1361
    %v1598 = vpack.c.b16 %v1366, %v1362
    %v1599 = vpack.c.b16 %v1367, %v1363
    %v1600 = vpack.c.b16 %v1372, %v1368
    %v1601 = vpack.c.b16 %v1373, %v1369
    %v1602 = vpack.c.b16 %v1374, %v1370
    %v1603 = vpack.c.b16 %v1375, %v1371
    %v1604 = vpack.c.b16 %v1380, %v1376
    %v1605 = vpack.c.b16 %v1381, %v1377
    %v1606 = vpack.c.b16 %v1382, %v1378
    %v1607 = vpack.c.b16 %v1383, %v1379
    %1832 = vmatprep.subr.bf16.mxu0 %v1413
    %1833 = vmatpush1.bf16.msra.mxu0 %v1412
    %1834 = vmatprep.subr.bf16.mxu0 %v1409
    %1835 = vmatpush1.bf16.msra.mxu0 %v1408
    %1836 = vmatprep.subr.bf16.mxu0 %v1405
    %1837 = vmatpush1.bf16.msra.mxu0 %v1404
    %1838 = vmatprep.subr.bf16.mxu0 %v1401
    %1839 = vmatpush1.bf16.msra.mxu0 %v1400
    %1840 = vmatprep.subr.bf16.mxu0 %v1397
    %1841 = vmatpush1.bf16.msra.mxu0 %v1396
    %1842 = vmatprep.subr.bf16.mxu0 %v1393
    %1843 = vmatpush1.bf16.msra.mxu0 %v1392
    %1844 = vmatprep.subr.bf16.mxu0 %v1389
    %1845 = vmatpush1.bf16.msra.mxu0 %v1388
    %1846 = vmatprep.subr.bf16.mxu0 %v1385
    %1847 = vmatpush1.bf16.msra.mxu0 %v1384
    %1848 = vmatprep.subr.bf16.mxu0 %v1445
    %1849 = vmatpush2.bf16.msra.mxu0 %v1444
    %1850 = vmatprep.subr.bf16.mxu0 %v1441
    %1851 = vmatpush2.bf16.msra.mxu0 %v1440
    %1852 = vmatprep.subr.bf16.mxu0 %v1437
    %1853 = vmatpush2.bf16.msra.mxu0 %v1436
    %1854 = vmatprep.subr.bf16.mxu0 %v1433
    %1855 = vmatpush2.bf16.msra.mxu0 %v1432
    %1856 = vmatprep.subr.bf16.mxu0 %v1429
    %1857 = vmatpush2.bf16.msra.mxu0 %v1428
    %1858 = vmatprep.subr.bf16.mxu0 %v1425
    %1859 = vmatpush2.bf16.msra.mxu0 %v1424
    %1860 = vmatprep.subr.bf16.mxu0 %v1421
    %1861 = vmatpush2.bf16.msra.mxu0 %v1420
    %1862 = vmatprep.subr.bf16.mxu0 %v1417
    %1863 = vmatpush2.bf16.msra.mxu0 %v1416
    %1864 = vmatprep.mubr.bf16.mxu0 %v601
    %1865 = vmatmul.mubr.bf16.gmra.mxu0 %v600
    %v1866 = vpop.f32.mrf.mxu0
    %v1867 = vadd.f32 %v407, %v1866
    %v1868 = vpop.f32.mrf.mxu0
    %v1869 = vadd.f32 %v411, %v1868
    %v1870 = vpop.f32.mrf.mxu0
    %v1871 = vadd.f32 %v407, %v1870
    %v1872 = vpop.f32.mrf.mxu0
    %v1873 = vadd.f32 %v411, %v1872
    %1874 = vmatprep.mubr.bf16.mxu0 %v608
    %1875 = vmatmul.mubr.bf16.gmra.mxu0 %v607
    %v1876 = vpop.f32.mrf.mxu0
    %v1877 = vadd.f32 %v407, %v1876
    %v1878 = vpop.f32.mrf.mxu0
    %v1879 = vadd.f32 %v411, %v1878
    %v1880 = vpop.f32.mrf.mxu0
    %v1881 = vadd.f32 %v407, %v1880
    %v1882 = vpop.f32.mrf.mxu0
    %v1883 = vadd.f32 %v411, %v1882
    %1884 = vmatprep.mubr.bf16.mxu0 %v615
    %1885 = vmatmul.mubr.bf16.gmra.mxu0 %v614
    %v1886 = vpop.f32.mrf.mxu0
    %v1887 = vadd.f32 %v407, %v1886
    %v1888 = vpop.f32.mrf.mxu0
    %v1889 = vadd.f32 %v411, %v1888
    %v1890 = vpop.f32.mrf.mxu0
    %v1891 = vadd.f32 %v407, %v1890
    %v1892 = vpop.f32.mrf.mxu0
    %v1893 = vadd.f32 %v411, %v1892
    %1894 = vmatprep.mubr.bf16.mxu0 %v622
    %1895 = vmatmul.mubr.bf16.gmra.mxu0 %v621
    %v1896 = vpop.f32.mrf.mxu0
    %v1897 = vadd.f32 %v407, %v1896
    %v1898 = vpop.f32.mrf.mxu0
    %v1899 = vadd.f32 %v411, %v1898
    %v1900 = vpop.f32.mrf.mxu0
    %v1901 = vadd.f32 %v407, %v1900
    %v1902 = vpop.f32.mrf.mxu0
    %v1903 = vadd.f32 %v411, %v1902
    %1904 = vmatprep.mubr.bf16.mxu0 %v629
    %1905 = vmatmul.mubr.bf16.gmra.mxu0 %v628
    %v1906 = vpop.f32.mrf.mxu0
    %v1907 = vadd.f32 %v407, %v1906
    %v1908 = vpop.f32.mrf.mxu0
    %v1909 = vadd.f32 %v411, %v1908
    %v1910 = vpop.f32.mrf.mxu0
    %v1911 = vadd.f32 %v407, %v1910
    %v1912 = vpop.f32.mrf.mxu0
    %v1913 = vadd.f32 %v411, %v1912
    %1914 = vmatprep.mubr.bf16.mxu0 %v636
    %1915 = vmatmul.mubr.bf16.gmra.mxu0 %v635
    %v1916 = vpop.f32.mrf.mxu0
    %v1917 = vadd.f32 %v407, %v1916
    %v1918 = vpop.f32.mrf.mxu0
    %v1919 = vadd.f32 %v411, %v1918
    %v1920 = vpop.f32.mrf.mxu0
    %v1921 = vadd.f32 %v407, %v1920
    %v1922 = vpop.f32.mrf.mxu0
    %v1923 = vadd.f32 %v411, %v1922
    %1924 = vmatprep.mubr.bf16.mxu0 %v643
    %1925 = vmatmul.mubr.bf16.gmra.mxu0 %v642
    %v1926 = vpop.f32.mrf.mxu0
    %v1927 = vadd.f32 %v407, %v1926
    %v1928 = vpop.f32.mrf.mxu0
    %v1929 = vadd.f32 %v411, %v1928
    %v1930 = vpop.f32.mrf.mxu0
    %v1931 = vadd.f32 %v407, %v1930
    %v1932 = vpop.f32.mrf.mxu0
    %v1933 = vadd.f32 %v411, %v1932
    %1934 = vmatprep.mubr.bf16.mxu0 %v650
    %1935 = vmatmul.mubr.bf16.gmra.mxu0 %v649
    %v1936 = vpop.f32.mrf.mxu0
    %v1937 = vadd.f32 %v407, %v1936
    %v1938 = vpop.f32.mrf.mxu0
    %v1939 = vadd.f32 %v411, %v1938
    %v1940 = vpop.f32.mrf.mxu0
    %v1941 = vadd.f32 %v407, %v1940
    %v1942 = vpop.f32.mrf.mxu0
    %v1943 = vadd.f32 %v411, %v1942
    %1944 = vdwg.mxu0
    %1945 = vmatprep.subr.bf16.mxu0 %v1477
    %1946 = vmatpush1.bf16.msra.mxu0 %v1476
    %1947 = vmatprep.subr.bf16.mxu0 %v1473
    %1948 = vmatpush1.bf16.msra.mxu0 %v1472
    %1949 = vmatprep.subr.bf16.mxu0 %v1469
    %1950 = vmatpush1.bf16.msra.mxu0 %v1468
    %1951 = vmatprep.subr.bf16.mxu0 %v1465
    %1952 = vmatpush1.bf16.msra.mxu0 %v1464
    %1953 = vmatprep.subr.bf16.mxu0 %v1461
    %1954 = vmatpush1.bf16.msra.mxu0 %v1460
    %1955 = vmatprep.subr.bf16.mxu0 %v1457
    %1956 = vmatpush1.bf16.msra.mxu0 %v1456
    %1957 = vmatprep.subr.bf16.mxu0 %v1453
    %1958 = vmatpush1.bf16.msra.mxu0 %v1452
    %1959 = vmatprep.subr.bf16.mxu0 %v1449
    %1960 = vmatpush1.bf16.msra.mxu0 %v1448
    %1961 = vmatprep.subr.bf16.mxu0 %v1509
    %1962 = vmatpush2.bf16.msra.mxu0 %v1508
    %1963 = vmatprep.subr.bf16.mxu0 %v1505
    %1964 = vmatpush2.bf16.msra.mxu0 %v1504
    %1965 = vmatprep.subr.bf16.mxu0 %v1501
    %1966 = vmatpush2.bf16.msra.mxu0 %v1500
    %1967 = vmatprep.subr.bf16.mxu0 %v1497
    %1968 = vmatpush2.bf16.msra.mxu0 %v1496
    %1969 = vmatprep.subr.bf16.mxu0 %v1493
    %1970 = vmatpush2.bf16.msra.mxu0 %v1492
    %1971 = vmatprep.subr.bf16.mxu0 %v1489
    %1972 = vmatpush2.bf16.msra.mxu0 %v1488
    %1973 = vmatprep.subr.bf16.mxu0 %v1485
    %1974 = vmatpush2.bf16.msra.mxu0 %v1484
    %1975 = vmatprep.subr.bf16.mxu0 %v1481
    %1976 = vmatpush2.bf16.msra.mxu0 %v1480
    %1977 = vmatprep.mubr.bf16.mxu0 %v603
    %1978 = vmatmul.mubr.bf16.gmra.mxu0 %v602
    %v1979 = vpop.f32.mrf.mxu0
    %v1980 = vadd.f32 %v1867, %v1979
    %v1981 = vpop.f32.mrf.mxu0
    %v1982 = vadd.f32 %v1869, %v1981
    %v1983 = vpop.f32.mrf.mxu0
    %v1984 = vadd.f32 %v1871, %v1983
    %v1985 = vpop.f32.mrf.mxu0
    %v1986 = vadd.f32 %v1873, %v1985
    %1987 = vmatprep.mubr.bf16.mxu0 %v610
    %1988 = vmatmul.mubr.bf16.gmra.mxu0 %v609
    %v1989 = vpop.f32.mrf.mxu0
    %v1990 = vadd.f32 %v1877, %v1989
    %v1991 = vpop.f32.mrf.mxu0
    %v1992 = vadd.f32 %v1879, %v1991
    %v1993 = vpop.f32.mrf.mxu0
    %v1994 = vadd.f32 %v1881, %v1993
    %v1995 = vpop.f32.mrf.mxu0
    %v1996 = vadd.f32 %v1883, %v1995
    %1997 = vmatprep.mubr.bf16.mxu0 %v617
    %1998 = vmatmul.mubr.bf16.gmra.mxu0 %v616
    %v1999 = vpop.f32.mrf.mxu0
    %v2000 = vadd.f32 %v1887, %v1999
    %v2001 = vpop.f32.mrf.mxu0
    %v2002 = vadd.f32 %v1889, %v2001
    %v2003 = vpop.f32.mrf.mxu0
    %v2004 = vadd.f32 %v1891, %v2003
    %v2005 = vpop.f32.mrf.mxu0
    %v2006 = vadd.f32 %v1893, %v2005
    %2007 = vmatprep.mubr.bf16.mxu0 %v624
    %2008 = vmatmul.mubr.bf16.gmra.mxu0 %v623
    %v2009 = vpop.f32.mrf.mxu0
    %v2010 = vadd.f32 %v1897, %v2009
    %v2011 = vpop.f32.mrf.mxu0
    %v2012 = vadd.f32 %v1899, %v2011
    %v2013 = vpop.f32.mrf.mxu0
    %v2014 = vadd.f32 %v1901, %v2013
    %v2015 = vpop.f32.mrf.mxu0
    %v2016 = vadd.f32 %v1903, %v2015
    %2017 = vmatprep.mubr.bf16.mxu0 %v631
    %2018 = vmatmul.mubr.bf16.gmra.mxu0 %v630
    %v2019 = vpop.f32.mrf.mxu0
    %v2020 = vadd.f32 %v1907, %v2019
    %v2021 = vpop.f32.mrf.mxu0
    %v2022 = vadd.f32 %v1909, %v2021
    %v2023 = vpop.f32.mrf.mxu0
    %v2024 = vadd.f32 %v1911, %v2023
    %v2025 = vpop.f32.mrf.mxu0
    %v2026 = vadd.f32 %v1913, %v2025
    %2027 = vmatprep.mubr.bf16.mxu0 %v638
    %2028 = vmatmul.mubr.bf16.gmra.mxu0 %v637
    %v2029 = vpop.f32.mrf.mxu0
    %v2030 = vadd.f32 %v1917, %v2029
    %v2031 = vpop.f32.mrf.mxu0
    %v2032 = vadd.f32 %v1919, %v2031
    %v2033 = vpop.f32.mrf.mxu0
    %v2034 = vadd.f32 %v1921, %v2033
    %v2035 = vpop.f32.mrf.mxu0
    %v2036 = vadd.f32 %v1923, %v2035
    %2037 = vmatprep.mubr.bf16.mxu0 %v645
    %2038 = vmatmul.mubr.bf16.gmra.mxu0 %v644
    %v2039 = vpop.f32.mrf.mxu0
    %v2040 = vadd.f32 %v1927, %v2039
    %v2041 = vpop.f32.mrf.mxu0
    %v2042 = vadd.f32 %v1929, %v2041
    %v2043 = vpop.f32.mrf.mxu0
    %v2044 = vadd.f32 %v1931, %v2043
    %v2045 = vpop.f32.mrf.mxu0
    %v2046 = vadd.f32 %v1933, %v2045
    %2047 = vmatprep.mubr.bf16.mxu0 %v652
    %2048 = vmatmul.mubr.bf16.gmra.mxu0 %v651
    %v2049 = vpop.f32.mrf.mxu0
    %v2050 = vadd.f32 %v1937, %v2049
    %v2051 = vpop.f32.mrf.mxu0
    %v2052 = vadd.f32 %v1939, %v2051
    %v2053 = vpop.f32.mrf.mxu0
    %v2054 = vadd.f32 %v1941, %v2053
    %v2055 = vpop.f32.mrf.mxu0
    %v2056 = vadd.f32 %v1943, %v2055
    %2057 = vdwg.mxu0
    %2058 = vmatprep.subr.bf16.mxu0 %v1541
    %2059 = vmatpush1.bf16.msra.mxu0 %v1540
    %2060 = vmatprep.subr.bf16.mxu0 %v1537
    %2061 = vmatpush1.bf16.msra.mxu0 %v1536
    %2062 = vmatprep.subr.bf16.mxu0 %v1533
    %2063 = vmatpush1.bf16.msra.mxu0 %v1532
    %2064 = vmatprep.subr.bf16.mxu0 %v1529
    %2065 = vmatpush1.bf16.msra.mxu0 %v1528
    %2066 = vmatprep.subr.bf16.mxu0 %v1525
    %2067 = vmatpush1.bf16.msra.mxu0 %v1524
    %2068 = vmatprep.subr.bf16.mxu0 %v1521
    %2069 = vmatpush1.bf16.msra.mxu0 %v1520
    %2070 = vmatprep.subr.bf16.mxu0 %v1517
    %2071 = vmatpush1.bf16.msra.mxu0 %v1516
    %2072 = vmatprep.subr.bf16.mxu0 %v1513
    %2073 = vmatpush1.bf16.msra.mxu0 %v1512
    %2074 = vmatprep.subr.bf16.mxu0 %v1573
    %2075 = vmatpush2.bf16.msra.mxu0 %v1572
    %2076 = vmatprep.subr.bf16.mxu0 %v1569
    %2077 = vmatpush2.bf16.msra.mxu0 %v1568
    %2078 = vmatprep.subr.bf16.mxu0 %v1565
    %2079 = vmatpush2.bf16.msra.mxu0 %v1564
    %2080 = vmatprep.subr.bf16.mxu0 %v1561
    %2081 = vmatpush2.bf16.msra.mxu0 %v1560
    %2082 = vmatprep.subr.bf16.mxu0 %v1557
    %2083 = vmatpush2.bf16.msra.mxu0 %v1556
    %2084 = vmatprep.subr.bf16.mxu0 %v1553
    %2085 = vmatpush2.bf16.msra.mxu0 %v1552
    %2086 = vmatprep.subr.bf16.mxu0 %v1549
    %2087 = vmatpush2.bf16.msra.mxu0 %v1548
    %2088 = vmatprep.subr.bf16.mxu0 %v1545
    %2089 = vmatpush2.bf16.msra.mxu0 %v1544
    %2090 = vmatprep.mubr.bf16.mxu0 %v605
    %2091 = vmatmul.mubr.bf16.gmra.mxu0 %v604
    %v2092 = vpop.f32.mrf.mxu0
    %v2093 = vadd.f32 %v1980, %v2092
    %v2094 = vpop.f32.mrf.mxu0
    %v2095 = vadd.f32 %v1982, %v2094
    %v2096 = vpop.f32.mrf.mxu0
    %v2097 = vadd.f32 %v1984, %v2096
    %v2098 = vpop.f32.mrf.mxu0
    %v2099 = vadd.f32 %v1986, %v2098
    %2100 = vmatprep.mubr.bf16.mxu0 %v612
    %2101 = vmatmul.mubr.bf16.gmra.mxu0 %v611
    %v2102 = vpop.f32.mrf.mxu0
    %v2103 = vadd.f32 %v1990, %v2102
    %v2104 = vpop.f32.mrf.mxu0
    %v2105 = vadd.f32 %v1992, %v2104
    %v2106 = vpop.f32.mrf.mxu0
    %v2107 = vadd.f32 %v1994, %v2106
    %v2108 = vpop.f32.mrf.mxu0
    %v2109 = vadd.f32 %v1996, %v2108
    %2110 = vmatprep.mubr.bf16.mxu0 %v619
    %2111 = vmatmul.mubr.bf16.gmra.mxu0 %v618
    %v2112 = vpop.f32.mrf.mxu0
    %v2113 = vadd.f32 %v2000, %v2112
    %v2114 = vpop.f32.mrf.mxu0
    %v2115 = vadd.f32 %v2002, %v2114
    %v2116 = vpop.f32.mrf.mxu0
    %v2117 = vadd.f32 %v2004, %v2116
    %v2118 = vpop.f32.mrf.mxu0
    %v2119 = vadd.f32 %v2006, %v2118
    %2120 = vmatprep.mubr.bf16.mxu0 %v626
    %2121 = vmatmul.mubr.bf16.gmra.mxu0 %v625
    %v2122 = vpop.f32.mrf.mxu0
    %v2123 = vadd.f32 %v2010, %v2122
    %v2124 = vpop.f32.mrf.mxu0
    %v2125 = vadd.f32 %v2012, %v2124
    %v2126 = vpop.f32.mrf.mxu0
    %v2127 = vadd.f32 %v2014, %v2126
    %v2128 = vpop.f32.mrf.mxu0
    %v2129 = vadd.f32 %v2016, %v2128
    %2130 = vmatprep.mubr.bf16.mxu0 %v633
    %2131 = vmatmul.mubr.bf16.gmra.mxu0 %v632
    %v2132 = vpop.f32.mrf.mxu0
    %v2133 = vadd.f32 %v2020, %v2132
    %v2134 = vpop.f32.mrf.mxu0
    %v2135 = vadd.f32 %v2022, %v2134
    %v2136 = vpop.f32.mrf.mxu0
    %v2137 = vadd.f32 %v2024, %v2136
    %v2138 = vpop.f32.mrf.mxu0
    %v2139 = vadd.f32 %v2026, %v2138
    %2140 = vmatprep.mubr.bf16.mxu0 %v640
    %2141 = vmatmul.mubr.bf16.gmra.mxu0 %v639
    %v2142 = vpop.f32.mrf.mxu0
    %v2143 = vadd.f32 %v2030, %v2142
    %v2144 = vpop.f32.mrf.mxu0
    %v2145 = vadd.f32 %v2032, %v2144
    %v2146 = vpop.f32.mrf.mxu0
    %v2147 = vadd.f32 %v2034, %v2146
    %v2148 = vpop.f32.mrf.mxu0
    %v2149 = vadd.f32 %v2036, %v2148
    %2150 = vmatprep.mubr.bf16.mxu0 %v647
    %2151 = vmatmul.mubr.bf16.gmra.mxu0 %v646
    %v2152 = vpop.f32.mrf.mxu0
    %v2153 = vadd.f32 %v2040, %v2152
    %v2154 = vpop.f32.mrf.mxu0
    %v2155 = vadd.f32 %v2042, %v2154
    %v2156 = vpop.f32.mrf.mxu0
    %v2157 = vadd.f32 %v2044, %v2156
    %v2158 = vpop.f32.mrf.mxu0
    %v2159 = vadd.f32 %v2046, %v2158
    %2160 = vmatprep.mubr.bf16.mxu0 %v654
    %2161 = vmatmul.mubr.bf16.gmra.mxu0 %v653
    %v2162 = vpop.f32.mrf.mxu0
    %v2163 = vadd.f32 %v2050, %v2162
    %v2164 = vpop.f32.mrf.mxu0
    %v2165 = vadd.f32 %v2052, %v2164
    %v2166 = vpop.f32.mrf.mxu0
    %v2167 = vadd.f32 %v2054, %v2166
    %v2168 = vpop.f32.mrf.mxu0
    %v2169 = vadd.f32 %v2056, %v2168
    %2170 = vdwg.mxu0
    %2171 = vmatprep.subr.bf16.mxu0 %v1605
    %2172 = vmatpush1.bf16.msra.mxu0 %v1604
    %2173 = vmatprep.subr.bf16.mxu0 %v1601
    %2174 = vmatpush1.bf16.msra.mxu0 %v1600
    %2175 = vmatprep.subr.bf16.mxu0 %v1597
    %2176 = vmatpush1.bf16.msra.mxu0 %v1596
    %2177 = vmatprep.subr.bf16.mxu0 %v1593
    %2178 = vmatpush1.bf16.msra.mxu0 %v1592
    %2179 = vmatprep.subr.bf16.mxu0 %v1589
    %2180 = vmatpush1.bf16.msra.mxu0 %v1588
    %2181 = vmatprep.subr.bf16.mxu0 %v1585
    %2182 = vmatpush1.bf16.msra.mxu0 %v1584
    %2183 = vmatprep.subr.bf16.mxu0 %v1581
    %2184 = vmatpush1.bf16.msra.mxu0 %v1580
    %2185 = vmatprep.subr.bf16.mxu0 %v1577
    %2186 = vmatpush1.bf16.msra.mxu0 %v1576
    %2187 = vmatprep.subr.bf16.mxu0 0
    %2188 = vmatpush2.bf16.msra.mxu0 0
    %2189 = vmatprep.subr.bf16.mxu0 0
    %2190 = vmatpush2.bf16.msra.mxu0 0
    %2191 = vmatprep.subr.bf16.mxu0 0
    %2192 = vmatpush2.bf16.msra.mxu0 0
    %2193 = vmatprep.subr.bf16.mxu0 0
    %2194 = vmatpush2.bf16.msra.mxu0 0
    %2195 = vmatprep.subr.bf16.mxu0 0
    %2196 = vmatpush2.bf16.msra.mxu0 0
    %2197 = vmatprep.subr.bf16.mxu0 0
    %2198 = vmatpush2.bf16.msra.mxu0 0
    %2199 = vmatprep.subr.bf16.mxu0 0
    %2200 = vmatpush2.bf16.msra.mxu0 0
    %2201 = vmatprep.subr.bf16.mxu0 0
    %2202 = vmatpush2.bf16.msra.mxu0 0
    %2203 = vmatprep.mubr.bf16.mxu0 0
    %2204 = vmatmul.mubr.bf16.gmra.mxu0 %v606
    %v2205 = vpop.f32.mrf.mxu0
    %v2206 = vadd.f32 %v2093, %v2205
    %v2207 = vpop.f32.mrf.mxu0
    %v2208 = vadd.f32 %v2095, %v2207
    %v2209 = vpop.f32.mrf.mxu0
    %v2210 = vadd.f32 %v2097, %v2209
    %v2211 = vpop.f32.mrf.mxu0
    %v2212 = vadd.f32 %v2099, %v2211
    %2213 = vmatprep.mubr.bf16.mxu0 0
    %2214 = vmatmul.mubr.bf16.gmra.mxu0 %v613
    %v2215 = vpop.f32.mrf.mxu0
    %v2216 = vadd.f32 %v2103, %v2215
    %v2217 = vpop.f32.mrf.mxu0
    %v2218 = vadd.f32 %v2105, %v2217
    %v2219 = vpop.f32.mrf.mxu0
    %v2220 = vadd.f32 %v2107, %v2219
    %v2221 = vpop.f32.mrf.mxu0
    %v2222 = vadd.f32 %v2109, %v2221
    %2223 = vmatprep.mubr.bf16.mxu0 0
    %2224 = vmatmul.mubr.bf16.gmra.mxu0 %v620
    %v2225 = vpop.f32.mrf.mxu0
    %v2226 = vadd.f32 %v2113, %v2225
    %v2227 = vpop.f32.mrf.mxu0
    %v2228 = vadd.f32 %v2115, %v2227
    %v2229 = vpop.f32.mrf.mxu0
    %v2230 = vadd.f32 %v2117, %v2229
    %v2231 = vpop.f32.mrf.mxu0
    %v2232 = vadd.f32 %v2119, %v2231
    %2233 = vmatprep.mubr.bf16.mxu0 0
    %2234 = vmatmul.mubr.bf16.gmra.mxu0 %v627
    %v2235 = vpop.f32.mrf.mxu0
    %v2236 = vadd.f32 %v2123, %v2235
    %v2237 = vpop.f32.mrf.mxu0
    %v2238 = vadd.f32 %v2125, %v2237
    %v2239 = vpop.f32.mrf.mxu0
    %v2240 = vadd.f32 %v2127, %v2239
    %v2241 = vpop.f32.mrf.mxu0
    %v2242 = vadd.f32 %v2129, %v2241
    %2243 = vmatprep.mubr.bf16.mxu0 0
    %2244 = vmatmul.mubr.bf16.gmra.mxu0 %v634
    %v2245 = vpop.f32.mrf.mxu0
    %v2246 = vadd.f32 %v2133, %v2245
    %v2247 = vpop.f32.mrf.mxu0
    %v2248 = vadd.f32 %v2135, %v2247
    %v2249 = vpop.f32.mrf.mxu0
    %v2250 = vadd.f32 %v2137, %v2249
    %v2251 = vpop.f32.mrf.mxu0
    %v2252 = vadd.f32 %v2139, %v2251
    %2253 = vmatprep.mubr.bf16.mxu0 0
    %2254 = vmatmul.mubr.bf16.gmra.mxu0 %v641
    %v2255 = vpop.f32.mrf.mxu0
    %v2256 = vadd.f32 %v2143, %v2255
    %v2257 = vpop.f32.mrf.mxu0
    %v2258 = vadd.f32 %v2145, %v2257
    %v2259 = vpop.f32.mrf.mxu0
    %v2260 = vadd.f32 %v2147, %v2259
    %v2261 = vpop.f32.mrf.mxu0
    %v2262 = vadd.f32 %v2149, %v2261
    %2263 = vmatprep.mubr.bf16.mxu0 0
    %2264 = vmatmul.mubr.bf16.gmra.mxu0 %v648
    %v2265 = vpop.f32.mrf.mxu0
    %v2266 = vadd.f32 %v2153, %v2265
    %v2267 = vpop.f32.mrf.mxu0
    %v2268 = vadd.f32 %v2155, %v2267
    %v2269 = vpop.f32.mrf.mxu0
    %v2270 = vadd.f32 %v2157, %v2269
    %v2271 = vpop.f32.mrf.mxu0
    %v2272 = vadd.f32 %v2159, %v2271
    %2273 = vmatprep.mubr.bf16.mxu0 0
    %2274 = vmatmul.mubr.bf16.gmra.mxu0 %v655
    %v2275 = vpop.f32.mrf.mxu0
    %v2276 = vadd.f32 %v2163, %v2275
    %v2277 = vpop.f32.mrf.mxu0
    %v2278 = vadd.f32 %v2165, %v2277
    %v2279 = vpop.f32.mrf.mxu0
    %v2280 = vadd.f32 %v2167, %v2279
    %v2281 = vpop.f32.mrf.mxu0
    %v2282 = vadd.f32 %v2169, %v2281
    %2283 = vdwg.mxu0
    %2284 = vmatprep.subr.bf16.mxu0 %v1415
    %2285 = vmatpush1.bf16.msra.mxu0 %v1414
    %2286 = vmatprep.subr.bf16.mxu0 %v1411
    %2287 = vmatpush1.bf16.msra.mxu0 %v1410
    %2288 = vmatprep.subr.bf16.mxu0 %v1407
    %2289 = vmatpush1.bf16.msra.mxu0 %v1406
    %2290 = vmatprep.subr.bf16.mxu0 %v1403
    %2291 = vmatpush1.bf16.msra.mxu0 %v1402
    %2292 = vmatprep.subr.bf16.mxu0 %v1399
    %2293 = vmatpush1.bf16.msra.mxu0 %v1398
    %2294 = vmatprep.subr.bf16.mxu0 %v1395
    %2295 = vmatpush1.bf16.msra.mxu0 %v1394
    %2296 = vmatprep.subr.bf16.mxu0 %v1391
    %2297 = vmatpush1.bf16.msra.mxu0 %v1390
    %2298 = vmatprep.subr.bf16.mxu0 %v1387
    %2299 = vmatpush1.bf16.msra.mxu0 %v1386
    %2300 = vmatprep.subr.bf16.mxu0 %v1447
    %2301 = vmatpush2.bf16.msra.mxu0 %v1446
    %2302 = vmatprep.subr.bf16.mxu0 %v1443
    %2303 = vmatpush2.bf16.msra.mxu0 %v1442
    %2304 = vmatprep.subr.bf16.mxu0 %v1439
    %2305 = vmatpush2.bf16.msra.mxu0 %v1438
    %2306 = vmatprep.subr.bf16.mxu0 %v1435
    %2307 = vmatpush2.bf16.msra.mxu0 %v1434
    %2308 = vmatprep.subr.bf16.mxu0 %v1431
    %2309 = vmatpush2.bf16.msra.mxu0 %v1430
    %2310 = vmatprep.subr.bf16.mxu0 %v1427
    %2311 = vmatpush2.bf16.msra.mxu0 %v1426
    %2312 = vmatprep.subr.bf16.mxu0 %v1423
    %2313 = vmatpush2.bf16.msra.mxu0 %v1422
    %2314 = vmatprep.subr.bf16.mxu0 %v1419
    %2315 = vmatpush2.bf16.msra.mxu0 %v1418
    %2316 = vmatprep.mubr.bf16.mxu0 %v601
    %2317 = vmatmul.mubr.bf16.gmra.mxu0 %v600
    %v2318 = vpop.f32.mrf.mxu0
    %v2319 = vadd.f32 %v415, %v2318
    %v2320 = vpop.f32.mrf.mxu0
    %v2321 = vadd.f32 %v419, %v2320
    %v2322 = vpop.f32.mrf.mxu0
    %v2323 = vadd.f32 %v415, %v2322
    %v2324 = vpop.f32.mrf.mxu0
    %v2325 = vadd.f32 %v419, %v2324
    %2326 = vmatprep.mubr.bf16.mxu0 %v608
    %2327 = vmatmul.mubr.bf16.gmra.mxu0 %v607
    %v2328 = vpop.f32.mrf.mxu0
    %v2329 = vadd.f32 %v415, %v2328
    %v2330 = vpop.f32.mrf.mxu0
    %v2331 = vadd.f32 %v419, %v2330
    %v2332 = vpop.f32.mrf.mxu0
    %v2333 = vadd.f32 %v415, %v2332
    %v2334 = vpop.f32.mrf.mxu0
    %v2335 = vadd.f32 %v419, %v2334
    %2336 = vmatprep.mubr.bf16.mxu0 %v615
    %2337 = vmatmul.mubr.bf16.gmra.mxu0 %v614
    %v2338 = vpop.f32.mrf.mxu0
    %v2339 = vadd.f32 %v415, %v2338
    %v2340 = vpop.f32.mrf.mxu0
    %v2341 = vadd.f32 %v419, %v2340
    %v2342 = vpop.f32.mrf.mxu0
    %v2343 = vadd.f32 %v415, %v2342
    %v2344 = vpop.f32.mrf.mxu0
    %v2345 = vadd.f32 %v419, %v2344
    %2346 = vmatprep.mubr.bf16.mxu0 %v622
    %2347 = vmatmul.mubr.bf16.gmra.mxu0 %v621
    %v2348 = vpop.f32.mrf.mxu0
    %v2349 = vadd.f32 %v415, %v2348
    %v2350 = vpop.f32.mrf.mxu0
    %v2351 = vadd.f32 %v419, %v2350
    %v2352 = vpop.f32.mrf.mxu0
    %v2353 = vadd.f32 %v415, %v2352
    %v2354 = vpop.f32.mrf.mxu0
    %v2355 = vadd.f32 %v419, %v2354
    %2356 = vmatprep.mubr.bf16.mxu0 %v629
    %2357 = vmatmul.mubr.bf16.gmra.mxu0 %v628
    %v2358 = vpop.f32.mrf.mxu0
    %v2359 = vadd.f32 %v415, %v2358
    %v2360 = vpop.f32.mrf.mxu0
    %v2361 = vadd.f32 %v419, %v2360
    %v2362 = vpop.f32.mrf.mxu0
    %v2363 = vadd.f32 %v415, %v2362
    %v2364 = vpop.f32.mrf.mxu0
    %v2365 = vadd.f32 %v419, %v2364
    %2366 = vmatprep.mubr.bf16.mxu0 %v636
    %2367 = vmatmul.mubr.bf16.gmra.mxu0 %v635
    %v2368 = vpop.f32.mrf.mxu0
    %v2369 = vadd.f32 %v415, %v2368
    %v2370 = vpop.f32.mrf.mxu0
    %v2371 = vadd.f32 %v419, %v2370
    %v2372 = vpop.f32.mrf.mxu0
    %v2373 = vadd.f32 %v415, %v2372
    %v2374 = vpop.f32.mrf.mxu0
    %v2375 = vadd.f32 %v419, %v2374
    %2376 = vmatprep.mubr.bf16.mxu0 %v643
    %2377 = vmatmul.mubr.bf16.gmra.mxu0 %v642
    %v2378 = vpop.f32.mrf.mxu0
    %v2379 = vadd.f32 %v415, %v2378
    %v2380 = vpop.f32.mrf.mxu0
    %v2381 = vadd.f32 %v419, %v2380
    %v2382 = vpop.f32.mrf.mxu0
    %v2383 = vadd.f32 %v415, %v2382
    %v2384 = vpop.f32.mrf.mxu0
    %v2385 = vadd.f32 %v419, %v2384
    %2386 = vmatprep.mubr.bf16.mxu0 %v650
    %2387 = vmatmul.mubr.bf16.gmra.mxu0 %v649
    %v2388 = vpop.f32.mrf.mxu0
    %v2389 = vadd.f32 %v415, %v2388
    %v2390 = vpop.f32.mrf.mxu0
    %v2391 = vadd.f32 %v419, %v2390
    %v2392 = vpop.f32.mrf.mxu0
    %v2393 = vadd.f32 %v415, %v2392
    %v2394 = vpop.f32.mrf.mxu0
    %v2395 = vadd.f32 %v419, %v2394
    %2396 = vdwg.mxu0
    %2397 = vmatprep.subr.bf16.mxu0 %v1479
    %2398 = vmatpush1.bf16.msra.mxu0 %v1478
    %2399 = vmatprep.subr.bf16.mxu0 %v1475
    %2400 = vmatpush1.bf16.msra.mxu0 %v1474
    %2401 = vmatprep.subr.bf16.mxu0 %v1471
    %2402 = vmatpush1.bf16.msra.mxu0 %v1470
    %2403 = vmatprep.subr.bf16.mxu0 %v1467
    %2404 = vmatpush1.bf16.msra.mxu0 %v1466
    %2405 = vmatprep.subr.bf16.mxu0 %v1463
    %2406 = vmatpush1.bf16.msra.mxu0 %v1462
    %2407 = vmatprep.subr.bf16.mxu0 %v1459
    %2408 = vmatpush1.bf16.msra.mxu0 %v1458
    %2409 = vmatprep.subr.bf16.mxu0 %v1455
    %2410 = vmatpush1.bf16.msra.mxu0 %v1454
    %2411 = vmatprep.subr.bf16.mxu0 %v1451
    %2412 = vmatpush1.bf16.msra.mxu0 %v1450
    %2413 = vmatprep.subr.bf16.mxu0 %v1511
    %2414 = vmatpush2.bf16.msra.mxu0 %v1510
    %2415 = vmatprep.subr.bf16.mxu0 %v1507
    %2416 = vmatpush2.bf16.msra.mxu0 %v1506
    %2417 = vmatprep.subr.bf16.mxu0 %v1503
    %2418 = vmatpush2.bf16.msra.mxu0 %v1502
    %2419 = vmatprep.subr.bf16.mxu0 %v1499
    %2420 = vmatpush2.bf16.msra.mxu0 %v1498
    %2421 = vmatprep.subr.bf16.mxu0 %v1495
    %2422 = vmatpush2.bf16.msra.mxu0 %v1494
    %2423 = vmatprep.subr.bf16.mxu0 %v1491
    %2424 = vmatpush2.bf16.msra.mxu0 %v1490
    %2425 = vmatprep.subr.bf16.mxu0 %v1487
    %2426 = vmatpush2.bf16.msra.mxu0 %v1486
    %2427 = vmatprep.subr.bf16.mxu0 %v1483
    %2428 = vmatpush2.bf16.msra.mxu0 %v1482
    %2429 = vmatprep.mubr.bf16.mxu0 %v603
    %2430 = vmatmul.mubr.bf16.gmra.mxu0 %v602
    %v2431 = vpop.f32.mrf.mxu0
    %v2432 = vadd.f32 %v2319, %v2431
    %v2433 = vpop.f32.mrf.mxu0
    %v2434 = vadd.f32 %v2321, %v2433
    %v2435 = vpop.f32.mrf.mxu0
    %v2436 = vadd.f32 %v2323, %v2435
    %v2437 = vpop.f32.mrf.mxu0
    %v2438 = vadd.f32 %v2325, %v2437
    %2439 = vmatprep.mubr.bf16.mxu0 %v610
    %2440 = vmatmul.mubr.bf16.gmra.mxu0 %v609
    %v2441 = vpop.f32.mrf.mxu0
    %v2442 = vadd.f32 %v2329, %v2441
    %v2443 = vpop.f32.mrf.mxu0
    %v2444 = vadd.f32 %v2331, %v2443
    %v2445 = vpop.f32.mrf.mxu0
    %v2446 = vadd.f32 %v2333, %v2445
    %v2447 = vpop.f32.mrf.mxu0
    %v2448 = vadd.f32 %v2335, %v2447
    %2449 = vmatprep.mubr.bf16.mxu0 %v617
    %2450 = vmatmul.mubr.bf16.gmra.mxu0 %v616
    %v2451 = vpop.f32.mrf.mxu0
    %v2452 = vadd.f32 %v2339, %v2451
    %v2453 = vpop.f32.mrf.mxu0
    %v2454 = vadd.f32 %v2341, %v2453
    %v2455 = vpop.f32.mrf.mxu0
    %v2456 = vadd.f32 %v2343, %v2455
    %v2457 = vpop.f32.mrf.mxu0
    %v2458 = vadd.f32 %v2345, %v2457
    %2459 = vmatprep.mubr.bf16.mxu0 %v624
    %2460 = vmatmul.mubr.bf16.gmra.mxu0 %v623
    %v2461 = vpop.f32.mrf.mxu0
    %v2462 = vadd.f32 %v2349, %v2461
    %v2463 = vpop.f32.mrf.mxu0
    %v2464 = vadd.f32 %v2351, %v2463
    %v2465 = vpop.f32.mrf.mxu0
    %v2466 = vadd.f32 %v2353, %v2465
    %v2467 = vpop.f32.mrf.mxu0
    %v2468 = vadd.f32 %v2355, %v2467
    %2469 = vmatprep.mubr.bf16.mxu0 %v631
    %2470 = vmatmul.mubr.bf16.gmra.mxu0 %v630
    %v2471 = vpop.f32.mrf.mxu0
    %v2472 = vadd.f32 %v2359, %v2471
    %v2473 = vpop.f32.mrf.mxu0
    %v2474 = vadd.f32 %v2361, %v2473
    %v2475 = vpop.f32.mrf.mxu0
    %v2476 = vadd.f32 %v2363, %v2475
    %v2477 = vpop.f32.mrf.mxu0
    %v2478 = vadd.f32 %v2365, %v2477
    %2479 = vmatprep.mubr.bf16.mxu0 %v638
    %2480 = vmatmul.mubr.bf16.gmra.mxu0 %v637
    %v2481 = vpop.f32.mrf.mxu0
    %v2482 = vadd.f32 %v2369, %v2481
    %v2483 = vpop.f32.mrf.mxu0
    %v2484 = vadd.f32 %v2371, %v2483
    %v2485 = vpop.f32.mrf.mxu0
    %v2486 = vadd.f32 %v2373, %v2485
    %v2487 = vpop.f32.mrf.mxu0
    %v2488 = vadd.f32 %v2375, %v2487
    %2489 = vmatprep.mubr.bf16.mxu0 %v645
    %2490 = vmatmul.mubr.bf16.gmra.mxu0 %v644
    %v2491 = vpop.f32.mrf.mxu0
    %v2492 = vadd.f32 %v2379, %v2491
    %v2493 = vpop.f32.mrf.mxu0
    %v2494 = vadd.f32 %v2381, %v2493
    %v2495 = vpop.f32.mrf.mxu0
    %v2496 = vadd.f32 %v2383, %v2495
    %v2497 = vpop.f32.mrf.mxu0
    %v2498 = vadd.f32 %v2385, %v2497
    %2499 = vmatprep.mubr.bf16.mxu0 %v652
    %2500 = vmatmul.mubr.bf16.gmra.mxu0 %v651
    %v2501 = vpop.f32.mrf.mxu0
    %v2502 = vadd.f32 %v2389, %v2501
    %v2503 = vpop.f32.mrf.mxu0
    %v2504 = vadd.f32 %v2391, %v2503
    %v2505 = vpop.f32.mrf.mxu0
    %v2506 = vadd.f32 %v2393, %v2505
    %v2507 = vpop.f32.mrf.mxu0
    %v2508 = vadd.f32 %v2395, %v2507
    %2509 = vdwg.mxu0
    %2510 = vmatprep.subr.bf16.mxu0 %v1543
    %2511 = vmatpush1.bf16.msra.mxu0 %v1542
    %2512 = vmatprep.subr.bf16.mxu0 %v1539
    %2513 = vmatpush1.bf16.msra.mxu0 %v1538
    %2514 = vmatprep.subr.bf16.mxu0 %v1535
    %2515 = vmatpush1.bf16.msra.mxu0 %v1534
    %2516 = vmatprep.subr.bf16.mxu0 %v1531
    %2517 = vmatpush1.bf16.msra.mxu0 %v1530
    %2518 = vmatprep.subr.bf16.mxu0 %v1527
    %2519 = vmatpush1.bf16.msra.mxu0 %v1526
    %2520 = vmatprep.subr.bf16.mxu0 %v1523
    %2521 = vmatpush1.bf16.msra.mxu0 %v1522
    %2522 = vmatprep.subr.bf16.mxu0 %v1519
    %2523 = vmatpush1.bf16.msra.mxu0 %v1518
    %2524 = vmatprep.subr.bf16.mxu0 %v1515
    %2525 = vmatpush1.bf16.msra.mxu0 %v1514
    %2526 = vmatprep.subr.bf16.mxu0 %v1575
    %2527 = vmatpush2.bf16.msra.mxu0 %v1574
    %2528 = vmatprep.subr.bf16.mxu0 %v1571
    %2529 = vmatpush2.bf16.msra.mxu0 %v1570
    %2530 = vmatprep.subr.bf16.mxu0 %v1567
    %2531 = vmatpush2.bf16.msra.mxu0 %v1566
    %2532 = vmatprep.subr.bf16.mxu0 %v1563
    %2533 = vmatpush2.bf16.msra.mxu0 %v1562
    %2534 = vmatprep.subr.bf16.mxu0 %v1559
    %2535 = vmatpush2.bf16.msra.mxu0 %v1558
    %2536 = vmatprep.subr.bf16.mxu0 %v1555
    %2537 = vmatpush2.bf16.msra.mxu0 %v1554
    %2538 = vmatprep.subr.bf16.mxu0 %v1551
    %2539 = vmatpush2.bf16.msra.mxu0 %v1550
    %2540 = vmatprep.subr.bf16.mxu0 %v1547
    %2541 = vmatpush2.bf16.msra.mxu0 %v1546
    %2542 = vmatprep.mubr.bf16.mxu0 %v605
    %2543 = vmatmul.mubr.bf16.gmra.mxu0 %v604
    %v2544 = vpop.f32.mrf.mxu0
    %v2545 = vadd.f32 %v2432, %v2544
    %v2546 = vpop.f32.mrf.mxu0
    %v2547 = vadd.f32 %v2434, %v2546
    %v2548 = vpop.f32.mrf.mxu0
    %v2549 = vadd.f32 %v2436, %v2548
    %v2550 = vpop.f32.mrf.mxu0
    %v2551 = vadd.f32 %v2438, %v2550
    %2552 = vmatprep.mubr.bf16.mxu0 %v612
    %2553 = vmatmul.mubr.bf16.gmra.mxu0 %v611
    %v2554 = vpop.f32.mrf.mxu0
    %v2555 = vadd.f32 %v2442, %v2554
    %v2556 = vpop.f32.mrf.mxu0
    %v2557 = vadd.f32 %v2444, %v2556
    %v2558 = vpop.f32.mrf.mxu0
    %v2559 = vadd.f32 %v2446, %v2558
    %v2560 = vpop.f32.mrf.mxu0
    %v2561 = vadd.f32 %v2448, %v2560
    %2562 = vmatprep.mubr.bf16.mxu0 %v619
    %2563 = vmatmul.mubr.bf16.gmra.mxu0 %v618
    %v2564 = vpop.f32.mrf.mxu0
    %v2565 = vadd.f32 %v2452, %v2564
    %v2566 = vpop.f32.mrf.mxu0
    %v2567 = vadd.f32 %v2454, %v2566
    %v2568 = vpop.f32.mrf.mxu0
    %v2569 = vadd.f32 %v2456, %v2568
    %v2570 = vpop.f32.mrf.mxu0
    %v2571 = vadd.f32 %v2458, %v2570
    %2572 = vmatprep.mubr.bf16.mxu0 %v626
    %2573 = vmatmul.mubr.bf16.gmra.mxu0 %v625
    %v2574 = vpop.f32.mrf.mxu0
    %v2575 = vadd.f32 %v2462, %v2574
    %v2576 = vpop.f32.mrf.mxu0
    %v2577 = vadd.f32 %v2464, %v2576
    %v2578 = vpop.f32.mrf.mxu0
    %v2579 = vadd.f32 %v2466, %v2578
    %v2580 = vpop.f32.mrf.mxu0
    %v2581 = vadd.f32 %v2468, %v2580
    %2582 = vmatprep.mubr.bf16.mxu0 %v633
    %2583 = vmatmul.mubr.bf16.gmra.mxu0 %v632
    %v2584 = vpop.f32.mrf.mxu0
    %v2585 = vadd.f32 %v2472, %v2584
    %v2586 = vpop.f32.mrf.mxu0
    %v2587 = vadd.f32 %v2474, %v2586
    %v2588 = vpop.f32.mrf.mxu0
    %v2589 = vadd.f32 %v2476, %v2588
    %v2590 = vpop.f32.mrf.mxu0
    %v2591 = vadd.f32 %v2478, %v2590
    %2592 = vmatprep.mubr.bf16.mxu0 %v640
    %2593 = vmatmul.mubr.bf16.gmra.mxu0 %v639
    %v2594 = vpop.f32.mrf.mxu0
    %v2595 = vadd.f32 %v2482, %v2594
    %v2596 = vpop.f32.mrf.mxu0
    %v2597 = vadd.f32 %v2484, %v2596
    %v2598 = vpop.f32.mrf.mxu0
    %v2599 = vadd.f32 %v2486, %v2598
    %v2600 = vpop.f32.mrf.mxu0
    %v2601 = vadd.f32 %v2488, %v2600
    %2602 = vmatprep.mubr.bf16.mxu0 %v647
    %2603 = vmatmul.mubr.bf16.gmra.mxu0 %v646
    %v2604 = vpop.f32.mrf.mxu0
    %v2605 = vadd.f32 %v2492, %v2604
    %v2606 = vpop.f32.mrf.mxu0
    %v2607 = vadd.f32 %v2494, %v2606
    %v2608 = vpop.f32.mrf.mxu0
    %v2609 = vadd.f32 %v2496, %v2608
    %v2610 = vpop.f32.mrf.mxu0
    %v2611 = vadd.f32 %v2498, %v2610
    %2612 = vmatprep.mubr.bf16.mxu0 %v654
    %2613 = vmatmul.mubr.bf16.gmra.mxu0 %v653
    %v2614 = vpop.f32.mrf.mxu0
    %v2615 = vadd.f32 %v2502, %v2614
    %v2616 = vpop.f32.mrf.mxu0
    %v2617 = vadd.f32 %v2504, %v2616
    %v2618 = vpop.f32.mrf.mxu0
    %v2619 = vadd.f32 %v2506, %v2618
    %v2620 = vpop.f32.mrf.mxu0
    %v2621 = vadd.f32 %v2508, %v2620
    %2622 = vdwg.mxu0
    %2623 = vmatprep.subr.bf16.mxu0 %v1607
    %2624 = vmatpush1.bf16.msra.mxu0 %v1606
    %2625 = vmatprep.subr.bf16.mxu0 %v1603
    %2626 = vmatpush1.bf16.msra.mxu0 %v1602
    %2627 = vmatprep.subr.bf16.mxu0 %v1599
    %2628 = vmatpush1.bf16.msra.mxu0 %v1598
    %2629 = vmatprep.subr.bf16.mxu0 %v1595
    %2630 = vmatpush1.bf16.msra.mxu0 %v1594
    %2631 = vmatprep.subr.bf16.mxu0 %v1591
    %2632 = vmatpush1.bf16.msra.mxu0 %v1590
    %2633 = vmatprep.subr.bf16.mxu0 %v1587
    %2634 = vmatpush1.bf16.msra.mxu0 %v1586
    %2635 = vmatprep.subr.bf16.mxu0 %v1583
    %2636 = vmatpush1.bf16.msra.mxu0 %v1582
    %2637 = vmatprep.subr.bf16.mxu0 %v1579
    %2638 = vmatpush1.bf16.msra.mxu0 %v1578
    %2639 = vmatprep.subr.bf16.mxu0 0
    %2640 = vmatpush2.bf16.msra.mxu0 0
    %2641 = vmatprep.subr.bf16.mxu0 0
    %2642 = vmatpush2.bf16.msra.mxu0 0
    %2643 = vmatprep.subr.bf16.mxu0 0
    %2644 = vmatpush2.bf16.msra.mxu0 0
    %2645 = vmatprep.subr.bf16.mxu0 0
    %2646 = vmatpush2.bf16.msra.mxu0 0
    %2647 = vmatprep.subr.bf16.mxu0 0
    %2648 = vmatpush2.bf16.msra.mxu0 0
    %2649 = vmatprep.subr.bf16.mxu0 0
    %2650 = vmatpush2.bf16.msra.mxu0 0
    %2651 = vmatprep.subr.bf16.mxu0 0
    %2652 = vmatpush2.bf16.msra.mxu0 0
    %2653 = vmatprep.subr.bf16.mxu0 0
    %2654 = vmatpush2.bf16.msra.mxu0 0
    %2655 = vmatprep.mubr.bf16.mxu0 0
    %2656 = vmatmul.mubr.bf16.gmra.mxu0 %v606
    %v2657 = vpop.f32.mrf.mxu0
    %v2658 = vadd.f32 %v2545, %v2657
    %v2659 = vpop.f32.mrf.mxu0
    %v2660 = vadd.f32 %v2547, %v2659
    %v2661 = vpop.f32.mrf.mxu0
    %v2662 = vadd.f32 %v2549, %v2661
    %v2663 = vpop.f32.mrf.mxu0
    %v2664 = vadd.f32 %v2551, %v2663
    %2665 = vmatprep.mubr.bf16.mxu0 0
    %2666 = vmatmul.mubr.bf16.gmra.mxu0 %v613
    %v2667 = vpop.f32.mrf.mxu0
    %v2668 = vadd.f32 %v2555, %v2667
    %v2669 = vpop.f32.mrf.mxu0
    %v2670 = vadd.f32 %v2557, %v2669
    %v2671 = vpop.f32.mrf.mxu0
    %v2672 = vadd.f32 %v2559, %v2671
    %v2673 = vpop.f32.mrf.mxu0
    %v2674 = vadd.f32 %v2561, %v2673
    %2675 = vmatprep.mubr.bf16.mxu0 0
    %2676 = vmatmul.mubr.bf16.gmra.mxu0 %v620
    %v2677 = vpop.f32.mrf.mxu0
    %v2678 = vadd.f32 %v2565, %v2677
    %v2679 = vpop.f32.mrf.mxu0
    %v2680 = vadd.f32 %v2567, %v2679
    %v2681 = vpop.f32.mrf.mxu0
    %v2682 = vadd.f32 %v2569, %v2681
    %v2683 = vpop.f32.mrf.mxu0
    %v2684 = vadd.f32 %v2571, %v2683
    %2685 = vmatprep.mubr.bf16.mxu0 0
    %2686 = vmatmul.mubr.bf16.gmra.mxu0 %v627
    %v2687 = vpop.f32.mrf.mxu0
    %v2688 = vadd.f32 %v2575, %v2687
    %v2689 = vpop.f32.mrf.mxu0
    %v2690 = vadd.f32 %v2577, %v2689
    %v2691 = vpop.f32.mrf.mxu0
    %v2692 = vadd.f32 %v2579, %v2691
    %v2693 = vpop.f32.mrf.mxu0
    %v2694 = vadd.f32 %v2581, %v2693
    %2695 = vmatprep.mubr.bf16.mxu0 0
    %2696 = vmatmul.mubr.bf16.gmra.mxu0 %v634
    %v2697 = vpop.f32.mrf.mxu0
    %v2698 = vadd.f32 %v2585, %v2697
    %v2699 = vpop.f32.mrf.mxu0
    %v2700 = vadd.f32 %v2587, %v2699
    %v2701 = vpop.f32.mrf.mxu0
    %v2702 = vadd.f32 %v2589, %v2701
    %v2703 = vpop.f32.mrf.mxu0
    %v2704 = vadd.f32 %v2591, %v2703
    %2705 = vmatprep.mubr.bf16.mxu0 0
    %2706 = vmatmul.mubr.bf16.gmra.mxu0 %v641
    %v2707 = vpop.f32.mrf.mxu0
    %v2708 = vadd.f32 %v2595, %v2707
    %v2709 = vpop.f32.mrf.mxu0
    %v2710 = vadd.f32 %v2597, %v2709
    %v2711 = vpop.f32.mrf.mxu0
    %v2712 = vadd.f32 %v2599, %v2711
    %v2713 = vpop.f32.mrf.mxu0
    %v2714 = vadd.f32 %v2601, %v2713
    %2715 = vmatprep.mubr.bf16.mxu0 0
    %2716 = vmatmul.mubr.bf16.gmra.mxu0 %v648
    %v2717 = vpop.f32.mrf.mxu0
    %v2718 = vadd.f32 %v2605, %v2717
    %v2719 = vpop.f32.mrf.mxu0
    %v2720 = vadd.f32 %v2607, %v2719
    %v2721 = vpop.f32.mrf.mxu0
    %v2722 = vadd.f32 %v2609, %v2721
    %v2723 = vpop.f32.mrf.mxu0
    %v2724 = vadd.f32 %v2611, %v2723
    %2725 = vmatprep.mubr.bf16.mxu0 0
    %2726 = vmatmul.mubr.bf16.gmra.mxu0 %v655
    %v2727 = vpop.f32.mrf.mxu0
    %v2728 = vadd.f32 %v2615, %v2727
    %v2729 = vpop.f32.mrf.mxu0
    %v2730 = vadd.f32 %v2617, %v2729
    %v2731 = vpop.f32.mrf.mxu0
    %v2732 = vadd.f32 %v2619, %v2731
    %v2733 = vpop.f32.mrf.mxu0
    %v2734 = vadd.f32 %v2621, %v2733
    %2735 = vdwg.mxu0
    %vm2736 = vcmp.ge.f32.partialorder %v2206, 0.0
    %vm2737 = vcmp.ge.f32.partialorder %v2208, 0.0
    %vm2738 = vcmp.ge.f32.partialorder %v2658, 0.0
    %vm2739 = vcmp.ge.f32.partialorder %v2660, 0.0
    %vm2740 = vcmp.ge.f32.partialorder %v2210, 0.0
    %vm2741 = vcmp.ge.f32.partialorder %v2212, 0.0
    %vm2742 = vcmp.ge.f32.partialorder %v2662, 0.0
    %vm2743 = vcmp.ge.f32.partialorder %v2664, 0.0
    %vm2744 = vcmp.ge.f32.partialorder %v2216, 0.0
    %vm2745 = vcmp.ge.f32.partialorder %v2218, 0.0
    %vm2746 = vcmp.ge.f32.partialorder %v2668, 0.0
    %vm2747 = vcmp.ge.f32.partialorder %v2670, 0.0
    %vm2748 = vcmp.ge.f32.partialorder %v2220, 0.0
    %vm2749 = vcmp.ge.f32.partialorder %v2222, 0.0
    %vm2750 = vcmp.ge.f32.partialorder %v2672, 0.0
    %vm2751 = vcmp.ge.f32.partialorder %v2674, 0.0
    %vm2752 = vcmp.ge.f32.partialorder %v2226, 0.0
    %vm2753 = vcmp.ge.f32.partialorder %v2228, 0.0
    %vm2754 = vcmp.ge.f32.partialorder %v2678, 0.0
    %vm2755 = vcmp.ge.f32.partialorder %v2680, 0.0
    %vm2756 = vcmp.ge.f32.partialorder %v2230, 0.0
    %vm2757 = vcmp.ge.f32.partialorder %v2232, 0.0
    %vm2758 = vcmp.ge.f32.partialorder %v2682, 0.0
    %vm2759 = vcmp.ge.f32.partialorder %v2684, 0.0
    %vm2760 = vcmp.ge.f32.partialorder %v2236, 0.0
    %vm2761 = vcmp.ge.f32.partialorder %v2238, 0.0
    %vm2762 = vcmp.ge.f32.partialorder %v2688, 0.0
    %vm2763 = vcmp.ge.f32.partialorder %v2690, 0.0
    %vm2764 = vcmp.ge.f32.partialorder %v2240, 0.0
    %vm2765 = vcmp.ge.f32.partialorder %v2242, 0.0
    %vm2766 = vcmp.ge.f32.partialorder %v2692, 0.0
    %vm2767 = vcmp.ge.f32.partialorder %v2694, 0.0
    %vm2768 = vcmp.ge.f32.partialorder %v2246, 0.0
    %vm2769 = vcmp.ge.f32.partialorder %v2248, 0.0
    %vm2770 = vcmp.ge.f32.partialorder %v2698, 0.0
    %vm2771 = vcmp.ge.f32.partialorder %v2700, 0.0
    %vm2772 = vcmp.ge.f32.partialorder %v2250, 0.0
    %vm2773 = vcmp.ge.f32.partialorder %v2252, 0.0
    %vm2774 = vcmp.ge.f32.partialorder %v2702, 0.0
    %vm2775 = vcmp.ge.f32.partialorder %v2704, 0.0
    %vm2776 = vcmp.ge.f32.partialorder %v2256, 0.0
    %vm2777 = vcmp.ge.f32.partialorder %v2258, 0.0
    %vm2778 = vcmp.ge.f32.partialorder %v2708, 0.0
    %vm2779 = vcmp.ge.f32.partialorder %v2710, 0.0
    %vm2780 = vcmp.ge.f32.partialorder %v2260, 0.0
    %vm2781 = vcmp.ge.f32.partialorder %v2262, 0.0
    %vm2782 = vcmp.ge.f32.partialorder %v2712, 0.0
    %vm2783 = vcmp.ge.f32.partialorder %v2714, 0.0
    %vm2784 = vcmp.ge.f32.partialorder %v2266, 0.0
    %vm2785 = vcmp.ge.f32.partialorder %v2268, 0.0
    %vm2786 = vcmp.ge.f32.partialorder %v2718, 0.0
    %vm2787 = vcmp.ge.f32.partialorder %v2720, 0.0
    %vm2788 = vcmp.ge.f32.partialorder %v2270, 0.0
    %vm2789 = vcmp.ge.f32.partialorder %v2272, 0.0
    %vm2790 = vcmp.ge.f32.partialorder %v2722, 0.0
    %vm2791 = vcmp.ge.f32.partialorder %v2724, 0.0
    %vm2792 = vcmp.ge.f32.partialorder %v2276, 0.0
    %vm2793 = vcmp.ge.f32.partialorder %v2278, 0.0
    %vm2794 = vcmp.ge.f32.partialorder %v2728, 0.0
    %vm2795 = vcmp.ge.f32.partialorder %v2730, 0.0
    %vm2796 = vcmp.ge.f32.partialorder %v2280, 0.0
    %vm2797 = vcmp.ge.f32.partialorder %v2282, 0.0
    %vm2798 = vcmp.ge.f32.partialorder %v2732, 0.0
    %vm2799 = vcmp.ge.f32.partialorder %v2734, 0.0
    %v2800 = vmul.f32 %v2206, 0.2
    %v2801 = vmul.f32 %v2208, 0.2
    %v2802 = vmul.f32 %v2658, 0.2
    %v2803 = vmul.f32 %v2660, 0.2
    %v2804 = vmul.f32 %v2210, 0.2
    %v2805 = vmul.f32 %v2212, 0.2
    %v2806 = vmul.f32 %v2662, 0.2
    %v2807 = vmul.f32 %v2664, 0.2
    %v2808 = vmul.f32 %v2216, 0.2
    %v2809 = vmul.f32 %v2218, 0.2
    %v2810 = vmul.f32 %v2668, 0.2
    %v2811 = vmul.f32 %v2670, 0.2
    %v2812 = vmul.f32 %v2220, 0.2
    %v2813 = vmul.f32 %v2222, 0.2
    %v2814 = vmul.f32 %v2672, 0.2
    %v2815 = vmul.f32 %v2674, 0.2
    %v2816 = vmul.f32 %v2226, 0.2
    %v2817 = vmul.f32 %v2228, 0.2
    %v2818 = vmul.f32 %v2678, 0.2
    %v2819 = vmul.f32 %v2680, 0.2
    %v2820 = vmul.f32 %v2230, 0.2
    %v2821 = vmul.f32 %v2232, 0.2
    %v2822 = vmul.f32 %v2682, 0.2
    %v2823 = vmul.f32 %v2684, 0.2
    %v2824 = vmul.f32 %v2236, 0.2
    %v2825 = vmul.f32 %v2238, 0.2
    %v2826 = vmul.f32 %v2688, 0.2
    %v2827 = vmul.f32 %v2690, 0.2
    %v2828 = vmul.f32 %v2240, 0.2
    %v2829 = vmul.f32 %v2242, 0.2
    %v2830 = vmul.f32 %v2692, 0.2
    %v2831 = vmul.f32 %v2694, 0.2
    %v2832 = vmul.f32 %v2246, 0.2
    %v2833 = vmul.f32 %v2248, 0.2
    %v2834 = vmul.f32 %v2698, 0.2
    %v2835 = vmul.f32 %v2700, 0.2
    %v2836 = vmul.f32 %v2250, 0.2
    %v2837 = vmul.f32 %v2252, 0.2
    %v2838 = vmul.f32 %v2702, 0.2
    %v2839 = vmul.f32 %v2704, 0.2
    %v2840 = vmul.f32 %v2256, 0.2
    %v2841 = vmul.f32 %v2258, 0.2
    %v2842 = vmul.f32 %v2708, 0.2
    %v2843 = vmul.f32 %v2710, 0.2
    %v2844 = vmul.f32 %v2260, 0.2
    %v2845 = vmul.f32 %v2262, 0.2
    %v2846 = vmul.f32 %v2712, 0.2
    %v2847 = vmul.f32 %v2714, 0.2
    %v2848 = vmul.f32 %v2266, 0.2
    %v2849 = vmul.f32 %v2268, 0.2
    %v2850 = vmul.f32 %v2718, 0.2
    %v2851 = vmul.f32 %v2720, 0.2
    %v2852 = vmul.f32 %v2270, 0.2
    %v2853 = vmul.f32 %v2272, 0.2
    %v2854 = vmul.f32 %v2722, 0.2
    %v2855 = vmul.f32 %v2724, 0.2
    %v2856 = vmul.f32 %v2276, 0.2
    %v2857 = vmul.f32 %v2278, 0.2
    %v2858 = vmul.f32 %v2728, 0.2
    %v2859 = vmul.f32 %v2730, 0.2
    %v2860 = vmul.f32 %v2280, 0.2
    %v2861 = vmul.f32 %v2282, 0.2
    %v2862 = vmul.f32 %v2732, 0.2
    %v2863 = vmul.f32 %v2734, 0.2
    %v2864 = vsel %vm2736, %v2206, %v2800
    %v2865 = vsel %vm2737, %v2208, %v2801
    %v2866 = vsel %vm2738, %v2658, %v2802
    %v2867 = vsel %vm2739, %v2660, %v2803
    %v2868 = vsel %vm2740, %v2210, %v2804
    %v2869 = vsel %vm2741, %v2212, %v2805
    %v2870 = vsel %vm2742, %v2662, %v2806
    %v2871 = vsel %vm2743, %v2664, %v2807
    %v2872 = vsel %vm2744, %v2216, %v2808
    %v2873 = vsel %vm2745, %v2218, %v2809
    %v2874 = vsel %vm2746, %v2668, %v2810
    %v2875 = vsel %vm2747, %v2670, %v2811
    %v2876 = vsel %vm2748, %v2220, %v2812
    %v2877 = vsel %vm2749, %v2222, %v2813
    %v2878 = vsel %vm2750, %v2672, %v2814
    %v2879 = vsel %vm2751, %v2674, %v2815
    %v2880 = vsel %vm2752, %v2226, %v2816
    %v2881 = vsel %vm2753, %v2228, %v2817
    %v2882 = vsel %vm2754, %v2678, %v2818
    %v2883 = vsel %vm2755, %v2680, %v2819
    %v2884 = vsel %vm2756, %v2230, %v2820
    %v2885 = vsel %vm2757, %v2232, %v2821
    %v2886 = vsel %vm2758, %v2682, %v2822
    %v2887 = vsel %vm2759, %v2684, %v2823
    %v2888 = vsel %vm2760, %v2236, %v2824
    %v2889 = vsel %vm2761, %v2238, %v2825
    %v2890 = vsel %vm2762, %v2688, %v2826
    %v2891 = vsel %vm2763, %v2690, %v2827
    %v2892 = vsel %vm2764, %v2240, %v2828
    %v2893 = vsel %vm2765, %v2242, %v2829
    %v2894 = vsel %vm2766, %v2692, %v2830
    %v2895 = vsel %vm2767, %v2694, %v2831
    %v2896 = vsel %vm2768, %v2246, %v2832
    %v2897 = vsel %vm2769, %v2248, %v2833
    %v2898 = vsel %vm2770, %v2698, %v2834
    %v2899 = vsel %vm2771, %v2700, %v2835
    %v2900 = vsel %vm2772, %v2250, %v2836
    %v2901 = vsel %vm2773, %v2252, %v2837
    %v2902 = vsel %vm2774, %v2702, %v2838
    %v2903 = vsel %vm2775, %v2704, %v2839
    %v2904 = vsel %vm2776, %v2256, %v2840
    %v2905 = vsel %vm2777, %v2258, %v2841
    %v2906 = vsel %vm2778, %v2708, %v2842
    %v2907 = vsel %vm2779, %v2710, %v2843
    %v2908 = vsel %vm2780, %v2260, %v2844
    %v2909 = vsel %vm2781, %v2262, %v2845
    %v2910 = vsel %vm2782, %v2712, %v2846
    %v2911 = vsel %vm2783, %v2714, %v2847
    %v2912 = vsel %vm2784, %v2266, %v2848
    %v2913 = vsel %vm2785, %v2268, %v2849
    %v2914 = vsel %vm2786, %v2718, %v2850
    %v2915 = vsel %vm2787, %v2720, %v2851
    %v2916 = vsel %vm2788, %v2270, %v2852
    %v2917 = vsel %vm2789, %v2272, %v2853
    %v2918 = vsel %vm2790, %v2722, %v2854
    %v2919 = vsel %vm2791, %v2724, %v2855
    %v2920 = vsel %vm2792, %v2276, %v2856
    %v2921 = vsel %vm2793, %v2278, %v2857
    %v2922 = vsel %vm2794, %v2728, %v2858
    %v2923 = vsel %vm2795, %v2730, %v2859
    %v2924 = vsel %vm2796, %v2280, %v2860
    %v2925 = vsel %vm2797, %v2282, %v2861
    %v2926 = vsel %vm2798, %v2732, %v2862
    %v2927 = vsel %vm2799, %v2734, %v2863
    %v2928 = vpack.c.bf16 %v2868, %v2864
    %v2929 = vpack.c.bf16 %v2869, %v2865
    %v2930 = vpack.c.bf16 %v2870, %v2866
    %v2931 = vpack.c.bf16 %v2871, %v2867
    %v2932 = vpack.c.bf16 %v2876, %v2872
    %v2933 = vpack.c.bf16 %v2877, %v2873
    %v2934 = vpack.c.bf16 %v2878, %v2874
    %v2935 = vpack.c.bf16 %v2879, %v2875
    %v2936 = vpack.c.bf16 %v2884, %v2880
    %v2937 = vpack.c.bf16 %v2885, %v2881
    %v2938 = vpack.c.bf16 %v2886, %v2882
    %v2939 = vpack.c.bf16 %v2887, %v2883
    %v2940 = vpack.c.bf16 %v2892, %v2888
    %v2941 = vpack.c.bf16 %v2893, %v2889
    %v2942 = vpack.c.bf16 %v2894, %v2890
    %v2943 = vpack.c.bf16 %v2895, %v2891
    %v2944 = vpack.c.bf16 %v2900, %v2896
    %v2945 = vpack.c.bf16 %v2901, %v2897
    %v2946 = vpack.c.bf16 %v2902, %v2898
    %v2947 = vpack.c.bf16 %v2903, %v2899
    %v2948 = vpack.c.bf16 %v2908, %v2904
    %v2949 = vpack.c.bf16 %v2909, %v2905
    %v2950 = vpack.c.bf16 %v2910, %v2906
    %v2951 = vpack.c.bf16 %v2911, %v2907
    %v2952 = vpack.c.bf16 %v2916, %v2912
    %v2953 = vpack.c.bf16 %v2917, %v2913
    %v2954 = vpack.c.bf16 %v2918, %v2914
    %v2955 = vpack.c.bf16 %v2919, %v2915
    %v2956 = vpack.c.bf16 %v2924, %v2920
    %v2957 = vpack.c.bf16 %v2925, %v2921
    %v2958 = vpack.c.bf16 %v2926, %v2922
    %v2959 = vpack.c.bf16 %v2927, %v2923
    %v2960 = vld [vmem:[#allocation8] sm:$0xff]
    %v2961 = vld [vmem:[#allocation8 + $0x8] sm:$0xff]
    %v2962 = vld [vmem:[#allocation8 + $0x10] sm:$0xff]
    %v2963 = vld [vmem:[#allocation8 + $0x18] sm:$0xff]
    %v2964 = vld [vmem:[#allocation8 + $0x20] sm:$0xff]
    %v2965 = vld [vmem:[#allocation8 + $0x28] sm:$0xff]
    %v2966 = vld [vmem:[#allocation8 + $0x30] sm:$0xff]
    %v2967 = vld [vmem:[#allocation8 + $0x38] sm:$0xff]
    %v2968 = vld [vmem:[#allocation8 + $0x40] sm:$0xff]
    %v2969 = vld [vmem:[#allocation8 + $0x48] sm:$0xff]
    %v2970 = vld [vmem:[#allocation8 + $0x50] sm:$0xff]
    %v2971 = vld [vmem:[#allocation8 + $0x58] sm:$0xff]
    %v2972 = vld [vmem:[#allocation8 + $0x60] sm:$0xff]
    %v2973 = vld [vmem:[#allocation8 + $0x68] sm:$0xff]
    %v2974 = vld [vmem:[#allocation8 + $0x70] sm:$0xff]
    %v2975 = vld [vmem:[#allocation8 + $0x78] sm:$0xff]
    %v2976 = vld [vmem:[#allocation8 + $0x80] sm:$0xff]
    %v2977 = vld [vmem:[#allocation8 + $0x88] sm:$0xff]
    %v2978 = vld [vmem:[#allocation8 + $0x90] sm:$0xff]
    %v2979 = vld [vmem:[#allocation8 + $0x98] sm:$0xff]
    %v2980 = vld [vmem:[#allocation8 + $0xa0] sm:$0xff]
    %v2981 = vld [vmem:[#allocation8 + $0xa8] sm:$0xff]
    %v2982 = vld [vmem:[#allocation8 + $0xb0] sm:$0xff]
    %v2983 = vld [vmem:[#allocation8 + $0xb8] sm:$0xff]
    %v2984 = vld [vmem:[#allocation8 + $0xc0] sm:$0xff]
    %v2985 = vld [vmem:[#allocation8 + $0xc8] sm:$0xff]
    %v2986 = vld [vmem:[#allocation8 + $0xd0] sm:$0xff]
    %v2987 = vld [vmem:[#allocation8 + $0xd8] sm:$0xff]
    %v2988 = vld [vmem:[#allocation8 + $0xe0] sm:$0xff]
    %v2989 = vld [vmem:[#allocation8 + $0xe8] sm:$0xff]
    %v2990 = vld [vmem:[#allocation8 + $0xf0] sm:$0xff]
    %v2991 = vld [vmem:[#allocation8 + $0xf8] sm:$0xff]
    %v2992 = vld [vmem:[#allocation8 + $0x100] sm:$0xff]
    %v2993 = vld [vmem:[#allocation8 + $0x108] sm:$0xff]
    %v2994 = vld [vmem:[#allocation8 + $0x110] sm:$0xff]
    %v2995 = vld [vmem:[#allocation8 + $0x118] sm:$0xff]
    %v2996 = vld [vmem:[#allocation8 + $0x120] sm:$0xff]
    %v2997 = vld [vmem:[#allocation8 + $0x128] sm:$0xff]
    %v2998 = vld [vmem:[#allocation8 + $0x130] sm:$0xff]
    %v2999 = vld [vmem:[#allocation8 + $0x138] sm:$0xff]
    %v3000 = vld [vmem:[#allocation8 + $0x140] sm:$0xff]
    %v3001 = vld [vmem:[#allocation8 + $0x148] sm:$0xff]
    %v3002 = vld [vmem:[#allocation8 + $0x150] sm:$0xff]
    %v3003 = vld [vmem:[#allocation8 + $0x158] sm:$0xff]
    %v3004 = vld [vmem:[#allocation8 + $0x160] sm:$0xff]
    %v3005 = vld [vmem:[#allocation8 + $0x168] sm:$0xff]
    %v3006 = vld [vmem:[#allocation8 + $0x170] sm:$0xff]
    %v3007 = vld [vmem:[#allocation8 + $0x178] sm:$0xff]
    %v3008 = vld [vmem:[#allocation8 + $0x180] sm:$0xff]
    %v3009 = vld [vmem:[#allocation8 + $0x188] sm:$0xff]
    %v3010 = vld [vmem:[#allocation8 + $0x190] sm:$0xff]
    %v3011 = vld [vmem:[#allocation8 + $0x198] sm:$0xff]
    %v3012 = vld [vmem:[#allocation8 + $0x1a0] sm:$0xff]
    %v3013 = vld [vmem:[#allocation8 + $0x1a8] sm:$0xff]
    %v3014 = vld [vmem:[#allocation8 + $0x1b0] sm:$0xff]
    %v3015 = vld [vmem:[#allocation8 + $0x1b8] sm:$0xff]
    %v3016 = vld [vmem:[#allocation8 + $0x1c0] sm:$0xff]
    %v3017 = vld [vmem:[#allocation8 + $0x1c8] sm:$0xff]
    %v3018 = vld [vmem:[#allocation8 + $0x1d0] sm:$0xff]
    %v3019 = vld [vmem:[#allocation8 + $0x1d8] sm:$0xff]
    %v3020 = vld [vmem:[#allocation8 + $0x1e0] sm:$0xff]
    %v3021 = vld [vmem:[#allocation8 + $0x1e8] sm:$0xff]
    %v3022 = vld [vmem:[#allocation8 + $0x1f0] sm:$0xff]
    %v3023 = vld [vmem:[#allocation8 + $0x1f8] sm:$0xff]
    %v3024 = vld [vmem:[%s4] sm:$0x3]
    %v3026 = vlaneseq
    %v3027 = vshrl.u32 %v3026, 7
    %v3028 = vsub.s32 0, %v3027
    %v3029 = vrot.slane %v3024, %v3028
    %v3030 = vlaneseq
    %v3031 = vshrl.u32 %v3030, 7
    %v3032 = vsub.s32 1, %v3031
    %v3033 = vrot.slane %v3024, %v3032
    %v3100 = vunpack.c.l.b16 %v2960
    %v3101 = vunpack.c.h.b16 %v2960
    %v3102 = vunpack.c.l.b16 %v2961
    %v3103 = vunpack.c.h.b16 %v2961
    %v3104 = vunpack.c.l.b16 %v2962
    %v3105 = vunpack.c.h.b16 %v2962
    %v3106 = vunpack.c.l.b16 %v2963
    %v3107 = vunpack.c.h.b16 %v2963
    %v3108 = vunpack.c.l.b16 %v2964
    %v3109 = vunpack.c.h.b16 %v2964
    %v3110 = vunpack.c.l.b16 %v2965
    %v3111 = vunpack.c.h.b16 %v2965
    %v3112 = vunpack.c.l.b16 %v2966
    %v3113 = vunpack.c.h.b16 %v2966
    %v3114 = vunpack.c.l.b16 %v2967
    %v3115 = vunpack.c.h.b16 %v2967
    %v3116 = vunpack.c.l.b16 %v2968
    %v3117 = vunpack.c.h.b16 %v2968
    %v3118 = vunpack.c.l.b16 %v2969
    %v3119 = vunpack.c.h.b16 %v2969
    %v3120 = vunpack.c.l.b16 %v2970
    %v3121 = vunpack.c.h.b16 %v2970
    %v3122 = vunpack.c.l.b16 %v2971
    %v3123 = vunpack.c.h.b16 %v2971
    %v3124 = vunpack.c.l.b16 %v2972
    %v3125 = vunpack.c.h.b16 %v2972
    %v3126 = vunpack.c.l.b16 %v2973
    %v3127 = vunpack.c.h.b16 %v2973
    %v3128 = vunpack.c.l.b16 %v2974
    %v3129 = vunpack.c.h.b16 %v2974
    %v3130 = vunpack.c.l.b16 %v2975
    %v3131 = vunpack.c.h.b16 %v2975
    %v3132 = vunpack.c.l.b16 %v2976
    %v3133 = vunpack.c.h.b16 %v2976
    %v3134 = vunpack.c.l.b16 %v2977
    %v3135 = vunpack.c.h.b16 %v2977
    %v3136 = vunpack.c.l.b16 %v2978
    %v3137 = vunpack.c.h.b16 %v2978
    %v3138 = vunpack.c.l.b16 %v2979
    %v3139 = vunpack.c.h.b16 %v2979
    %v3140 = vunpack.c.l.b16 %v2980
    %v3141 = vunpack.c.h.b16 %v2980
    %v3142 = vunpack.c.l.b16 %v2981
    %v3143 = vunpack.c.h.b16 %v2981
    %v3144 = vunpack.c.l.b16 %v2982
    %v3145 = vunpack.c.h.b16 %v2982
    %v3146 = vunpack.c.l.b16 %v2983
    %v3147 = vunpack.c.h.b16 %v2983
    %v3148 = vunpack.c.l.b16 %v2984
    %v3149 = vunpack.c.h.b16 %v2984
    %v3150 = vunpack.c.l.b16 %v2985
    %v3151 = vunpack.c.h.b16 %v2985
    %v3152 = vunpack.c.l.b16 %v2986
    %v3153 = vunpack.c.h.b16 %v2986
    %v3154 = vunpack.c.l.b16 %v2987
    %v3155 = vunpack.c.h.b16 %v2987
    %v3156 = vunpack.c.l.b16 %v2988
    %v3157 = vunpack.c.h.b16 %v2988
    %v3158 = vunpack.c.l.b16 %v2989
    %v3159 = vunpack.c.h.b16 %v2989
    %v3160 = vunpack.c.l.b16 %v2990
    %v3161 = vunpack.c.h.b16 %v2990
    %v3162 = vunpack.c.l.b16 %v2991
    %v3163 = vunpack.c.h.b16 %v2991
    %v3164 = vunpack.c.l.b16 %v2992
    %v3165 = vunpack.c.h.b16 %v2992
    %v3166 = vunpack.c.l.b16 %v2993
    %v3167 = vunpack.c.h.b16 %v2993
    %v3168 = vunpack.c.l.b16 %v2994
    %v3169 = vunpack.c.h.b16 %v2994
    %v3170 = vunpack.c.l.b16 %v2995
    %v3171 = vunpack.c.h.b16 %v2995
    %v3172 = vunpack.c.l.b16 %v2996
    %v3173 = vunpack.c.h.b16 %v2996
    %v3174 = vunpack.c.l.b16 %v2997
    %v3175 = vunpack.c.h.b16 %v2997
    %v3176 = vunpack.c.l.b16 %v2998
    %v3177 = vunpack.c.h.b16 %v2998
    %v3178 = vunpack.c.l.b16 %v2999
    %v3179 = vunpack.c.h.b16 %v2999
    %v3180 = vunpack.c.l.b16 %v3000
    %v3181 = vunpack.c.h.b16 %v3000
    %v3182 = vunpack.c.l.b16 %v3001
    %v3183 = vunpack.c.h.b16 %v3001
    %v3184 = vunpack.c.l.b16 %v3002
    %v3185 = vunpack.c.h.b16 %v3002
    %v3186 = vunpack.c.l.b16 %v3003
    %v3187 = vunpack.c.h.b16 %v3003
    %v3188 = vunpack.c.l.b16 %v3004
    %v3189 = vunpack.c.h.b16 %v3004
    %v3190 = vunpack.c.l.b16 %v3005
    %v3191 = vunpack.c.h.b16 %v3005
    %v3192 = vunpack.c.l.b16 %v3006
    %v3193 = vunpack.c.h.b16 %v3006
    %v3194 = vunpack.c.l.b16 %v3007
    %v3195 = vunpack.c.h.b16 %v3007
    %v3196 = vunpack.c.l.b16 %v3008
    %v3197 = vunpack.c.h.b16 %v3008
    %v3198 = vunpack.c.l.b16 %v3009
    %v3199 = vunpack.c.h.b16 %v3009
    %v3200 = vunpack.c.l.b16 %v3010
    %v3201 = vunpack.c.h.b16 %v3010
    %v3202 = vunpack.c.l.b16 %v3011
    %v3203 = vunpack.c.h.b16 %v3011
    %v3204 = vunpack.c.l.b16 %v3012
    %v3205 = vunpack.c.h.b16 %v3012
    %v3206 = vunpack.c.l.b16 %v3013
    %v3207 = vunpack.c.h.b16 %v3013
    %v3208 = vunpack.c.l.b16 %v3014
    %v3209 = vunpack.c.h.b16 %v3014
    %v3210 = vunpack.c.l.b16 %v3015
    %v3211 = vunpack.c.h.b16 %v3015
    %v3212 = vunpack.c.l.b16 %v3016
    %v3213 = vunpack.c.h.b16 %v3016
    %v3214 = vunpack.c.l.b16 %v3017
    %v3215 = vunpack.c.h.b16 %v3017
    %v3216 = vunpack.c.l.b16 %v3018
    %v3217 = vunpack.c.h.b16 %v3018
    %v3218 = vunpack.c.l.b16 %v3019
    %v3219 = vunpack.c.h.b16 %v3019
    %v3220 = vunpack.c.l.b16 %v3020
    %v3221 = vunpack.c.h.b16 %v3020
    %v3222 = vunpack.c.l.b16 %v3021
    %v3223 = vunpack.c.h.b16 %v3021
    %v3224 = vunpack.c.l.b16 %v3022
    %v3225 = vunpack.c.h.b16 %v3022
    %v3226 = vunpack.c.l.b16 %v3023
    %v3227 = vunpack.c.h.b16 %v3023
    %v3228 = vpack.c.b16 %v3102, %v3100
    %v3229 = vpack.c.b16 %v3103, %v3101
    %v3230 = vpack.c.b16 %v3106, %v3104
    %v3231 = vpack.c.b16 %v3107, %v3105
    %v3232 = vpack.c.b16 %v3110, %v3108
    %v3233 = vpack.c.b16 %v3111, %v3109
    %v3234 = vpack.c.b16 %v3114, %v3112
    %v3235 = vpack.c.b16 %v3115, %v3113
    %v3236 = vpack.c.b16 %v3118, %v3116
    %v3237 = vpack.c.b16 %v3119, %v3117
    %v3238 = vpack.c.b16 %v3122, %v3120
    %v3239 = vpack.c.b16 %v3123, %v3121
    %v3240 = vpack.c.b16 %v3126, %v3124
    %v3241 = vpack.c.b16 %v3127, %v3125
    %v3242 = vpack.c.b16 %v3130, %v3128
    %v3243 = vpack.c.b16 %v3131, %v3129
    %v3244 = vpack.c.b16 %v3134, %v3132
    %v3245 = vpack.c.b16 %v3135, %v3133
    %v3246 = vpack.c.b16 %v3138, %v3136
    %v3247 = vpack.c.b16 %v3139, %v3137
    %v3248 = vpack.c.b16 %v3142, %v3140
    %v3249 = vpack.c.b16 %v3143, %v3141
    %v3250 = vpack.c.b16 %v3146, %v3144
    %v3251 = vpack.c.b16 %v3147, %v3145
    %v3252 = vpack.c.b16 %v3150, %v3148
    %v3253 = vpack.c.b16 %v3151, %v3149
    %v3254 = vpack.c.b16 %v3154, %v3152
    %v3255 = vpack.c.b16 %v3155, %v3153
    %v3256 = vpack.c.b16 %v3158, %v3156
    %v3257 = vpack.c.b16 %v3159, %v3157
    %v3258 = vpack.c.b16 %v3162, %v3160
    %v3259 = vpack.c.b16 %v3163, %v3161
    %v3260 = vpack.c.b16 %v3166, %v3164
    %v3261 = vpack.c.b16 %v3167, %v3165
    %v3262 = vpack.c.b16 %v3170, %v3168
    %v3263 = vpack.c.b16 %v3171, %v3169
    %v3264 = vpack.c.b16 %v3174, %v3172
    %v3265 = vpack.c.b16 %v3175, %v3173
    %v3266 = vpack.c.b16 %v3178, %v3176
    %v3267 = vpack.c.b16 %v3179, %v3177
    %v3268 = vpack.c.b16 %v3182, %v3180
    %v3269 = vpack.c.b16 %v3183, %v3181
    %v3270 = vpack.c.b16 %v3186, %v3184
    %v3271 = vpack.c.b16 %v3187, %v3185
    %v3272 = vpack.c.b16 %v3190, %v3188
    %v3273 = vpack.c.b16 %v3191, %v3189
    %v3274 = vpack.c.b16 %v3194, %v3192
    %v3275 = vpack.c.b16 %v3195, %v3193
    %v3276 = vpack.c.b16 %v3198, %v3196
    %v3277 = vpack.c.b16 %v3199, %v3197
    %v3278 = vpack.c.b16 %v3202, %v3200
    %v3279 = vpack.c.b16 %v3203, %v3201
    %v3280 = vpack.c.b16 %v3206, %v3204
    %v3281 = vpack.c.b16 %v3207, %v3205
    %v3282 = vpack.c.b16 %v3210, %v3208
    %v3283 = vpack.c.b16 %v3211, %v3209
    %v3284 = vpack.c.b16 %v3214, %v3212
    %v3285 = vpack.c.b16 %v3215, %v3213
    %v3286 = vpack.c.b16 %v3218, %v3216
    %v3287 = vpack.c.b16 %v3219, %v3217
    %v3288 = vpack.c.b16 %v3222, %v3220
    %v3289 = vpack.c.b16 %v3223, %v3221
    %v3290 = vpack.c.b16 %v3226, %v3224
    %v3291 = vpack.c.b16 %v3227, %v3225
    %3356 = vmatprep.subr.bf16.mxu0 %v3243
    %3357 = vmatpush1.bf16.msra.mxu0 %v3242
    %3358 = vmatprep.subr.bf16.mxu0 %v3241
    %3359 = vmatpush1.bf16.msra.mxu0 %v3240
    %3360 = vmatprep.subr.bf16.mxu0 %v3239
    %3361 = vmatpush1.bf16.msra.mxu0 %v3238
    %3362 = vmatprep.subr.bf16.mxu0 %v3237
    %3363 = vmatpush1.bf16.msra.mxu0 %v3236
    %3364 = vmatprep.subr.bf16.mxu0 %v3235
    %3365 = vmatpush1.bf16.msra.mxu0 %v3234
    %3366 = vmatprep.subr.bf16.mxu0 %v3233
    %3367 = vmatpush1.bf16.msra.mxu0 %v3232
    %3368 = vmatprep.subr.bf16.mxu0 %v3231
    %3369 = vmatpush1.bf16.msra.mxu0 %v3230
    %3370 = vmatprep.subr.bf16.mxu0 %v3229
    %3371 = vmatpush1.bf16.msra.mxu0 %v3228
    %3372 = vmatprep.subr.bf16.mxu0 %v3259
    %3373 = vmatpush2.bf16.msra.mxu0 %v3258
    %3374 = vmatprep.subr.bf16.mxu0 %v3257
    %3375 = vmatpush2.bf16.msra.mxu0 %v3256
    %3376 = vmatprep.subr.bf16.mxu0 %v3255
    %3377 = vmatpush2.bf16.msra.mxu0 %v3254
    %3378 = vmatprep.subr.bf16.mxu0 %v3253
    %3379 = vmatpush2.bf16.msra.mxu0 %v3252
    %3380 = vmatprep.subr.bf16.mxu0 %v3251
    %3381 = vmatpush2.bf16.msra.mxu0 %v3250
    %3382 = vmatprep.subr.bf16.mxu0 %v3249
    %3383 = vmatpush2.bf16.msra.mxu0 %v3248
    %3384 = vmatprep.subr.bf16.mxu0 %v3247
    %3385 = vmatpush2.bf16.msra.mxu0 %v3246
    %3386 = vmatprep.subr.bf16.mxu0 %v3245
    %3387 = vmatpush2.bf16.msra.mxu0 %v3244
    %3388 = vmatprep.mubr.bf16.mxu0 %v2929
    %3389 = vmatmul.mubr.bf16.gmra.mxu0 %v2928
    %v3390 = vpop.f32.mrf.mxu0
    %v3391 = vadd.f32 %v3029, %v3390
    %v3392 = vpop.f32.mrf.mxu0
    %v3393 = vadd.f32 %v3033, %v3392
    %v3394 = vpop.f32.mrf.mxu0
    %v3395 = vadd.f32 %v3029, %v3394
    %v3396 = vpop.f32.mrf.mxu0
    %v3397 = vadd.f32 %v3033, %v3396
    %3398 = vmatprep.mubr.bf16.mxu0 %v2933
    %3399 = vmatmul.mubr.bf16.gmra.mxu0 %v2932
    %v3400 = vpop.f32.mrf.mxu0
    %v3401 = vadd.f32 %v3029, %v3400
    %v3402 = vpop.f32.mrf.mxu0
    %v3403 = vadd.f32 %v3033, %v3402
    %v3404 = vpop.f32.mrf.mxu0
    %v3405 = vadd.f32 %v3029, %v3404
    %v3406 = vpop.f32.mrf.mxu0
    %v3407 = vadd.f32 %v3033, %v3406
    %3408 = vmatprep.mubr.bf16.mxu0 %v2937
    %3409 = vmatmul.mubr.bf16.gmra.mxu0 %v2936
    %v3410 = vpop.f32.mrf.mxu0
    %v3411 = vadd.f32 %v3029, %v3410
    %v3412 = vpop.f32.mrf.mxu0
    %v3413 = vadd.f32 %v3033, %v3412
    %v3414 = vpop.f32.mrf.mxu0
    %v3415 = vadd.f32 %v3029, %v3414
    %v3416 = vpop.f32.mrf.mxu0
    %v3417 = vadd.f32 %v3033, %v3416
    %3418 = vmatprep.mubr.bf16.mxu0 %v2941
    %3419 = vmatmul.mubr.bf16.gmra.mxu0 %v2940
    %v3420 = vpop.f32.mrf.mxu0
    %v3421 = vadd.f32 %v3029, %v3420
    %v3422 = vpop.f32.mrf.mxu0
    %v3423 = vadd.f32 %v3033, %v3422
    %v3424 = vpop.f32.mrf.mxu0
    %v3425 = vadd.f32 %v3029, %v3424
    %v3426 = vpop.f32.mrf.mxu0
    %v3427 = vadd.f32 %v3033, %v3426
    %3428 = vmatprep.mubr.bf16.mxu0 %v2945
    %3429 = vmatmul.mubr.bf16.gmra.mxu0 %v2944
    %v3430 = vpop.f32.mrf.mxu0
    %v3431 = vadd.f32 %v3029, %v3430
    %v3432 = vpop.f32.mrf.mxu0
    %v3433 = vadd.f32 %v3033, %v3432
    %v3434 = vpop.f32.mrf.mxu0
    %v3435 = vadd.f32 %v3029, %v3434
    %v3436 = vpop.f32.mrf.mxu0
    %v3437 = vadd.f32 %v3033, %v3436
    %3438 = vmatprep.mubr.bf16.mxu0 %v2949
    %3439 = vmatmul.mubr.bf16.gmra.mxu0 %v2948
    %v3440 = vpop.f32.mrf.mxu0
    %v3441 = vadd.f32 %v3029, %v3440
    %v3442 = vpop.f32.mrf.mxu0
    %v3443 = vadd.f32 %v3033, %v3442
    %v3444 = vpop.f32.mrf.mxu0
    %v3445 = vadd.f32 %v3029, %v3444
    %v3446 = vpop.f32.mrf.mxu0
    %v3447 = vadd.f32 %v3033, %v3446
    %3448 = vmatprep.mubr.bf16.mxu0 %v2953
    %3449 = vmatmul.mubr.bf16.gmra.mxu0 %v2952
    %v3450 = vpop.f32.mrf.mxu0
    %v3451 = vadd.f32 %v3029, %v3450
    %v3452 = vpop.f32.mrf.mxu0
    %v3453 = vadd.f32 %v3033, %v3452
    %v3454 = vpop.f32.mrf.mxu0
    %v3455 = vadd.f32 %v3029, %v3454
    %v3456 = vpop.f32.mrf.mxu0
    %v3457 = vadd.f32 %v3033, %v3456
    %3458 = vmatprep.mubr.bf16.mxu0 %v2957
    %3459 = vmatmul.mubr.bf16.gmra.mxu0 %v2956
    %v3460 = vpop.f32.mrf.mxu0
    %v3461 = vadd.f32 %v3029, %v3460
    %v3462 = vpop.f32.mrf.mxu0
    %v3463 = vadd.f32 %v3033, %v3462
    %v3464 = vpop.f32.mrf.mxu0
    %v3465 = vadd.f32 %v3029, %v3464
    %v3466 = vpop.f32.mrf.mxu0
    %v3467 = vadd.f32 %v3033, %v3466
    %3468 = vdwg.mxu0
    %3469 = vmatprep.subr.bf16.mxu0 %v3275
    %3470 = vmatpush1.bf16.msra.mxu0 %v3274
    %3471 = vmatprep.subr.bf16.mxu0 %v3273
    %3472 = vmatpush1.bf16.msra.mxu0 %v3272
    %3473 = vmatprep.subr.bf16.mxu0 %v3271
    %3474 = vmatpush1.bf16.msra.mxu0 %v3270
    %3475 = vmatprep.subr.bf16.mxu0 %v3269
    %3476 = vmatpush1.bf16.msra.mxu0 %v3268
    %3477 = vmatprep.subr.bf16.mxu0 %v3267
    %3478 = vmatpush1.bf16.msra.mxu0 %v3266
    %3479 = vmatprep.subr.bf16.mxu0 %v3265
    %3480 = vmatpush1.bf16.msra.mxu0 %v3264
    %3481 = vmatprep.subr.bf16.mxu0 %v3263
    %3482 = vmatpush1.bf16.msra.mxu0 %v3262
    %3483 = vmatprep.subr.bf16.mxu0 %v3261
    %3484 = vmatpush1.bf16.msra.mxu0 %v3260
    %3485 = vmatprep.subr.bf16.mxu0 %v3291
    %3486 = vmatpush2.bf16.msra.mxu0 %v3290
    %3487 = vmatprep.subr.bf16.mxu0 %v3289
    %3488 = vmatpush2.bf16.msra.mxu0 %v3288
    %3489 = vmatprep.subr.bf16.mxu0 %v3287
    %3490 = vmatpush2.bf16.msra.mxu0 %v3286
    %3491 = vmatprep.subr.bf16.mxu0 %v3285
    %3492 = vmatpush2.bf16.msra.mxu0 %v3284
    %3493 = vmatprep.subr.bf16.mxu0 %v3283
    %3494 = vmatpush2.bf16.msra.mxu0 %v3282
    %3495 = vmatprep.subr.bf16.mxu0 %v3281
    %3496 = vmatpush2.bf16.msra.mxu0 %v3280
    %3497 = vmatprep.subr.bf16.mxu0 %v3279
    %3498 = vmatpush2.bf16.msra.mxu0 %v3278
    %3499 = vmatprep.subr.bf16.mxu0 %v3277
    %3500 = vmatpush2.bf16.msra.mxu0 %v3276
    %3501 = vmatprep.mubr.bf16.mxu0 %v2931
    %3502 = vmatmul.mubr.bf16.gmra.mxu0 %v2930
    %v3503 = vpop.f32.mrf.mxu0
    %v3504 = vadd.f32 %v3391, %v3503
    %v3505 = vpop.f32.mrf.mxu0
    %v3506 = vadd.f32 %v3393, %v3505
    %v3507 = vpop.f32.mrf.mxu0
    %v3508 = vadd.f32 %v3395, %v3507
    %v3509 = vpop.f32.mrf.mxu0
    %v3510 = vadd.f32 %v3397, %v3509
    %3511 = vmatprep.mubr.bf16.mxu0 %v2935
    %3512 = vmatmul.mubr.bf16.gmra.mxu0 %v2934
    %v3513 = vpop.f32.mrf.mxu0
    %v3514 = vadd.f32 %v3401, %v3513
    %v3515 = vpop.f32.mrf.mxu0
    %v3516 = vadd.f32 %v3403, %v3515
    %v3517 = vpop.f32.mrf.mxu0
    %v3518 = vadd.f32 %v3405, %v3517
    %v3519 = vpop.f32.mrf.mxu0
    %v3520 = vadd.f32 %v3407, %v3519
    %3521 = vmatprep.mubr.bf16.mxu0 %v2939
    %3522 = vmatmul.mubr.bf16.gmra.mxu0 %v2938
    %v3523 = vpop.f32.mrf.mxu0
    %v3524 = vadd.f32 %v3411, %v3523
    %v3525 = vpop.f32.mrf.mxu0
    %v3526 = vadd.f32 %v3413, %v3525
    %v3527 = vpop.f32.mrf.mxu0
    %v3528 = vadd.f32 %v3415, %v3527
    %v3529 = vpop.f32.mrf.mxu0
    %v3530 = vadd.f32 %v3417, %v3529
    %3531 = vmatprep.mubr.bf16.mxu0 %v2943
    %3532 = vmatmul.mubr.bf16.gmra.mxu0 %v2942
    %v3533 = vpop.f32.mrf.mxu0
    %v3534 = vadd.f32 %v3421, %v3533
    %v3535 = vpop.f32.mrf.mxu0
    %v3536 = vadd.f32 %v3423, %v3535
    %v3537 = vpop.f32.mrf.mxu0
    %v3538 = vadd.f32 %v3425, %v3537
    %v3539 = vpop.f32.mrf.mxu0
    %v3540 = vadd.f32 %v3427, %v3539
    %3541 = vmatprep.mubr.bf16.mxu0 %v2947
    %3542 = vmatmul.mubr.bf16.gmra.mxu0 %v2946
    %v3543 = vpop.f32.mrf.mxu0
    %v3544 = vadd.f32 %v3431, %v3543
    %v3545 = vpop.f32.mrf.mxu0
    %v3546 = vadd.f32 %v3433, %v3545
    %v3547 = vpop.f32.mrf.mxu0
    %v3548 = vadd.f32 %v3435, %v3547
    %v3549 = vpop.f32.mrf.mxu0
    %v3550 = vadd.f32 %v3437, %v3549
    %3551 = vmatprep.mubr.bf16.mxu0 %v2951
    %3552 = vmatmul.mubr.bf16.gmra.mxu0 %v2950
    %v3553 = vpop.f32.mrf.mxu0
    %v3554 = vadd.f32 %v3441, %v3553
    %v3555 = vpop.f32.mrf.mxu0
    %v3556 = vadd.f32 %v3443, %v3555
    %v3557 = vpop.f32.mrf.mxu0
    %v3558 = vadd.f32 %v3445, %v3557
    %v3559 = vpop.f32.mrf.mxu0
    %v3560 = vadd.f32 %v3447, %v3559
    %3561 = vmatprep.mubr.bf16.mxu0 %v2955
    %3562 = vmatmul.mubr.bf16.gmra.mxu0 %v2954
    %v3563 = vpop.f32.mrf.mxu0
    %v3564 = vadd.f32 %v3451, %v3563
    %v3565 = vpop.f32.mrf.mxu0
    %v3566 = vadd.f32 %v3453, %v3565
    %v3567 = vpop.f32.mrf.mxu0
    %v3568 = vadd.f32 %v3455, %v3567
    %v3569 = vpop.f32.mrf.mxu0
    %v3570 = vadd.f32 %v3457, %v3569
    %3571 = vmatprep.mubr.bf16.mxu0 %v2959
    %3572 = vmatmul.mubr.bf16.gmra.mxu0 %v2958
    %v3573 = vpop.f32.mrf.mxu0
    %v3574 = vadd.f32 %v3461, %v3573
    %v3575 = vpop.f32.mrf.mxu0
    %v3576 = vadd.f32 %v3463, %v3575
    %v3577 = vpop.f32.mrf.mxu0
    %v3578 = vadd.f32 %v3465, %v3577
    %v3579 = vpop.f32.mrf.mxu0
    %v3580 = vadd.f32 %v3467, %v3579
    %3581 = vdwg.mxu0
    %vm3582 = vcmp.ge.f32.partialorder %v3504, 0.0
    %vm3583 = vcmp.ge.f32.partialorder %v3506, 0.0
    %vm3584 = vcmp.ge.f32.partialorder %v3508, 0.0
    %vm3585 = vcmp.ge.f32.partialorder %v3510, 0.0
    %vm3586 = vcmp.ge.f32.partialorder %v3514, 0.0
    %vm3587 = vcmp.ge.f32.partialorder %v3516, 0.0
    %vm3588 = vcmp.ge.f32.partialorder %v3518, 0.0
    %vm3589 = vcmp.ge.f32.partialorder %v3520, 0.0
    %vm3590 = vcmp.ge.f32.partialorder %v3524, 0.0
    %vm3591 = vcmp.ge.f32.partialorder %v3526, 0.0
    %vm3592 = vcmp.ge.f32.partialorder %v3528, 0.0
    %vm3593 = vcmp.ge.f32.partialorder %v3530, 0.0
    %vm3594 = vcmp.ge.f32.partialorder %v3534, 0.0
    %vm3595 = vcmp.ge.f32.partialorder %v3536, 0.0
    %vm3596 = vcmp.ge.f32.partialorder %v3538, 0.0
    %vm3597 = vcmp.ge.f32.partialorder %v3540, 0.0
    %vm3598 = vcmp.ge.f32.partialorder %v3544, 0.0
    %vm3599 = vcmp.ge.f32.partialorder %v3546, 0.0
    %vm3600 = vcmp.ge.f32.partialorder %v3548, 0.0
    %vm3601 = vcmp.ge.f32.partialorder %v3550, 0.0
    %vm3602 = vcmp.ge.f32.partialorder %v3554, 0.0
    %vm3603 = vcmp.ge.f32.partialorder %v3556, 0.0
    %vm3604 = vcmp.ge.f32.partialorder %v3558, 0.0
    %vm3605 = vcmp.ge.f32.partialorder %v3560, 0.0
    %vm3606 = vcmp.ge.f32.partialorder %v3564, 0.0
    %vm3607 = vcmp.ge.f32.partialorder %v3566, 0.0
    %vm3608 = vcmp.ge.f32.partialorder %v3568, 0.0
    %vm3609 = vcmp.ge.f32.partialorder %v3570, 0.0
    %vm3610 = vcmp.ge.f32.partialorder %v3574, 0.0
    %vm3611 = vcmp.ge.f32.partialorder %v3576, 0.0
    %vm3612 = vcmp.ge.f32.partialorder %v3578, 0.0
    %vm3613 = vcmp.ge.f32.partialorder %v3580, 0.0
    %v3614 = vmul.f32 %v3504, 0.2
    %v3615 = vmul.f32 %v3506, 0.2
    %v3616 = vmul.f32 %v3508, 0.2
    %v3617 = vmul.f32 %v3510, 0.2
    %v3618 = vmul.f32 %v3514, 0.2
    %v3619 = vmul.f32 %v3516, 0.2
    %v3620 = vmul.f32 %v3518, 0.2
    %v3621 = vmul.f32 %v3520, 0.2
    %v3622 = vmul.f32 %v3524, 0.2
    %v3623 = vmul.f32 %v3526, 0.2
    %v3624 = vmul.f32 %v3528, 0.2
    %v3625 = vmul.f32 %v3530, 0.2
    %v3626 = vmul.f32 %v3534, 0.2
    %v3627 = vmul.f32 %v3536, 0.2
    %v3628 = vmul.f32 %v3538, 0.2
    %v3629 = vmul.f32 %v3540, 0.2
    %v3630 = vmul.f32 %v3544, 0.2
    %v3631 = vmul.f32 %v3546, 0.2
    %v3632 = vmul.f32 %v3548, 0.2
    %v3633 = vmul.f32 %v3550, 0.2
    %v3634 = vmul.f32 %v3554, 0.2
    %v3635 = vmul.f32 %v3556, 0.2
    %v3636 = vmul.f32 %v3558, 0.2
    %v3637 = vmul.f32 %v3560, 0.2
    %v3638 = vmul.f32 %v3564, 0.2
    %v3639 = vmul.f32 %v3566, 0.2
    %v3640 = vmul.f32 %v3568, 0.2
    %v3641 = vmul.f32 %v3570, 0.2
    %v3642 = vmul.f32 %v3574, 0.2
    %v3643 = vmul.f32 %v3576, 0.2
    %v3644 = vmul.f32 %v3578, 0.2
    %v3645 = vmul.f32 %v3580, 0.2
    %v3646 = vsel %vm3582, %v3504, %v3614
    %v3647 = vsel %vm3583, %v3506, %v3615
    %v3648 = vsel %vm3584, %v3508, %v3616
    %v3649 = vsel %vm3585, %v3510, %v3617
    %v3650 = vsel %vm3586, %v3514, %v3618
    %v3651 = vsel %vm3587, %v3516, %v3619
    %v3652 = vsel %vm3588, %v3518, %v3620
    %v3653 = vsel %vm3589, %v3520, %v3621
    %v3654 = vsel %vm3590, %v3524, %v3622
    %v3655 = vsel %vm3591, %v3526, %v3623
    %v3656 = vsel %vm3592, %v3528, %v3624
    %v3657 = vsel %vm3593, %v3530, %v3625
    %v3658 = vsel %vm3594, %v3534, %v3626
    %v3659 = vsel %vm3595, %v3536, %v3627
    %v3660 = vsel %vm3596, %v3538, %v3628
    %v3661 = vsel %vm3597, %v3540, %v3629
    %v3662 = vsel %vm3598, %v3544, %v3630
    %v3663 = vsel %vm3599, %v3546, %v3631
    %v3664 = vsel %vm3600, %v3548, %v3632
    %v3665 = vsel %vm3601, %v3550, %v3633
    %v3666 = vsel %vm3602, %v3554, %v3634
    %v3667 = vsel %vm3603, %v3556, %v3635
    %v3668 = vsel %vm3604, %v3558, %v3636
    %v3669 = vsel %vm3605, %v3560, %v3637
    %v3670 = vsel %vm3606, %v3564, %v3638
    %v3671 = vsel %vm3607, %v3566, %v3639
    %v3672 = vsel %vm3608, %v3568, %v3640
    %v3673 = vsel %vm3609, %v3570, %v3641
    %v3674 = vsel %vm3610, %v3574, %v3642
    %v3675 = vsel %vm3611, %v3576, %v3643
    %v3676 = vsel %vm3612, %v3578, %v3644
    %v3677 = vsel %vm3613, %v3580, %v3645
    %v3678 = vpack.c.bf16 %v3648, %v3646
    %v3679 = vpack.c.bf16 %v3649, %v3647
    %v3680 = vpack.c.bf16 %v3652, %v3650
    %v3681 = vpack.c.bf16 %v3653, %v3651
    %v3682 = vpack.c.bf16 %v3656, %v3654
    %v3683 = vpack.c.bf16 %v3657, %v3655
    %v3684 = vpack.c.bf16 %v3660, %v3658
    %v3685 = vpack.c.bf16 %v3661, %v3659
    %v3686 = vpack.c.bf16 %v3664, %v3662
    %v3687 = vpack.c.bf16 %v3665, %v3663
    %v3688 = vpack.c.bf16 %v3668, %v3666
    %v3689 = vpack.c.bf16 %v3669, %v3667
    %v3690 = vpack.c.bf16 %v3672, %v3670
    %v3691 = vpack.c.bf16 %v3673, %v3671
    %v3692 = vpack.c.bf16 %v3676, %v3674
    %v3693 = vpack.c.bf16 %v3677, %v3675
    %v3694 = vld [vmem:[#allocation10] sm:$0xf]
    %v3695 = vld [vmem:[#allocation10 + $0x4] sm:$0xf]
    %v3696 = vld [vmem:[#allocation10 + $0x8] sm:$0xf]
    %v3697 = vld [vmem:[#allocation10 + $0xc] sm:$0xf]
    %v3698 = vld [vmem:[#allocation10 + $0x10] sm:$0xf]
    %v3699 = vld [vmem:[#allocation10 + $0x14] sm:$0xf]
    %v3700 = vld [vmem:[#allocation10 + $0x18] sm:$0xf]
    %v3701 = vld [vmem:[#allocation10 + $0x1c] sm:$0xf]
    %v3702 = vld [vmem:[#allocation10 + $0x20] sm:$0xf]
    %v3703 = vld [vmem:[#allocation10 + $0x24] sm:$0xf]
    %v3704 = vld [vmem:[#allocation10 + $0x28] sm:$0xf]
    %v3705 = vld [vmem:[#allocation10 + $0x2c] sm:$0xf]
    %v3706 = vld [vmem:[#allocation10 + $0x30] sm:$0xf]
    %v3707 = vld [vmem:[#allocation10 + $0x34] sm:$0xf]
    %v3708 = vld [vmem:[#allocation10 + $0x38] sm:$0xf]
    %v3709 = vld [vmem:[#allocation10 + $0x3c] sm:$0xf]
    %v3710 = vld [vmem:[#allocation10 + $0x40] sm:$0xf]
    %v3711 = vld [vmem:[#allocation10 + $0x44] sm:$0xf]
    %v3712 = vld [vmem:[#allocation10 + $0x48] sm:$0xf]
    %v3713 = vld [vmem:[#allocation10 + $0x4c] sm:$0xf]
    %v3714 = vld [vmem:[#allocation10 + $0x50] sm:$0xf]
    %v3715 = vld [vmem:[#allocation10 + $0x54] sm:$0xf]
    %v3716 = vld [vmem:[#allocation10 + $0x58] sm:$0xf]
    %v3717 = vld [vmem:[#allocation10 + $0x5c] sm:$0xf]
    %v3718 = vld [vmem:[#allocation10 + $0x60] sm:$0xf]
    %v3719 = vld [vmem:[#allocation10 + $0x64] sm:$0xf]
    %v3720 = vld [vmem:[#allocation10 + $0x68] sm:$0xf]
    %v3721 = vld [vmem:[#allocation10 + $0x6c] sm:$0xf]
    %v3722 = vld [vmem:[#allocation10 + $0x70] sm:$0xf]
    %v3723 = vld [vmem:[#allocation10 + $0x74] sm:$0xf]
    %v3724 = vld [vmem:[#allocation10 + $0x78] sm:$0xf]
    %v3725 = vld [vmem:[#allocation10 + $0x7c] sm:$0xf]
    %v3726 = vld [vmem:[%s6] sm:$0x1]
    %v3728 = vlaneseq
    %v3729 = vshrl.u32 %v3728, 7
    %v3730 = vsub.s32 0, %v3729
    %v3731 = vrot.slane %v3726, %v3730
    %v3765 = vunpack.c.l.b16 %v3694
    %v3766 = vunpack.c.l.b16 %v3695
    %v3767 = vunpack.c.l.b16 %v3696
    %v3768 = vunpack.c.l.b16 %v3697
    %v3769 = vunpack.c.l.b16 %v3698
    %v3770 = vunpack.c.l.b16 %v3699
    %v3771 = vunpack.c.l.b16 %v3700
    %v3772 = vunpack.c.l.b16 %v3701
    %v3773 = vunpack.c.l.b16 %v3702
    %v3774 = vunpack.c.l.b16 %v3703
    %v3775 = vunpack.c.l.b16 %v3704
    %v3776 = vunpack.c.l.b16 %v3705
    %v3777 = vunpack.c.l.b16 %v3706
    %v3778 = vunpack.c.l.b16 %v3707
    %v3779 = vunpack.c.l.b16 %v3708
    %v3780 = vunpack.c.l.b16 %v3709
    %v3781 = vunpack.c.l.b16 %v3710
    %v3782 = vunpack.c.l.b16 %v3711
    %v3783 = vunpack.c.l.b16 %v3712
    %v3784 = vunpack.c.l.b16 %v3713
    %v3785 = vunpack.c.l.b16 %v3714
    %v3786 = vunpack.c.l.b16 %v3715
    %v3787 = vunpack.c.l.b16 %v3716
    %v3788 = vunpack.c.l.b16 %v3717
    %v3789 = vunpack.c.l.b16 %v3718
    %v3790 = vunpack.c.l.b16 %v3719
    %v3791 = vunpack.c.l.b16 %v3720
    %v3792 = vunpack.c.l.b16 %v3721
    %v3793 = vunpack.c.l.b16 %v3722
    %v3794 = vunpack.c.l.b16 %v3723
    %v3795 = vunpack.c.l.b16 %v3724
    %v3796 = vunpack.c.l.b16 %v3725
    %v3797 = vpack.c.b16 %v3766, %v3765
    %v3798 = vpack.c.b16 %v3768, %v3767
    %v3799 = vpack.c.b16 %v3770, %v3769
    %v3800 = vpack.c.b16 %v3772, %v3771
    %v3801 = vpack.c.b16 %v3774, %v3773
    %v3802 = vpack.c.b16 %v3776, %v3775
    %v3803 = vpack.c.b16 %v3778, %v3777
    %v3804 = vpack.c.b16 %v3780, %v3779
    %v3805 = vpack.c.b16 %v3782, %v3781
    %v3806 = vpack.c.b16 %v3784, %v3783
    %v3807 = vpack.c.b16 %v3786, %v3785
    %v3808 = vpack.c.b16 %v3788, %v3787
    %v3809 = vpack.c.b16 %v3790, %v3789
    %v3810 = vpack.c.b16 %v3792, %v3791
    %v3811 = vpack.c.b16 %v3794, %v3793
    %v3812 = vpack.c.b16 %v3796, %v3795
    %3829 = vmatprep.subr.bf16.mxu0 0
    %3830 = vmatpush1.bf16.msra.mxu0 %v3804
    %3831 = vmatprep.subr.bf16.mxu0 0
    %3832 = vmatpush1.bf16.msra.mxu0 %v3803
    %3833 = vmatprep.subr.bf16.mxu0 0
    %3834 = vmatpush1.bf16.msra.mxu0 %v3802
    %3835 = vmatprep.subr.bf16.mxu0 0
    %3836 = vmatpush1.bf16.msra.mxu0 %v3801
    %3837 = vmatprep.subr.bf16.mxu0 0
    %3838 = vmatpush1.bf16.msra.mxu0 %v3800
    %3839 = vmatprep.subr.bf16.mxu0 0
    %3840 = vmatpush1.bf16.msra.mxu0 %v3799
    %3841 = vmatprep.subr.bf16.mxu0 0
    %3842 = vmatpush1.bf16.msra.mxu0 %v3798
    %3843 = vmatprep.subr.bf16.mxu0 0
    %3844 = vmatpush1.bf16.msra.mxu0 %v3797
    %3845 = vmatprep.subr.bf16.mxu0 0
    %3846 = vmatpush2.bf16.msra.mxu0 %v3812
    %3847 = vmatprep.subr.bf16.mxu0 0
    %3848 = vmatpush2.bf16.msra.mxu0 %v3811
    %3849 = vmatprep.subr.bf16.mxu0 0
    %3850 = vmatpush2.bf16.msra.mxu0 %v3810
    %3851 = vmatprep.subr.bf16.mxu0 0
    %3852 = vmatpush2.bf16.msra.mxu0 %v3809
    %3853 = vmatprep.subr.bf16.mxu0 0
    %3854 = vmatpush2.bf16.msra.mxu0 %v3808
    %3855 = vmatprep.subr.bf16.mxu0 0
    %3856 = vmatpush2.bf16.msra.mxu0 %v3807
    %3857 = vmatprep.subr.bf16.mxu0 0
    %3858 = vmatpush2.bf16.msra.mxu0 %v3806
    %3859 = vmatprep.subr.bf16.mxu0 0
    %3860 = vmatpush2.bf16.msra.mxu0 %v3805
    %3861 = vmatprep.mubr.bf16.mxu0 %v3679
    %3862 = vmatmul.mubr.bf16.gmra.mxu0 %v3678
    %v3863 = vpop.f32.mrf.mxu0
    %v3864 = vadd.f32 %v3731, %v3863
    %v3865 = vpop.f32.mrf.mxu0
    %v3866 = vpop.f32.mrf.mxu0
    %v3867 = vadd.f32 %v3731, %v3866
    %v3868 = vpop.f32.mrf.mxu0
    %3869 = vmatprep.mubr.bf16.mxu0 %v3681
    %3870 = vmatmul.mubr.bf16.gmra.mxu0 %v3680
    %v3871 = vpop.f32.mrf.mxu0
    %v3872 = vadd.f32 %v3731, %v3871
    %v3873 = vpop.f32.mrf.mxu0
    %v3874 = vpop.f32.mrf.mxu0
    %v3875 = vadd.f32 %v3731, %v3874
    %v3876 = vpop.f32.mrf.mxu0
    %3877 = vmatprep.mubr.bf16.mxu0 %v3683
    %3878 = vmatmul.mubr.bf16.gmra.mxu0 %v3682
    %v3879 = vpop.f32.mrf.mxu0
    %v3880 = vadd.f32 %v3731, %v3879
    %v3881 = vpop.f32.mrf.mxu0
    %v3882 = vpop.f32.mrf.mxu0
    %v3883 = vadd.f32 %v3731, %v3882
    %v3884 = vpop.f32.mrf.mxu0
    %3885 = vmatprep.mubr.bf16.mxu0 %v3685
    %3886 = vmatmul.mubr.bf16.gmra.mxu0 %v3684
    %v3887 = vpop.f32.mrf.mxu0
    %v3888 = vadd.f32 %v3731, %v3887
    %v3889 = vpop.f32.mrf.mxu0
    %v3890 = vpop.f32.mrf.mxu0
    %v3891 = vadd.f32 %v3731, %v3890
    %v3892 = vpop.f32.mrf.mxu0
    %3893 = vmatprep.mubr.bf16.mxu0 %v3687
    %3894 = vmatmul.mubr.bf16.gmra.mxu0 %v3686
    %v3895 = vpop.f32.mrf.mxu0
    %v3896 = vadd.f32 %v3731, %v3895
    %v3897 = vpop.f32.mrf.mxu0
    %v3898 = vpop.f32.mrf.mxu0
    %v3899 = vadd.f32 %v3731, %v3898
    %v3900 = vpop.f32.mrf.mxu0
    %3901 = vmatprep.mubr.bf16.mxu0 %v3689
    %3902 = vmatmul.mubr.bf16.gmra.mxu0 %v3688
    %v3903 = vpop.f32.mrf.mxu0
    %v3904 = vadd.f32 %v3731, %v3903
    %v3905 = vpop.f32.mrf.mxu0
    %v3906 = vpop.f32.mrf.mxu0
    %v3907 = vadd.f32 %v3731, %v3906
    %v3908 = vpop.f32.mrf.mxu0
    %3909 = vmatprep.mubr.bf16.mxu0 %v3691
    %3910 = vmatmul.mubr.bf16.gmra.mxu0 %v3690
    %v3911 = vpop.f32.mrf.mxu0
    %v3912 = vadd.f32 %v3731, %v3911
    %v3913 = vpop.f32.mrf.mxu0
    %v3914 = vpop.f32.mrf.mxu0
    %v3915 = vadd.f32 %v3731, %v3914
    %v3916 = vpop.f32.mrf.mxu0
    %3917 = vmatprep.mubr.bf16.mxu0 %v3693
    %3918 = vmatmul.mubr.bf16.gmra.mxu0 %v3692
    %v3919 = vpop.f32.mrf.mxu0
    %v3920 = vadd.f32 %v3731, %v3919
    %v3921 = vpop.f32.mrf.mxu0
    %v3922 = vpop.f32.mrf.mxu0
    %v3923 = vadd.f32 %v3731, %v3922
    %v3924 = vpop.f32.mrf.mxu0
    %3925 = vdwg.mxu0
    %vm3926 = vcmp.ge.f32.partialorder %v3864, 0.0
    %vm3927 = vcmp.ge.f32.partialorder %v3867, 0.0
    %vm3928 = vcmp.ge.f32.partialorder %v3872, 0.0
    %vm3929 = vcmp.ge.f32.partialorder %v3875, 0.0
    %vm3930 = vcmp.ge.f32.partialorder %v3880, 0.0
    %vm3931 = vcmp.ge.f32.partialorder %v3883, 0.0
    %vm3932 = vcmp.ge.f32.partialorder %v3888, 0.0
    %vm3933 = vcmp.ge.f32.partialorder %v3891, 0.0
    %vm3934 = vcmp.ge.f32.partialorder %v3896, 0.0
    %vm3935 = vcmp.ge.f32.partialorder %v3899, 0.0
    %vm3936 = vcmp.ge.f32.partialorder %v3904, 0.0
    %vm3937 = vcmp.ge.f32.partialorder %v3907, 0.0
    %vm3938 = vcmp.ge.f32.partialorder %v3912, 0.0
    %vm3939 = vcmp.ge.f32.partialorder %v3915, 0.0
    %vm3940 = vcmp.ge.f32.partialorder %v3920, 0.0
    %vm3941 = vcmp.ge.f32.partialorder %v3923, 0.0
    %v3942 = vmul.f32 %v3864, 0.2
    %v3943 = vmul.f32 %v3867, 0.2
    %v3944 = vmul.f32 %v3872, 0.2
    %v3945 = vmul.f32 %v3875, 0.2
    %v3946 = vmul.f32 %v3880, 0.2
    %v3947 = vmul.f32 %v3883, 0.2
    %v3948 = vmul.f32 %v3888, 0.2
    %v3949 = vmul.f32 %v3891, 0.2
    %v3950 = vmul.f32 %v3896, 0.2
    %v3951 = vmul.f32 %v3899, 0.2
    %v3952 = vmul.f32 %v3904, 0.2
    %v3953 = vmul.f32 %v3907, 0.2
    %v3954 = vmul.f32 %v3912, 0.2
    %v3955 = vmul.f32 %v3915, 0.2
    %v3956 = vmul.f32 %v3920, 0.2
    %v3957 = vmul.f32 %v3923, 0.2
    %v3958 = vsel %vm3926, %v3864, %v3942
    %v3959 = vsel %vm3927, %v3867, %v3943
    %v3960 = vsel %vm3928, %v3872, %v3944
    %v3961 = vsel %vm3929, %v3875, %v3945
    %v3962 = vsel %vm3930, %v3880, %v3946
    %v3963 = vsel %vm3931, %v3883, %v3947
    %v3964 = vsel %vm3932, %v3888, %v3948
    %v3965 = vsel %vm3933, %v3891, %v3949
    %v3966 = vsel %vm3934, %v3896, %v3950
    %v3967 = vsel %vm3935, %v3899, %v3951
    %v3968 = vsel %vm3936, %v3904, %v3952
    %v3969 = vsel %vm3937, %v3907, %v3953
    %v3970 = vsel %vm3938, %v3912, %v3954
    %v3971 = vsel %vm3939, %v3915, %v3955
    %v3972 = vsel %vm3940, %v3920, %v3956
    %v3973 = vsel %vm3941, %v3923, %v3957
    %v3974 = vpack.c.bf16 %v3959, %v3958
    %v3975 = vpack.c.bf16 %v3961, %v3960
    %v3976 = vpack.c.bf16 %v3963, %v3962
    %v3977 = vpack.c.bf16 %v3965, %v3964
    %v3978 = vpack.c.bf16 %v3967, %v3966
    %v3979 = vpack.c.bf16 %v3969, %v3968
    %v3980 = vpack.c.bf16 %v3971, %v3970
    %v3981 = vpack.c.bf16 %v3973, %v3972
    %v3982 = vld [vmem:[#allocation11] sm:$0xf]
    %v3983 = vld [vmem:[#allocation11 + $0x4] sm:$0xf]
    %v3984 = vld [vmem:[#allocation11 + $0x8] sm:$0xf]
    %v3985 = vld [vmem:[#allocation11 + $0xc] sm:$0xf]
    %v3986 = vld [vmem:[#allocation11 + $0x10] sm:$0xf]
    %v3987 = vld [vmem:[#allocation11 + $0x14] sm:$0xf]
    %v3988 = vld [vmem:[#allocation11 + $0x18] sm:$0xf]
    %v3989 = vld [vmem:[#allocation11 + $0x1c] sm:$0xf]
    %v3990 = vld [vmem:[#allocation11 + $0x20] sm:$0xf]
    %v3991 = vld [vmem:[#allocation11 + $0x24] sm:$0xf]
    %v3992 = vld [vmem:[#allocation11 + $0x28] sm:$0xf]
    %v3993 = vld [vmem:[#allocation11 + $0x2c] sm:$0xf]
    %v3994 = vld [vmem:[#allocation11 + $0x30] sm:$0xf]
    %v3995 = vld [vmem:[#allocation11 + $0x34] sm:$0xf]
    %v3996 = vld [vmem:[#allocation11 + $0x38] sm:$0xf]
    %v3997 = vld [vmem:[#allocation11 + $0x3c] sm:$0xf]
    %v3998 = vld [vmem:[%s8] sm:$0x1]
    %v4000 = vlaneseq
    %v4001 = vshrl.u32 %v4000, 7
    %v4002 = vsub.s32 0, %v4001
    %v4003 = vrot.slane %v3998, %v4002
    %v4021 = vunpack.c.l.b16 %v3982
    %v4022 = vunpack.c.l.b16 %v3983
    %v4023 = vunpack.c.l.b16 %v3984
    %v4024 = vunpack.c.l.b16 %v3985
    %v4025 = vunpack.c.l.b16 %v3986
    %v4026 = vunpack.c.l.b16 %v3987
    %v4027 = vunpack.c.l.b16 %v3988
    %v4028 = vunpack.c.l.b16 %v3989
    %v4029 = vunpack.c.l.b16 %v3990
    %v4030 = vunpack.c.l.b16 %v3991
    %v4031 = vunpack.c.l.b16 %v3992
    %v4032 = vunpack.c.l.b16 %v3993
    %v4033 = vunpack.c.l.b16 %v3994
    %v4034 = vunpack.c.l.b16 %v3995
    %v4035 = vunpack.c.l.b16 %v3996
    %v4036 = vunpack.c.l.b16 %v3997
    %v4037 = vpack.c.b16 %v4022, %v4021
    %v4038 = vpack.c.b16 %v4024, %v4023
    %v4039 = vpack.c.b16 %v4026, %v4025
    %v4040 = vpack.c.b16 %v4028, %v4027
    %v4041 = vpack.c.b16 %v4030, %v4029
    %v4042 = vpack.c.b16 %v4032, %v4031
    %v4043 = vpack.c.b16 %v4034, %v4033
    %v4044 = vpack.c.b16 %v4036, %v4035
    %4053 = vmatprep.subr.bf16.mxu0 0
    %4054 = vmatpush1.bf16.msra.mxu0 %v4044
    %4055 = vmatprep.subr.bf16.mxu0 0
    %4056 = vmatpush1.bf16.msra.mxu0 %v4043
    %4057 = vmatprep.subr.bf16.mxu0 0
    %4058 = vmatpush1.bf16.msra.mxu0 %v4042
    %4059 = vmatprep.subr.bf16.mxu0 0
    %4060 = vmatpush1.bf16.msra.mxu0 %v4041
    %4061 = vmatprep.subr.bf16.mxu0 0
    %4062 = vmatpush1.bf16.msra.mxu0 %v4040
    %4063 = vmatprep.subr.bf16.mxu0 0
    %4064 = vmatpush1.bf16.msra.mxu0 %v4039
    %4065 = vmatprep.subr.bf16.mxu0 0
    %4066 = vmatpush1.bf16.msra.mxu0 %v4038
    %4067 = vmatprep.subr.bf16.mxu0 0
    %4068 = vmatpush1.bf16.msra.mxu0 %v4037
    %4069 = vmatprep.subr.bf16.mxu0 0
    %4070 = vmatpush2.bf16.msra.mxu0 0
    %4071 = vmatprep.subr.bf16.mxu0 0
    %4072 = vmatpush2.bf16.msra.mxu0 0
    %4073 = vmatprep.subr.bf16.mxu0 0
    %4074 = vmatpush2.bf16.msra.mxu0 0
    %4075 = vmatprep.subr.bf16.mxu0 0
    %4076 = vmatpush2.bf16.msra.mxu0 0
    %4077 = vmatprep.subr.bf16.mxu0 0
    %4078 = vmatpush2.bf16.msra.mxu0 0
    %4079 = vmatprep.subr.bf16.mxu0 0
    %4080 = vmatpush2.bf16.msra.mxu0 0
    %4081 = vmatprep.subr.bf16.mxu0 0
    %4082 = vmatpush2.bf16.msra.mxu0 0
    %4083 = vmatprep.subr.bf16.mxu0 0
    %4084 = vmatpush2.bf16.msra.mxu0 0
    %4085 = vmatprep.mubr.bf16.mxu0 0
    %4086 = vmatmul.mubr.bf16.gmra.mxu0 %v3974
    %v4087 = vpop.f32.mrf.mxu0
    %v4088 = vadd.f32 %v4003, %v4087
    %v4089 = vpop.f32.mrf.mxu0
    %v4090 = vpop.f32.mrf.mxu0
    %v4091 = vadd.f32 %v4003, %v4090
    %v4092 = vpop.f32.mrf.mxu0
    %4093 = vmatprep.mubr.bf16.mxu0 0
    %4094 = vmatmul.mubr.bf16.gmra.mxu0 %v3975
    %v4095 = vpop.f32.mrf.mxu0
    %v4096 = vadd.f32 %v4003, %v4095
    %v4097 = vpop.f32.mrf.mxu0
    %v4098 = vpop.f32.mrf.mxu0
    %v4099 = vadd.f32 %v4003, %v4098
    %v4100 = vpop.f32.mrf.mxu0
    %4101 = vmatprep.mubr.bf16.mxu0 0
    %4102 = vmatmul.mubr.bf16.gmra.mxu0 %v3976
    %v4103 = vpop.f32.mrf.mxu0
    %v4104 = vadd.f32 %v4003, %v4103
    %v4105 = vpop.f32.mrf.mxu0
    %v4106 = vpop.f32.mrf.mxu0
    %v4107 = vadd.f32 %v4003, %v4106
    %v4108 = vpop.f32.mrf.mxu0
    %4109 = vmatprep.mubr.bf16.mxu0 0
    %4110 = vmatmul.mubr.bf16.gmra.mxu0 %v3977
    %v4111 = vpop.f32.mrf.mxu0
    %v4112 = vadd.f32 %v4003, %v4111
    %v4113 = vpop.f32.mrf.mxu0
    %v4114 = vpop.f32.mrf.mxu0
    %v4115 = vadd.f32 %v4003, %v4114
    %v4116 = vpop.f32.mrf.mxu0
    %4117 = vmatprep.mubr.bf16.mxu0 0
    %4118 = vmatmul.mubr.bf16.gmra.mxu0 %v3978
    %v4119 = vpop.f32.mrf.mxu0
    %v4120 = vadd.f32 %v4003, %v4119
    %v4121 = vpop.f32.mrf.mxu0
    %v4122 = vpop.f32.mrf.mxu0
    %v4123 = vadd.f32 %v4003, %v4122
    %v4124 = vpop.f32.mrf.mxu0
    %4125 = vmatprep.mubr.bf16.mxu0 0
    %4126 = vmatmul.mubr.bf16.gmra.mxu0 %v3979
    %v4127 = vpop.f32.mrf.mxu0
    %v4128 = vadd.f32 %v4003, %v4127
    %v4129 = vpop.f32.mrf.mxu0
    %v4130 = vpop.f32.mrf.mxu0
    %v4131 = vadd.f32 %v4003, %v4130
    %v4132 = vpop.f32.mrf.mxu0
    %4133 = vmatprep.mubr.bf16.mxu0 0
    %4134 = vmatmul.mubr.bf16.gmra.mxu0 %v3980
    %v4135 = vpop.f32.mrf.mxu0
    %v4136 = vadd.f32 %v4003, %v4135
    %v4137 = vpop.f32.mrf.mxu0
    %v4138 = vpop.f32.mrf.mxu0
    %v4139 = vadd.f32 %v4003, %v4138
    %v4140 = vpop.f32.mrf.mxu0
    %4141 = vmatprep.mubr.bf16.mxu0 0
    %4142 = vmatmul.mubr.bf16.gmra.mxu0 %v3981
    %v4143 = vpop.f32.mrf.mxu0
    %v4144 = vadd.f32 %v4003, %v4143
    %v4145 = vpop.f32.mrf.mxu0
    %v4146 = vpop.f32.mrf.mxu0
    %v4147 = vadd.f32 %v4003, %v4146
    %v4148 = vpop.f32.mrf.mxu0
    %4149 = vdwg.mxu0
    %4150 = vst [vmem:[#allocation13] sm:$0xff] %v4088
    %4151 = vst [vmem:[#allocation13 + $0x8] sm:$0xff] %v4091
    %4152 = vst [vmem:[#allocation13 + $0x10] sm:$0xff] %v4096
    %4153 = vst [vmem:[#allocation13 + $0x18] sm:$0xff] %v4099
    %4154 = vst [vmem:[#allocation13 + $0x20] sm:$0xff] %v4104
    %4155 = vst [vmem:[#allocation13 + $0x28] sm:$0xff] %v4107
    %4156 = vst [vmem:[#allocation13 + $0x30] sm:$0xff] %v4112
    %4157 = vst [vmem:[#allocation13 + $0x38] sm:$0xff] %v4115
    %4158 = vst [vmem:[#allocation13 + $0x40] sm:$0xff] %v4120
    %4159 = vst [vmem:[#allocation13 + $0x48] sm:$0xff] %v4123
    %4160 = vst [vmem:[#allocation13 + $0x50] sm:$0xff] %v4128
    %4161 = vst [vmem:[#allocation13 + $0x58] sm:$0xff] %v4131
    %4162 = vst [vmem:[#allocation13 + $0x60] sm:$0xff] %v4136
    %4163 = vst [vmem:[#allocation13 + $0x68] sm:$0xff] %v4139
    %4164 = vst [vmem:[#allocation13 + $0x70] sm:$0xff] %v4144
    %4165 = vst [vmem:[#allocation13 + $0x78] sm:$0xff] %v4147
    // Predicated region
    $region62: #{tpu_custom_call.1} parent=1 // pred_check
      _
    $region63: #{tpu_custom_call.1} parent=1 // pred_check_branch
      %4167 = sbr.rel (0) target = $region65
    $region64: #{tpu_custom_call.1} parent=1 // pred_region
      %s4169 = ssub.s32 2048, 2048
      %4170 = vsyncadd [#allocation4], %s4169
      %s4171 = sshll.u32 [#allocation13], 4
      %s4172 = int_to_ptr.vmem [resolvable:$true] %s4171
      %4177 = dma.vmem_to_hbm [thread:$0]  %s4172, 2048, %s9, [#allocation4], 128, 128, 8
    $region65: #{tpu_custom_call.1} parent=1 // pred_fallthru
      _
    // Predicated region
    $region66: #{tpu_custom_call.1} parent=1 // pred_check
      _
    $region67: #{tpu_custom_call.1} parent=1 // pred_check_branch
      %4179 = sbr.rel (0) target = $region69
    $region68: #{tpu_custom_call.1} parent=1 // pred_region
      %4180 = dma.done [#allocation4], 2048
    $region69: #{tpu_custom_call.1} parent=1 // pred_fallthru
      _
    %4181 = vsyncpa [#allocation3], 1
    %4182 = vsyncpa [#allocation6], 1
    %4183 = vsyncpa [#allocation9], 1
    %4184 = vsyncpa [#allocation12], 1
    %4185 = vsyncpa [#allocation4], 1

</llo_original>
